<compile_context>
chip_gen: v5e
topology: v5e:2x2
jax: 0.10.0
libtpu: 0.0.40
codegen_flags: <defaults>
</compile_context>

<pallas_src>
import jax
import jax.numpy as jnp
from jax import lax
from jax.experimental import pallas as pl
from jax.experimental.pallas import tpu as pltpu


_VMEM_LIMIT = 32 * 1024 * 1024  # explicit budget: fits v7x scoped default


def _round_up(x, m):
    return (x + m - 1) // m * m


# ----------------------------- Pallas kernels ------------------------------

def _bias_lrelu_kernel(p_ref, w_ref, b_ref, o_ref):
    # y = patches @ W + b ; LeakyReLU(0.2)   (bf16 operands, f32 accumulate)
    y = jnp.dot(p_ref[...], w_ref[...], preferred_element_type=jnp.float32)
    y = y + b_ref[...]
    o_ref[...] = jnp.where(y >= 0.0, y, 0.2 * y)


def _bias_sigmoid_kernel(p_ref, w_ref, b_ref, o_ref):
    # y = patches @ W + b ; Sigmoid (EUP reciprocal path)
    y = jnp.dot(p_ref[...], w_ref[...], preferred_element_type=jnp.float32)
    y = y + b_ref[...]
    sig = pl.reciprocal(1.0 + jnp.exp(-y), approx=True)
    o_ref[...] = jnp.clip(sig, 0.0, 1.0)  # guard approx-reciprocal overshoot


def _make_bn_lrelu_kernel(inv_m):
    """Two-phase BN kernel: grid = (phase, m_tile).

    Phase 0: accumulate per-channel sum / sum-of-squares of the conv output
             over all M tiles into VMEM scratch.
    Phase 1: recompute the tile matmul, normalize with the *global* stats,
             scale/shift, LeakyReLU(0.2), store.
    """
    def kernel(p_ref, w_ref, g_ref, beta_ref, o_ref, stats_ref):
        ph = pl.program_id(0)
        mi = pl.program_id(1)

        @pl.when(jnp.logical_and(ph == 0, mi == 0))
        def _():
            stats_ref[...] = jnp.zeros_like(stats_ref)

        y = jnp.dot(p_ref[...], w_ref[...], preferred_element_type=jnp.float32)

        @pl.when(ph == 0)
        def _():
            stats_ref[0:1, :] += jnp.sum(y, axis=0, keepdims=True)
            stats_ref[1:2, :] += jnp.sum(y * y, axis=0, keepdims=True)

        @pl.when(ph == 1)
        def _():
            mean = stats_ref[0:1, :] * inv_m
            var = jnp.maximum(stats_ref[1:2, :] * inv_m - mean * mean, 0.0)
            yn = (y - mean) * lax.rsqrt(var + 1e-5)
            yn = yn * g_ref[...] + beta_ref[...]
            o_ref[...] = jnp.where(yn >= 0.0, yn, 0.2 * yn)

    return kernel


# ------------------------------ JAX glue -----------------------------------

def _im2col(x_nhwc, k, stride, pad):
    """(N, H, W, C) -> patches (N*Ho*Wo, k*k*C), feature order (kh, kw, c)."""
    if pad > 0:
        x_nhwc = jnp.pad(x_nhwc, ((0, 0), (pad, pad), (pad, pad), (0, 0)))
    n, hp, wp, c = x_nhwc.shape
    ho = (hp - k) // stride + 1
    wo = (wp - k) // stride + 1
    cols = []
    for i in range(k):
        for j in range(k):
            cols.append(x_nhwc[:, i:i + stride * ho:stride,
                               j:j + stride * wo:stride, :])
    patches = jnp.concatenate(cols, axis=-1)          # (N, Ho, Wo, k*k*C)
    return patches.reshape(n * ho * wo, k * k * c), (n, ho, wo)


def _w_to_mat(w_oihw):
    """PyTorch conv weight (Cout, Cin, kh, kw) -> (kh*kw*Cin, Cout)."""
    cout, cin, kh, kw = w_oihw.shape
    return jnp.transpose(w_oihw, (2, 3, 1, 0)).reshape(kh * kw * cin, cout)


def _fused_conv_layer(x_nhwc, w_oihw, pad, epilogue, vecs, tm_max=512):
    """Conv(k=4, s=2, padding=pad) + fused epilogue as one pallas_call.

    epilogue: "bias_lrelu" | "bn_lrelu" | "bias_sigmoid"
    vecs: (bias,) or (gamma, beta) per-channel f32 vectors.
    """
    p, (n, ho, wo) = _im2col(x_nhwc, 4, 2, pad)
    m, k = p.shape
    cout = w_oihw.shape[0]

    # Lane-dense padding: K and Cout -> multiples of 128; M -> multiple of tile.
    kp = _round_up(k, 128)
    cp = _round_up(cout, 128)
    tm = min(tm_max, _round_up(m, 8))
    mp = _round_up(m, tm)
    n_mt = mp // tm

    p_pad = jnp.pad(p, ((0, mp - m), (0, kp - k))).astype(jnp.bfloat16)
    w_pad = jnp.pad(_w_to_mat(w_oihw),
                    ((0, kp - k), (0, cp - cout))).astype(jnp.bfloat16)
    vecs_pad = [jnp.pad(v.reshape(1, cout),
                        ((0, 0), (0, cp - cout))).astype(jnp.float32)
                for v in vecs]

    if epilogue == "bn_lrelu":
        kernel = _make_bn_lrelu_kernel(1.0 / m)   # divide by the TRUE row count
        grid = (2, n_mt)
        in_specs = [pl.BlockSpec((tm, kp), lambda ph, i: (i, 0)),
                    pl.BlockSpec((kp, cp), lambda ph, i: (0, 0)),
                    pl.BlockSpec((1, cp), lambda ph, i: (0, 0)),
                    pl.BlockSpec((1, cp), lambda ph, i: (0, 0))]
        out_specs = pl.BlockSpec((tm, cp), lambda ph, i: (i, 0))
        scratch = [pltpu.VMEM((2, cp), jnp.float32)]
        # Stats accumulate across both grid axes -> sequential execution.
        semantics = ("arbitrary", "arbitrary")
    else:
        kernel = (_bias_lrelu_kernel if epilogue == "bias_lrelu"
                  else _bias_sigmoid_kernel)
        grid = (n_mt,)
        in_specs = [pl.BlockSpec((tm, kp), lambda i: (i, 0)),
                    pl.BlockSpec((kp, cp), lambda i: (0, 0)),
                    pl.BlockSpec((1, cp), lambda i: (0, 0))]
        out_specs = pl.BlockSpec((tm, cp), lambda i: (i, 0))
        scratch = []
        semantics = ("parallel",)   # independent M tiles -> megacore on v7x

    y = pl.pallas_call(
        kernel,
        out_shape=jax.ShapeDtypeStruct((mp, cp), jnp.float32),
        grid_spec=pltpu.PrefetchScalarGridSpec(
            num_scalar_prefetch=0,
            grid=grid,
            in_specs=in_specs,
            out_specs=out_specs,
            scratch_shapes=scratch),
        compiler_params=pltpu.CompilerParams(
            dimension_semantics=semantics,
            vmem_limit_bytes=_VMEM_LIMIT),
    )(p_pad, w_pad, *vecs_pad)

    y = y[:m, :cout]                                  # drop M / lane padding
    return y.reshape(n, ho, wo, cout)


# --------------------------- params & forward ------------------------------

def init_discriminator_params(img_channels, cf, key):
    """Deterministic synthetic params mirroring the PyTorch module's shapes."""
    ks = jax.random.split(key, 8)

    def conv_w(k, cout, cin):
        return 0.02 * jax.random.normal(k, (cout, cin, 4, 4), dtype=jnp.float32)

    return {
        # layer 1: Conv(img_channels -> cf, 4, 2, 1) + bias, LeakyReLU
        "w1": conv_w(ks[0], cf, img_channels),
        "b1": 0.02 * jax.random.normal(ks[1], (cf,), dtype=jnp.float32),
        # blocks 2..4: Conv (no bias), BN(train), LeakyReLU
        "w2": conv_w(ks[2], 2 * cf, cf),
        "g2": jnp.ones((2 * cf,), jnp.float32), "beta2": jnp.zeros((2 * cf,), jnp.float32),
        "w3": conv_w(ks[3], 4 * cf, 2 * cf),
        "g3": jnp.ones((4 * cf,), jnp.float32), "beta3": jnp.zeros((4 * cf,), jnp.float32),
        "w4": conv_w(ks[4], 8 * cf, 4 * cf),
        "g4": jnp.ones((8 * cf,), jnp.float32), "beta4": jnp.zeros((8 * cf,), jnp.float32),
        # layer 5: Conv(8cf -> 1, 4, 2, 0) + bias, Sigmoid
        "w5": conv_w(ks[5], 1, 8 * cf),
        "b5": 0.02 * jax.random.normal(ks[6], (1,), dtype=jnp.float32),
    }


def discriminator_forward(params, x_nchw):
    """x_nchw: (N, C, H, W) float32 -> (N, 1, 1, 1) like PyTorch (for H=W=64)."""
    x = jnp.transpose(x_nchw, (0, 2, 3, 1)).astype(jnp.float32)   # NHWC

    x = _fused_conv_layer(x, params["w1"], 1, "bias_lrelu", (params["b1"],))
    x = _fused_conv_layer(x, params["w2"], 1, "bn_lrelu", (params["g2"], params["beta2"]))
    x = _fused_conv_layer(x, params["w3"], 1, "bn_lrelu", (params["g3"], params["beta3"]))
    x = _fused_conv_layer(x, params["w4"], 1, "bn_lrelu", (params["g4"], params["beta4"]))
    x = _fused_conv_layer(x, params["w5"], 0, "bias_sigmoid", (params["b5"],))

    return jnp.transpose(x, (0, 3, 1, 2))             # NCHW: (N, 1, 1, 1)


if __name__ == "__main__":
    # DCGAN discriminator needs 64x64 inputs so the final 4x4/s2/p0 conv hits 1x1.
    batch, img_channels, hw = 2, 3, 64
    convolution_factor = 8

    key = jax.random.PRNGKey(0)
    k_x, k_p = jax.random.split(key)
    x = jax.random.normal(k_x, (batch, img_channels, hw, hw), dtype=jnp.float32)
    params = init_discriminator_params(img_channels, convolution_factor, k_p)

    fwd = jax.jit(discriminator_forward)
    out = jax.block_until_ready(fwd(params, x))

    assert out.shape == (batch, 1, 1, 1), out.shape
    assert bool(jnp.all((out >= 0.0) & (out <= 1.0)))
    print("KERNEL_OK")
</pallas_src>

<mosaic_0001>
module attributes {stable_mosaic.version = 11 : i64} {
  func.func @_bias_lrelu_kernel(%arg0: i32, %arg1: memref<512x128xbf16, #tpu.memory_space<vmem>>, %arg2: memref<128x128xbf16, #tpu.memory_space<vmem>>, %arg3: memref<1x128xf32, #tpu.memory_space<vmem>>, %arg4: memref<512x128xf32, #tpu.memory_space<vmem>>) attributes {dimension_semantics = [#tpu.dimension_semantics<parallel>], iteration_bounds = array<i64: 4>, scalar_prefetch = 0 : i64, scratch_operands = 0 : i64, tpu.core_type = #tpu.core_type<tc>, window_params = [{transform_indices = @transform_0, window_bounds = array<i64: 512, 128>}, {pipeline_mode = #tpu.pipeline_mode<synchronous>, transform_indices = @transform_1, window_bounds = array<i64: 128, 128>}, {pipeline_mode = #tpu.pipeline_mode<synchronous>, transform_indices = @transform_2, window_bounds = array<i64: 1, 128>}, {transform_indices = @transform_3, window_bounds = array<i64: 512, 128>}]} {
    %c0 = arith.constant 0 : index
    %c0_0 = arith.constant 0 : index
    %0 = vector.load %arg1[%c0, %c0_0] : memref<512x128xbf16, #tpu.memory_space<vmem>>, vector<512x128xbf16>
    %c0_1 = arith.constant 0 : index
    %c0_2 = arith.constant 0 : index
    %1 = vector.load %arg2[%c0_1, %c0_2] : memref<128x128xbf16, #tpu.memory_space<vmem>>, vector<128x128xbf16>
    %cst = arith.constant dense<0.000000e+00> : vector<512x128xf32>
    %2 = tpu.matmul %0, %1, %cst {dimension_numbers = #tpu.dot_dimension_numbers<[1], [0], [0], [1], [0, 0, 1, 1], [], []>} : vector<512x128xbf16>, vector<128x128xbf16>, vector<512x128xf32> -> vector<512x128xf32>
    %c0_3 = arith.constant 0 : index
    %c0_4 = arith.constant 0 : index
    %3 = vector.load %arg3[%c0_3, %c0_4] : memref<1x128xf32, #tpu.memory_space<vmem>>, vector<1x128xf32>
    %4 = vector.broadcast %3 : vector<1x128xf32> to vector<512x128xf32>
    %5 = arith.addf %2, %4 : vector<512x128xf32>
    %cst_5 = arith.constant 0.000000e+00 : f32
    %6 = vector.broadcast %cst_5 : f32 to vector<512x128xf32>
    %7 = arith.cmpf oge, %5, %6 : vector<512x128xf32>
    %cst_6 = arith.constant 2.000000e-01 : f32
    %8 = vector.broadcast %cst_6 : f32 to vector<512x128xf32>
    %9 = arith.mulf %8, %5 : vector<512x128xf32>
    %10 = arith.select %7, %5, %9 : vector<512x128xi1>, vector<512x128xf32>
    %c0_7 = arith.constant 0 : index
    %c0_8 = arith.constant 0 : index
    %11 = vector.load %arg4[%c0_7, %c0_8] : memref<512x128xf32, #tpu.memory_space<vmem>>, vector<512x128xf32>
    tpu.vector_store %arg4[%c0_7, %c0_8], %10 {strides = array<i32>} : memref<512x128xf32, #tpu.memory_space<vmem>>, vector<512x128xf32>,
    return
  }
  func.func @transform_0(%arg0: i32) -> (i32, i32) {
    %c0_i32 = arith.constant 0 : i32
    %c0_i32_0 = arith.constant 0 : i32
    return %arg0, %c0_i32 : i32, i32
  }
  func.func @transform_1(%arg0: i32) -> (i32, i32) {
    %c0_i32 = arith.constant 0 : i32
    %c0_i32_0 = arith.constant 0 : i32
    %c0_i32_1 = arith.constant 0 : i32
    return %c0_i32, %c0_i32_0 : i32, i32
  }
  func.func @transform_2(%arg0: i32) -> (i32, i32) {
    %c0_i32 = arith.constant 0 : i32
    %c0_i32_0 = arith.constant 0 : i32
    %c0_i32_1 = arith.constant 0 : i32
    return %c0_i32, %c0_i32_0 : i32, i32
  }
  func.func @transform_3(%arg0: i32) -> (i32, i32) {
    %c0_i32 = arith.constant 0 : i32
    %c0_i32_0 = arith.constant 0 : i32
    return %arg0, %c0_i32 : i32, i32
  }
}

module attributes {stable_mosaic.version = 11 : i64} {
  func.func @kernel(%arg0: i32, %arg1: i32, %arg2: memref<512x128xbf16, #tpu.memory_space<vmem>>, %arg3: memref<128x128xbf16, #tpu.memory_space<vmem>>, %arg4: memref<1x128xf32, #tpu.memory_space<vmem>>, %arg5: memref<1x128xf32, #tpu.memory_space<vmem>>, %arg6: memref<512x128xf32, #tpu.memory_space<vmem>>, %arg7: memref<2x128xf32, #tpu.memory_space<vmem>>) attributes {dimension_semantics = [#tpu.dimension_semantics<arbitrary>, #tpu.dimension_semantics<arbitrary>], iteration_bounds = array<i64: 2, 1>, scalar_prefetch = 0 : i64, scratch_operands = 1 : i64, tpu.core_type = #tpu.core_type<tc>, window_params = [{transform_indices = @transform_0, window_bounds = array<i64: 512, 128>}, {pipeline_mode = #tpu.pipeline_mode<synchronous>, transform_indices = @transform_1, window_bounds = array<i64: 128, 128>}, {pipeline_mode = #tpu.pipeline_mode<synchronous>, transform_indices = @transform_2, window_bounds = array<i64: 1, 128>}, {pipeline_mode = #tpu.pipeline_mode<synchronous>, transform_indices = @transform_3, window_bounds = array<i64: 1, 128>}, {transform_indices = @transform_4, window_bounds = array<i64: 512, 128>}]} {
    %c0_i32 = arith.constant 0 : i32
    %0 = arith.cmpi eq, %arg0, %c0_i32 : i32
    %c0_i32_0 = arith.constant 0 : i32
    %1 = arith.cmpi eq, %arg1, %c0_i32_0 : i32
    %2 = arith.andi %0, %1 : i1
    %3 = arith.extui %2 : i1 to i32
    %c0_i32_1 = arith.constant 0 : i32
    %4 = arith.cmpi ne, %3, %c0_i32_1 : i32
    scf.if %4 {
      %cst_8 = arith.constant 0.000000e+00 : f32
      %14 = vector.broadcast %cst_8 : f32 to vector<2x128xf32>
      %c0_9 = arith.constant 0 : index
      %c0_10 = arith.constant 0 : index
      %15 = vector.load %arg7[%c0_9, %c0_10] : memref<2x128xf32, #tpu.memory_space<vmem>>, vector<2x128xf32>
      tpu.vector_store %arg7[%c0_9, %c0_10], %14 {strides = array<i32>} : memref<2x128xf32, #tpu.memory_space<vmem>>, vector<2x128xf32>,
    } else {
    }
    %c0 = arith.constant 0 : index
    %c0_2 = arith.constant 0 : index
    %5 = vector.load %arg2[%c0, %c0_2] : memref<512x128xbf16, #tpu.memory_space<vmem>>, vector<512x128xbf16>
    %c0_3 = arith.constant 0 : index
    %c0_4 = arith.constant 0 : index
    %6 = vector.load %arg3[%c0_3, %c0_4] : memref<128x128xbf16, #tpu.memory_space<vmem>>, vector<128x128xbf16>
    %cst = arith.constant dense<0.000000e+00> : vector<512x128xf32>
    %7 = tpu.matmul %5, %6, %cst {dimension_numbers = #tpu.dot_dimension_numbers<[1], [0], [0], [1], [0, 0, 1, 1], [], []>} : vector<512x128xbf16>, vector<128x128xbf16>, vector<512x128xf32> -> vector<512x128xf32>
    %c0_i32_5 = arith.constant 0 : i32
    %8 = arith.cmpi eq, %arg0, %c0_i32_5 : i32
    %9 = arith.extui %8 : i1 to i32
    %c0_i32_6 = arith.constant 0 : i32
    %10 = arith.cmpi ne, %9, %c0_i32_6 : i32
    scf.if %10 {
      %c0_8 = arith.constant 0 : index
      %c0_9 = arith.constant 0 : index
      %14 = vector.load %arg7[%c0_8, %c0_9] : memref<2x128xf32, #tpu.memory_space<vmem>>, vector<1x128xf32>
      %cst_10 = arith.constant dense<0.000000e+00> : vector<128xf32>
      %15 = vector.multi_reduction <add>, %7, %cst_10 [0] : vector<512x128xf32> to vector<128xf32>
      %16 = vector.shape_cast %15 : vector<128xf32> to vector<1x128xf32>
      %17 = arith.addf %14, %16 : vector<1x128xf32>
      %c0_11 = arith.constant 0 : index
      %c0_12 = arith.constant 0 : index
      %18 = vector.load %arg7[%c0_11, %c0_12] : memref<2x128xf32, #tpu.memory_space<vmem>>, vector<1x128xf32>
      tpu.vector_store %arg7[%c0_11, %c0_12], %17 {strides = array<i32>} : memref<2x128xf32, #tpu.memory_space<vmem>>, vector<1x128xf32>,
      %c1 = arith.constant 1 : index
      %c0_13 = arith.constant 0 : index
      %19 = vector.load %arg7[%c1, %c0_13] : memref<2x128xf32, #tpu.memory_space<vmem>>, vector<1x128xf32>
      %20 = arith.mulf %7, %7 : vector<512x128xf32>
      %cst_14 = arith.constant dense<0.000000e+00> : vector<128xf32>
      %21 = vector.multi_reduction <add>, %20, %cst_14 [0] : vector<512x128xf32> to vector<128xf32>
      %22 = vector.shape_cast %21 : vector<128xf32> to vector<1x128xf32>
      %23 = arith.addf %19, %22 : vector<1x128xf32>
      %c1_15 = arith.constant 1 : index
      %c0_16 = arith.constant 0 : index
      %24 = vector.load %arg7[%c1_15, %c0_16] : memref<2x128xf32, #tpu.memory_space<vmem>>, vector<1x128xf32>
      tpu.vector_store %arg7[%c1_15, %c0_16], %23 {strides = array<i32>} : memref<2x128xf32, #tpu.memory_space<vmem>>, vector<1x128xf32>,
    } else {
    }
    %c1_i32 = arith.constant 1 : i32
    %11 = arith.cmpi eq, %arg0, %c1_i32 : i32
    %12 = arith.extui %11 : i1 to i32
    %c0_i32_7 = arith.constant 0 : i32
    %13 = arith.cmpi ne, %12, %c0_i32_7 : i32
    scf.if %13 {
      %c0_8 = arith.constant 0 : index
      %c0_9 = arith.constant 0 : index
      %14 = vector.load %arg7[%c0_8, %c0_9] : memref<2x128xf32, #tpu.memory_space<vmem>>, vector<1x128xf32>
      %cst_10 = arith.constant 0.001953125 : f32
      %15 = vector.broadcast %cst_10 : f32 to vector<1x128xf32>
      %16 = arith.mulf %14, %15 : vector<1x128xf32>
      %c1 = arith.constant 1 : index
      %c0_11 = arith.constant 0 : index
      %17 = vector.load %arg7[%c1, %c0_11] : memref<2x128xf32, #tpu.memory_space<vmem>>, vector<1x128xf32>
      %cst_12 = arith.constant 0.001953125 : f32
      %18 = vector.broadcast %cst_12 : f32 to vector<1x128xf32>
      %19 = arith.mulf %17, %18 : vector<1x128xf32>
      %20 = arith.mulf %16, %16 : vector<1x128xf32>
      %21 = arith.subf %19, %20 : vector<1x128xf32>
      %cst_13 = arith.constant 0.000000e+00 : f32
      %22 = vector.broadcast %cst_13 : f32 to vector<1x128xf32>
      %23 = arith.maximumf %21, %22 : vector<1x128xf32>
      %24 = vector.broadcast %16 : vector<1x128xf32> to vector<512x128xf32>
      %25 = arith.subf %7, %24 : vector<512x128xf32>
      %cst_14 = arith.constant 9.99999974E-6 : f32
      %26 = vector.broadcast %cst_14 : f32 to vector<1x128xf32>
      %27 = arith.addf %23, %26 : vector<1x128xf32>
      %28 = math.rsqrt %27 : vector<1x128xf32>
      %29 = vector.broadcast %28 : vector<1x128xf32> to vector<512x128xf32>
      %30 = arith.mulf %25, %29 : vector<512x128xf32>
      %c0_15 = arith.constant 0 : index
      %c0_16 = arith.constant 0 : index
      %31 = vector.load %arg4[%c0_15, %c0_16] : memref<1x128xf32, #tpu.memory_space<vmem>>, vector<1x128xf32>
      %32 = vector.broadcast %31 : vector<1x128xf32> to vector<512x128xf32>
      %33 = arith.mulf %30, %32 : vector<512x128xf32>
      %c0_17 = arith.constant 0 : index
      %c0_18 = arith.constant 0 : index
      %34 = vector.load %arg5[%c0_17, %c0_18] : memref<1x128xf32, #tpu.memory_space<vmem>>, vector<1x128xf32>
      %35 = vector.broadcast %34 : vector<1x128xf32> to vector<512x128xf32>
      %36 = arith.addf %33, %35 : vector<512x128xf32>
      %cst_19 = arith.constant 0.000000e+00 : f32
      %37 = vector.broadcast %cst_19 : f32 to vector<512x128xf32>
      %38 = arith.cmpf oge, %36, %37 : vector<512x128xf32>
      %cst_20 = arith.constant 2.000000e-01 : f32
      %39 = vector.broadcast %cst_20 : f32 to vector<512x128xf32>
      %40 = arith.mulf %39, %36 : vector<512x128xf32>
      %41 = arith.select %38, %36, %40 : vector<512x128xi1>, vector<512x128xf32>
      %c0_21 = arith.constant 0 : index
      %c0_22 = arith.constant 0 : index
      %42 = vector.load %arg6[%c0_21, %c0_22] : memref<512x128xf32, #tpu.memory_space<vmem>>, vector<512x128xf32>
      tpu.vector_store %arg6[%c0_21, %c0_22], %41 {strides = array<i32>} : memref<512x128xf32, #tpu.memory_space<vmem>>, vector<512x128xf32>,
    } else {
    }
    return
  }
  func.func @transform_0(%arg0: i32, %arg1: i32) -> (i32, i32) {
    %c0_i32 = arith.constant 0 : i32
    %c0_i32_0 = arith.constant 0 : i32
    return %arg1, %c0_i32 : i32, i32
  }
  func.func @transform_1(%arg0: i32, %arg1: i32) -> (i32, i32) {
    %c0_i32 = arith.constant 0 : i32
    %c0_i32_0 = arith.constant 0 : i32
    %c0_i32_1 = arith.constant 0 : i32
    return %c0_i32, %c0_i32_0 : i32, i32
  }
  func.func @transform_2(%arg0: i32, %arg1: i32) -> (i32, i32) {
    %c0_i32 = arith.constant 0 : i32
    %c0_i32_0 = arith.constant 0 : i32
    %c0_i32_1 = arith.constant 0 : i32
    return %c0_i32, %c0_i32_0 : i32, i32
  }
  func.func @transform_3(%arg0: i32, %arg1: i32) -> (i32, i32) {
    %c0_i32 = arith.constant 0 : i32
    %c0_i32_0 = arith.constant 0 : i32
    %c0_i32_1 = arith.constant 0 : i32
    return %c0_i32, %c0_i32_0 : i32, i32
  }
  func.func @transform_4(%arg0: i32, %arg1: i32) -> (i32, i32) {
    %c0_i32 = arith.constant 0 : i32
    %c0_i32_0 = arith.constant 0 : i32
    return %arg1, %c0_i32 : i32, i32
  }
}

module attributes {stable_mosaic.version = 11 : i64} {
  func.func @kernel(%arg0: i32, %arg1: i32, %arg2: memref<128x256xbf16, #tpu.memory_space<vmem>>, %arg3: memref<256x128xbf16, #tpu.memory_space<vmem>>, %arg4: memref<1x128xf32, #tpu.memory_space<vmem>>, %arg5: memref<1x128xf32, #tpu.memory_space<vmem>>, %arg6: memref<128x128xf32, #tpu.memory_space<vmem>>, %arg7: memref<2x128xf32, #tpu.memory_space<vmem>>) attributes {dimension_semantics = [#tpu.dimension_semantics<arbitrary>, #tpu.dimension_semantics<arbitrary>], iteration_bounds = array<i64: 2, 1>, scalar_prefetch = 0 : i64, scratch_operands = 1 : i64, tpu.core_type = #tpu.core_type<tc>, window_params = [{transform_indices = @transform_0, window_bounds = array<i64: 128, 256>}, {pipeline_mode = #tpu.pipeline_mode<synchronous>, transform_indices = @transform_1, window_bounds = array<i64: 256, 128>}, {pipeline_mode = #tpu.pipeline_mode<synchronous>, transform_indices = @transform_2, window_bounds = array<i64: 1, 128>}, {pipeline_mode = #tpu.pipeline_mode<synchronous>, transform_indices = @transform_3, window_bounds = array<i64: 1, 128>}, {transform_indices = @transform_4, window_bounds = array<i64: 128, 128>}]} {
    %c0_i32 = arith.constant 0 : i32
    %0 = arith.cmpi eq, %arg0, %c0_i32 : i32
    %c0_i32_0 = arith.constant 0 : i32
    %1 = arith.cmpi eq, %arg1, %c0_i32_0 : i32
    %2 = arith.andi %0, %1 : i1
    %3 = arith.extui %2 : i1 to i32
    %c0_i32_1 = arith.constant 0 : i32
    %4 = arith.cmpi ne, %3, %c0_i32_1 : i32
    scf.if %4 {
      %cst_8 = arith.constant 0.000000e+00 : f32
      %14 = vector.broadcast %cst_8 : f32 to vector<2x128xf32>
      %c0_9 = arith.constant 0 : index
      %c0_10 = arith.constant 0 : index
      %15 = vector.load %arg7[%c0_9, %c0_10] : memref<2x128xf32, #tpu.memory_space<vmem>>, vector<2x128xf32>
      tpu.vector_store %arg7[%c0_9, %c0_10], %14 {strides = array<i32>} : memref<2x128xf32, #tpu.memory_space<vmem>>, vector<2x128xf32>,
    } else {
    }
    %c0 = arith.constant 0 : index
    %c0_2 = arith.constant 0 : index
    %5 = vector.load %arg2[%c0, %c0_2] : memref<128x256xbf16, #tpu.memory_space<vmem>>, vector<128x256xbf16>
    %c0_3 = arith.constant 0 : index
    %c0_4 = arith.constant 0 : index
    %6 = vector.load %arg3[%c0_3, %c0_4] : memref<256x128xbf16, #tpu.memory_space<vmem>>, vector<256x128xbf16>
    %cst = arith.constant dense<0.000000e+00> : vector<128x128xf32>
    %7 = tpu.matmul %5, %6, %cst {dimension_numbers = #tpu.dot_dimension_numbers<[1], [0], [0], [1], [0, 0, 1, 1], [], []>} : vector<128x256xbf16>, vector<256x128xbf16>, vector<128x128xf32> -> vector<128x128xf32>
    %c0_i32_5 = arith.constant 0 : i32
    %8 = arith.cmpi eq, %arg0, %c0_i32_5 : i32
    %9 = arith.extui %8 : i1 to i32
    %c0_i32_6 = arith.constant 0 : i32
    %10 = arith.cmpi ne, %9, %c0_i32_6 : i32
    scf.if %10 {
      %c0_8 = arith.constant 0 : index
      %c0_9 = arith.constant 0 : index
      %14 = vector.load %arg7[%c0_8, %c0_9] : memref<2x128xf32, #tpu.memory_space<vmem>>, vector<1x128xf32>
      %cst_10 = arith.constant dense<0.000000e+00> : vector<128xf32>
      %15 = vector.multi_reduction <add>, %7, %cst_10 [0] : vector<128x128xf32> to vector<128xf32>
      %16 = vector.shape_cast %15 : vector<128xf32> to vector<1x128xf32>
      %17 = arith.addf %14, %16 : vector<1x128xf32>
      %c0_11 = arith.constant 0 : index
      %c0_12 = arith.constant 0 : index
      %18 = vector.load %arg7[%c0_11, %c0_12] : memref<2x128xf32, #tpu.memory_space<vmem>>, vector<1x128xf32>
      tpu.vector_store %arg7[%c0_11, %c0_12], %17 {strides = array<i32>} : memref<2x128xf32, #tpu.memory_space<vmem>>, vector<1x128xf32>,
      %c1 = arith.constant 1 : index
      %c0_13 = arith.constant 0 : index
      %19 = vector.load %arg7[%c1, %c0_13] : memref<2x128xf32, #tpu.memory_space<vmem>>, vector<1x128xf32>
      %20 = arith.mulf %7, %7 : vector<128x128xf32>
      %cst_14 = arith.constant dense<0.000000e+00> : vector<128xf32>
      %21 = vector.multi_reduction <add>, %20, %cst_14 [0] : vector<128x128xf32> to vector<128xf32>
      %22 = vector.shape_cast %21 : vector<128xf32> to vector<1x128xf32>
      %23 = arith.addf %19, %22 : vector<1x128xf32>
      %c1_15 = arith.constant 1 : index
      %c0_16 = arith.constant 0 : index
      %24 = vector.load %arg7[%c1_15, %c0_16] : memref<2x128xf32, #tpu.memory_space<vmem>>, vector<1x128xf32>
      tpu.vector_store %arg7[%c1_15, %c0_16], %23 {strides = array<i32>} : memref<2x128xf32, #tpu.memory_space<vmem>>, vector<1x128xf32>,
    } else {
    }
    %c1_i32 = arith.constant 1 : i32
    %11 = arith.cmpi eq, %arg0, %c1_i32 : i32
    %12 = arith.extui %11 : i1 to i32
    %c0_i32_7 = arith.constant 0 : i32
    %13 = arith.cmpi ne, %12, %c0_i32_7 : i32
    scf.if %13 {
      %c0_8 = arith.constant 0 : index
      %c0_9 = arith.constant 0 : index
      %14 = vector.load %arg7[%c0_8, %c0_9] : memref<2x128xf32, #tpu.memory_space<vmem>>, vector<1x128xf32>
      %cst_10 = arith.constant 7.812500e-03 : f32
      %15 = vector.broadcast %cst_10 : f32 to vector<1x128xf32>
      %16 = arith.mulf %14, %15 : vector<1x128xf32>
      %c1 = arith.constant 1 : index
      %c0_11 = arith.constant 0 : index
      %17 = vector.load %arg7[%c1, %c0_11] : memref<2x128xf32, #tpu.memory_space<vmem>>, vector<1x128xf32>
      %cst_12 = arith.constant 7.812500e-03 : f32
      %18 = vector.broadcast %cst_12 : f32 to vector<1x128xf32>
      %19 = arith.mulf %17, %18 : vector<1x128xf32>
      %20 = arith.mulf %16, %16 : vector<1x128xf32>
      %21 = arith.subf %19, %20 : vector<1x128xf32>
      %cst_13 = arith.constant 0.000000e+00 : f32
      %22 = vector.broadcast %cst_13 : f32 to vector<1x128xf32>
      %23 = arith.maximumf %21, %22 : vector<1x128xf32>
      %24 = vector.broadcast %16 : vector<1x128xf32> to vector<128x128xf32>
      %25 = arith.subf %7, %24 : vector<128x128xf32>
      %cst_14 = arith.constant 9.99999974E-6 : f32
      %26 = vector.broadcast %cst_14 : f32 to vector<1x128xf32>
      %27 = arith.addf %23, %26 : vector<1x128xf32>
      %28 = math.rsqrt %27 : vector<1x128xf32>
      %29 = vector.broadcast %28 : vector<1x128xf32> to vector<128x128xf32>
      %30 = arith.mulf %25, %29 : vector<128x128xf32>
      %c0_15 = arith.constant 0 : index
      %c0_16 = arith.constant 0 : index
      %31 = vector.load %arg4[%c0_15, %c0_16] : memref<1x128xf32, #tpu.memory_space<vmem>>, vector<1x128xf32>
      %32 = vector.broadcast %31 : vector<1x128xf32> to vector<128x128xf32>
      %33 = arith.mulf %30, %32 : vector<128x128xf32>
      %c0_17 = arith.constant 0 : index
      %c0_18 = arith.constant 0 : index
      %34 = vector.load %arg5[%c0_17, %c0_18] : memref<1x128xf32, #tpu.memory_space<vmem>>, vector<1x128xf32>
      %35 = vector.broadcast %34 : vector<1x128xf32> to vector<128x128xf32>
      %36 = arith.addf %33, %35 : vector<128x128xf32>
      %cst_19 = arith.constant 0.000000e+00 : f32
      %37 = vector.broadcast %cst_19 : f32 to vector<128x128xf32>
      %38 = arith.cmpf oge, %36, %37 : vector<128x128xf32>
      %cst_20 = arith.constant 2.000000e-01 : f32
      %39 = vector.broadcast %cst_20 : f32 to vector<128x128xf32>
      %40 = arith.mulf %39, %36 : vector<128x128xf32>
      %41 = arith.select %38, %36, %40 : vector<128x128xi1>, vector<128x128xf32>
      %c0_21 = arith.constant 0 : index
      %c0_22 = arith.constant 0 : index
      %42 = vector.load %arg6[%c0_21, %c0_22] : memref<128x128xf32, #tpu.memory_space<vmem>>, vector<128x128xf32>
      tpu.vector_store %arg6[%c0_21, %c0_22], %41 {strides = array<i32>} : memref<128x128xf32, #tpu.memory_space<vmem>>, vector<128x128xf32>,
    } else {
    }
    return
  }
  func.func @transform_0(%arg0: i32, %arg1: i32) -> (i32, i32) {
    %c0_i32 = arith.constant 0 : i32
    %c0_i32_0 = arith.constant 0 : i32
    return %arg1, %c0_i32 : i32, i32
  }
  func.func @transform_1(%arg0: i32, %arg1: i32) -> (i32, i32) {
    %c0_i32 = arith.constant 0 : i32
    %c0_i32_0 = arith.constant 0 : i32
    %c0_i32_1 = arith.constant 0 : i32
    return %c0_i32, %c0_i32_0 : i32, i32
  }
  func.func @transform_2(%arg0: i32, %arg1: i32) -> (i32, i32) {
    %c0_i32 = arith.constant 0 : i32
    %c0_i32_0 = arith.constant 0 : i32
    %c0_i32_1 = arith.constant 0 : i32
    return %c0_i32, %c0_i32_0 : i32, i32
  }
  func.func @transform_3(%arg0: i32, %arg1: i32) -> (i32, i32) {
    %c0_i32 = arith.constant 0 : i32
    %c0_i32_0 = arith.constant 0 : i32
    %c0_i32_1 = arith.constant 0 : i32
    return %c0_i32, %c0_i32_0 : i32, i32
  }
  func.func @transform_4(%arg0: i32, %arg1: i32) -> (i32, i32) {
    %c0_i32 = arith.constant 0 : i32
    %c0_i32_0 = arith.constant 0 : i32
    return %arg1, %c0_i32 : i32, i32
  }
}

module attributes {stable_mosaic.version = 11 : i64} {
  func.func @kernel(%arg0: i32, %arg1: i32, %arg2: memref<32x512xbf16, #tpu.memory_space<vmem>>, %arg3: memref<512x128xbf16, #tpu.memory_space<vmem>>, %arg4: memref<1x128xf32, #tpu.memory_space<vmem>>, %arg5: memref<1x128xf32, #tpu.memory_space<vmem>>, %arg6: memref<32x128xf32, #tpu.memory_space<vmem>>, %arg7: memref<2x128xf32, #tpu.memory_space<vmem>>) attributes {dimension_semantics = [#tpu.dimension_semantics<arbitrary>, #tpu.dimension_semantics<arbitrary>], iteration_bounds = array<i64: 2, 1>, scalar_prefetch = 0 : i64, scratch_operands = 1 : i64, tpu.core_type = #tpu.core_type<tc>, window_params = [{transform_indices = @transform_0, window_bounds = array<i64: 32, 512>}, {pipeline_mode = #tpu.pipeline_mode<synchronous>, transform_indices = @transform_1, window_bounds = array<i64: 512, 128>}, {pipeline_mode = #tpu.pipeline_mode<synchronous>, transform_indices = @transform_2, window_bounds = array<i64: 1, 128>}, {pipeline_mode = #tpu.pipeline_mode<synchronous>, transform_indices = @transform_3, window_bounds = array<i64: 1, 128>}, {transform_indices = @transform_4, window_bounds = array<i64: 32, 128>}]} {
    %c0_i32 = arith.constant 0 : i32
    %0 = arith.cmpi eq, %arg0, %c0_i32 : i32
    %c0_i32_0 = arith.constant 0 : i32
    %1 = arith.cmpi eq, %arg1, %c0_i32_0 : i32
    %2 = arith.andi %0, %1 : i1
    %3 = arith.extui %2 : i1 to i32
    %c0_i32_1 = arith.constant 0 : i32
    %4 = arith.cmpi ne, %3, %c0_i32_1 : i32
    scf.if %4 {
      %cst_8 = arith.constant 0.000000e+00 : f32
      %14 = vector.broadcast %cst_8 : f32 to vector<2x128xf32>
      %c0_9 = arith.constant 0 : index
      %c0_10 = arith.constant 0 : index
      %15 = vector.load %arg7[%c0_9, %c0_10] : memref<2x128xf32, #tpu.memory_space<vmem>>, vector<2x128xf32>
      tpu.vector_store %arg7[%c0_9, %c0_10], %14 {strides = array<i32>} : memref<2x128xf32, #tpu.memory_space<vmem>>, vector<2x128xf32>,
    } else {
    }
    %c0 = arith.constant 0 : index
    %c0_2 = arith.constant 0 : index
    %5 = vector.load %arg2[%c0, %c0_2] : memref<32x512xbf16, #tpu.memory_space<vmem>>, vector<32x512xbf16>
    %c0_3 = arith.constant 0 : index
    %c0_4 = arith.constant 0 : index
    %6 = vector.load %arg3[%c0_3, %c0_4] : memref<512x128xbf16, #tpu.memory_space<vmem>>, vector<512x128xbf16>
    %cst = arith.constant dense<0.000000e+00> : vector<32x128xf32>
    %7 = tpu.matmul %5, %6, %cst {dimension_numbers = #tpu.dot_dimension_numbers<[1], [0], [0], [1], [0, 0, 1, 1], [], []>} : vector<32x512xbf16>, vector<512x128xbf16>, vector<32x128xf32> -> vector<32x128xf32>
    %c0_i32_5 = arith.constant 0 : i32
    %8 = arith.cmpi eq, %arg0, %c0_i32_5 : i32
    %9 = arith.extui %8 : i1 to i32
    %c0_i32_6 = arith.constant 0 : i32
    %10 = arith.cmpi ne, %9, %c0_i32_6 : i32
    scf.if %10 {
      %c0_8 = arith.constant 0 : index
      %c0_9 = arith.constant 0 : index
      %14 = vector.load %arg7[%c0_8, %c0_9] : memref<2x128xf32, #tpu.memory_space<vmem>>, vector<1x128xf32>
      %cst_10 = arith.constant dense<0.000000e+00> : vector<128xf32>
      %15 = vector.multi_reduction <add>, %7, %cst_10 [0] : vector<32x128xf32> to vector<128xf32>
      %16 = vector.shape_cast %15 : vector<128xf32> to vector<1x128xf32>
      %17 = arith.addf %14, %16 : vector<1x128xf32>
      %c0_11 = arith.constant 0 : index
      %c0_12 = arith.constant 0 : index
      %18 = vector.load %arg7[%c0_11, %c0_12] : memref<2x128xf32, #tpu.memory_space<vmem>>, vector<1x128xf32>
      tpu.vector_store %arg7[%c0_11, %c0_12], %17 {strides = array<i32>} : memref<2x128xf32, #tpu.memory_space<vmem>>, vector<1x128xf32>,
      %c1 = arith.constant 1 : index
      %c0_13 = arith.constant 0 : index
      %19 = vector.load %arg7[%c1, %c0_13] : memref<2x128xf32, #tpu.memory_space<vmem>>, vector<1x128xf32>
      %20 = arith.mulf %7, %7 : vector<32x128xf32>
      %cst_14 = arith.constant dense<0.000000e+00> : vector<128xf32>
      %21 = vector.multi_reduction <add>, %20, %cst_14 [0] : vector<32x128xf32> to vector<128xf32>
      %22 = vector.shape_cast %21 : vector<128xf32> to vector<1x128xf32>
      %23 = arith.addf %19, %22 : vector<1x128xf32>
      %c1_15 = arith.constant 1 : index
      %c0_16 = arith.constant 0 : index
      %24 = vector.load %arg7[%c1_15, %c0_16] : memref<2x128xf32, #tpu.memory_space<vmem>>, vector<1x128xf32>
      tpu.vector_store %arg7[%c1_15, %c0_16], %23 {strides = array<i32>} : memref<2x128xf32, #tpu.memory_space<vmem>>, vector<1x128xf32>,
    } else {
    }
    %c1_i32 = arith.constant 1 : i32
    %11 = arith.cmpi eq, %arg0, %c1_i32 : i32
    %12 = arith.extui %11 : i1 to i32
    %c0_i32_7 = arith.constant 0 : i32
    %13 = arith.cmpi ne, %12, %c0_i32_7 : i32
    scf.if %13 {
      %c0_8 = arith.constant 0 : index
      %c0_9 = arith.constant 0 : index
      %14 = vector.load %arg7[%c0_8, %c0_9] : memref<2x128xf32, #tpu.memory_space<vmem>>, vector<1x128xf32>
      %cst_10 = arith.constant 3.125000e-02 : f32
      %15 = vector.broadcast %cst_10 : f32 to vector<1x128xf32>
      %16 = arith.mulf %14, %15 : vector<1x128xf32>
      %c1 = arith.constant 1 : index
      %c0_11 = arith.constant 0 : index
      %17 = vector.load %arg7[%c1, %c0_11] : memref<2x128xf32, #tpu.memory_space<vmem>>, vector<1x128xf32>
      %cst_12 = arith.constant 3.125000e-02 : f32
      %18 = vector.broadcast %cst_12 : f32 to vector<1x128xf32>
      %19 = arith.mulf %17, %18 : vector<1x128xf32>
      %20 = arith.mulf %16, %16 : vector<1x128xf32>
      %21 = arith.subf %19, %20 : vector<1x128xf32>
      %cst_13 = arith.constant 0.000000e+00 : f32
      %22 = vector.broadcast %cst_13 : f32 to vector<1x128xf32>
      %23 = arith.maximumf %21, %22 : vector<1x128xf32>
      %24 = vector.broadcast %16 : vector<1x128xf32> to vector<32x128xf32>
      %25 = arith.subf %7, %24 : vector<32x128xf32>
      %cst_14 = arith.constant 9.99999974E-6 : f32
      %26 = vector.broadcast %cst_14 : f32 to vector<1x128xf32>
      %27 = arith.addf %23, %26 : vector<1x128xf32>
      %28 = math.rsqrt %27 : vector<1x128xf32>
      %29 = vector.broadcast %28 : vector<1x128xf32> to vector<32x128xf32>
      %30 = arith.mulf %25, %29 : vector<32x128xf32>
      %c0_15 = arith.constant 0 : index
      %c0_16 = arith.constant 0 : index
      %31 = vector.load %arg4[%c0_15, %c0_16] : memref<1x128xf32, #tpu.memory_space<vmem>>, vector<1x128xf32>
      %32 = vector.broadcast %31 : vector<1x128xf32> to vector<32x128xf32>
      %33 = arith.mulf %30, %32 : vector<32x128xf32>
      %c0_17 = arith.constant 0 : index
      %c0_18 = arith.constant 0 : index
      %34 = vector.load %arg5[%c0_17, %c0_18] : memref<1x128xf32, #tpu.memory_space<vmem>>, vector<1x128xf32>
      %35 = vector.broadcast %34 : vector<1x128xf32> to vector<32x128xf32>
      %36 = arith.addf %33, %35 : vector<32x128xf32>
      %cst_19 = arith.constant 0.000000e+00 : f32
      %37 = vector.broadcast %cst_19 : f32 to vector<32x128xf32>
      %38 = arith.cmpf oge, %36, %37 : vector<32x128xf32>
      %cst_20 = arith.constant 2.000000e-01 : f32
      %39 = vector.broadcast %cst_20 : f32 to vector<32x128xf32>
      %40 = arith.mulf %39, %36 : vector<32x128xf32>
      %41 = arith.select %38, %36, %40 : vector<32x128xi1>, vector<32x128xf32>
      %c0_21 = arith.constant 0 : index
      %c0_22 = arith.constant 0 : index
      %42 = vector.load %arg6[%c0_21, %c0_22] : memref<32x128xf32, #tpu.memory_space<vmem>>, vector<32x128xf32>
      tpu.vector_store %arg6[%c0_21, %c0_22], %41 {strides = array<i32>} : memref<32x128xf32, #tpu.memory_space<vmem>>, vector<32x128xf32>,
    } else {
    }
    return
  }
  func.func @transform_0(%arg0: i32, %arg1: i32) -> (i32, i32) {
    %c0_i32 = arith.constant 0 : i32
    %c0_i32_0 = arith.constant 0 : i32
    return %arg1, %c0_i32 : i32, i32
  }
  func.func @transform_1(%arg0: i32, %arg1: i32) -> (i32, i32) {
    %c0_i32 = arith.constant 0 : i32
    %c0_i32_0 = arith.constant 0 : i32
    %c0_i32_1 = arith.constant 0 : i32
    return %c0_i32, %c0_i32_0 : i32, i32
  }
  func.func @transform_2(%arg0: i32, %arg1: i32) -> (i32, i32) {
    %c0_i32 = arith.constant 0 : i32
    %c0_i32_0 = arith.constant 0 : i32
    %c0_i32_1 = arith.constant 0 : i32
    return %c0_i32, %c0_i32_0 : i32, i32
  }
  func.func @transform_3(%arg0: i32, %arg1: i32) -> (i32, i32) {
    %c0_i32 = arith.constant 0 : i32
    %c0_i32_0 = arith.constant 0 : i32
    %c0_i32_1 = arith.constant 0 : i32
    return %c0_i32, %c0_i32_0 : i32, i32
  }
  func.func @transform_4(%arg0: i32, %arg1: i32) -> (i32, i32) {
    %c0_i32 = arith.constant 0 : i32
    %c0_i32_0 = arith.constant 0 : i32
    return %arg1, %c0_i32 : i32, i32
  }
}

module attributes {stable_mosaic.version = 11 : i64} {
  func.func @_bias_sigmoid_kernel(%arg0: i32, %arg1: memref<8x1024xbf16, #tpu.memory_space<vmem>>, %arg2: memref<1024x128xbf16, #tpu.memory_space<vmem>>, %arg3: memref<1x128xf32, #tpu.memory_space<vmem>>, %arg4: memref<8x128xf32, #tpu.memory_space<vmem>>) attributes {dimension_semantics = [#tpu.dimension_semantics<parallel>], iteration_bounds = array<i64: 1>, scalar_prefetch = 0 : i64, scratch_operands = 0 : i64, tpu.core_type = #tpu.core_type<tc>, window_params = [{transform_indices = @transform_0, window_bounds = array<i64: 8, 1024>}, {pipeline_mode = #tpu.pipeline_mode<synchronous>, transform_indices = @transform_1, window_bounds = array<i64: 1024, 128>}, {pipeline_mode = #tpu.pipeline_mode<synchronous>, transform_indices = @transform_2, window_bounds = array<i64: 1, 128>}, {transform_indices = @transform_3, window_bounds = array<i64: 8, 128>}]} {
    %c0 = arith.constant 0 : index
    %c0_0 = arith.constant 0 : index
    %0 = vector.load %arg1[%c0, %c0_0] : memref<8x1024xbf16, #tpu.memory_space<vmem>>, vector<8x1024xbf16>
    %c0_1 = arith.constant 0 : index
    %c0_2 = arith.constant 0 : index
    %1 = vector.load %arg2[%c0_1, %c0_2] : memref<1024x128xbf16, #tpu.memory_space<vmem>>, vector<1024x128xbf16>
    %cst = arith.constant dense<0.000000e+00> : vector<8x128xf32>
    %2 = tpu.matmul %0, %1, %cst {dimension_numbers = #tpu.dot_dimension_numbers<[1], [0], [0], [1], [0, 0, 1, 1], [], []>} : vector<8x1024xbf16>, vector<1024x128xbf16>, vector<8x128xf32> -> vector<8x128xf32>
    %c0_3 = arith.constant 0 : index
    %c0_4 = arith.constant 0 : index
    %3 = vector.load %arg3[%c0_3, %c0_4] : memref<1x128xf32, #tpu.memory_space<vmem>>, vector<1x128xf32>
    %4 = vector.broadcast %3 : vector<1x128xf32> to vector<8x128xf32>
    %5 = arith.addf %2, %4 : vector<8x128xf32>
    %cst_5 = arith.constant 0.000000e+00 : f32
    %6 = vector.broadcast %cst_5 : f32 to vector<8x128xf32>
    %7 = arith.subf %6, %5 : vector<8x128xf32>
    %8 = math.exp %7 : vector<8x128xf32>
    %cst_6 = arith.constant 1.000000e+00 : f32
    %9 = vector.broadcast %cst_6 : f32 to vector<8x128xf32>
    %10 = arith.addf %9, %8 : vector<8x128xf32>
    %11 = tpu.reciprocal %10 {approx = true} : vector<8x128xf32> -> vector<8x128xf32>
    %cst_7 = arith.constant 0.000000e+00 : f32
    %cst_8 = arith.constant 1.000000e+00 : f32
    %12 = vector.broadcast %cst_7 : f32 to vector<8x128xf32>
    %13 = arith.maximumf %12, %11 : vector<8x128xf32>
    %14 = vector.broadcast %cst_8 : f32 to vector<8x128xf32>
    %15 = arith.minimumf %14, %13 : vector<8x128xf32>
    %c0_9 = arith.constant 0 : index
    %c0_10 = arith.constant 0 : index
    %16 = vector.load %arg4[%c0_9, %c0_10] : memref<8x128xf32, #tpu.memory_space<vmem>>, vector<8x128xf32>
    tpu.vector_store %arg4[%c0_9, %c0_10], %15 {strides = array<i32>} : memref<8x128xf32, #tpu.memory_space<vmem>>, vector<8x128xf32>,
    return
  }
  func.func @transform_0(%arg0: i32) -> (i32, i32) {
    %c0_i32 = arith.constant 0 : i32
    %c0_i32_0 = arith.constant 0 : i32
    return %arg0, %c0_i32 : i32, i32
  }
  func.func @transform_1(%arg0: i32) -> (i32, i32) {
    %c0_i32 = arith.constant 0 : i32
    %c0_i32_0 = arith.constant 0 : i32
    %c0_i32_1 = arith.constant 0 : i32
    return %c0_i32, %c0_i32_0 : i32, i32
  }
  func.func @transform_2(%arg0: i32) -> (i32, i32) {
    %c0_i32 = arith.constant 0 : i32
    %c0_i32_0 = arith.constant 0 : i32
    %c0_i32_1 = arith.constant 0 : i32
    return %c0_i32, %c0_i32_0 : i32, i32
  }
  func.func @transform_3(%arg0: i32) -> (i32, i32) {
    %c0_i32 = arith.constant 0 : i32
    %c0_i32_0 = arith.constant 0 : i32
    return %arg0, %c0_i32 : i32, i32
  }
}

</mosaic_0001>

<llo_original>
// kernel: discriminator_forward.5
$region0: #{discriminator_forward.5}
  #allocation0 [shape = 'u32[]', space=smem, size = 0x4, offset = 0x4, fixed_abs, tag = 'smem constant byte address 0x4 - core index']
  #allocation1 [shape = 'u32[72,128]{1,0:T(1,128)}', space=vmem, size = 0x9000, scoped, tag = 'internal scratch']
  %s0 = inlined_call_operand.vmem [shape: bf16[2048,128], index: 0, kind: input, shape index: {}]
  %s1 = inlined_call_operand.vmem [shape: bf16[128,128], index: 1, kind: input, shape index: {}]
  %s2 = inlined_call_operand.vmem [shape: f32[1,128], index: 2, kind: input, shape index: {}]
  %s3 = inlined_call_operand.vmem [shape: f32[2048,128], index: 3, kind: output, shape index: {}]
  %s4 = sld [smem:[#allocation0]]
  $region45: #{discriminator_forward.5} parent=0
    _
  %s6 = ssub.s32 1, %s4
  %s7 = scalar_select 0, %s6, %s4
  loop: start=0, step=1, limit=6
  $region2: #{discriminator_forward.5} parent=0 // loop_pre_header
    _
  $region3: #{discriminator_forward.5} parent=0 // loop_header
    %s9 = sphi 0, %s13
    %p10 = scmp.ge.s32.totalorder %s9, 6
    %s19 = sphi 0, %s21
    %s22 = sphi 0, %s19
    %s23 = sphi 0, %s22
    %s39 = sphi 0, %s23
    %s43 = sphi 0, %s43
    %s45 = sphi 0, %s43
    %s46 = sphi 0, %s45
    %s60 = sphi 0, %s46
    %s64 = sphi 0, %s64
    %s66 = sphi 0, %s64
    %s67 = sphi 0, %s66
    %s81 = sphi 0, %s67
    %s87 = sphi 0, %s89
    %s90 = sphi 0, %s87
    %s91 = sphi 0, %s90
    %s107 = sphi 0, %s91
  $region4: #{discriminator_forward.5} parent=0 // loop_header_branch
    %12 = sbr.rel (%p10) target = $region8
  $region5: #{discriminator_forward.5} parent=0 // loop_body
    %s14 = ssub.s32 %s9, 1
    %s15 = ssub.s32 %s9, 2
    %s16 = sadd.s32 %s9, 1
    %s17 = ssub.s32 %s9, %s16
    %p18 = scmp.eq.s32.totalorder %s17, 0
    %s20 = sadd.s32 %s19, 1
    %s21 = scalar_select %p18, %s19, %s20
    %p24 = pneg %p18
    %p25 = scmp.eq.s32.totalorder %s9, 3
    %p26 = por %p24, %p25
    %p27 = scmp.ne.s32.totalorder %s19, %s22
    %p28 = scmp.eq.s32.totalorder %s9, 0
    %p29 = por %p27, %p28
    %p30 = scmp.ne.s32.totalorder %s19, %s22
    %p31 = scmp.eq.s32.totalorder %s14, 3
    %p32 = por %p30, %p31
    %p33 = scmp.ne.s32.totalorder %s22, %s23
    %p34 = scmp.eq.s32.totalorder %s14, 0
    %p35 = por %p33, %p34
    %p36 = scmp.ne.s32.totalorder %s22, %s23
    %p37 = scmp.eq.s32.totalorder %s15, 3
    %p38 = por %p36, %p37
    %p40 = scmp.ne.s32.totalorder %s23, %s39
    %p41 = scmp.eq.s32.totalorder %s15, 0
    %p42 = por %p40, %p41
    %s44 = sadd.s32 %s43, 1
    %p47 = scmp.eq.s32.totalorder %s9, 3
    %p48 = scmp.ne.s32.totalorder %s43, %s45
    %p49 = scmp.eq.s32.totalorder %s9, 0
    %p50 = por %p48, %p49
    %p51 = scmp.ne.s32.totalorder %s43, %s45
    %p52 = scmp.eq.s32.totalorder %s14, 3
    %p53 = por %p51, %p52
    %p54 = scmp.ne.s32.totalorder %s45, %s46
    %p55 = scmp.eq.s32.totalorder %s14, 0
    %p56 = por %p54, %p55
    %p57 = scmp.ne.s32.totalorder %s45, %s46
    %p58 = scmp.eq.s32.totalorder %s15, 3
    %p59 = por %p57, %p58
    %p61 = scmp.ne.s32.totalorder %s46, %s60
    %p62 = scmp.eq.s32.totalorder %s15, 0
    %p63 = por %p61, %p62
    %s65 = sadd.s32 %s64, 1
    %p68 = scmp.eq.s32.totalorder %s9, 3
    %p69 = scmp.ne.s32.totalorder %s64, %s66
    %p70 = scmp.eq.s32.totalorder %s9, 0
    %p71 = por %p69, %p70
    %p72 = scmp.ne.s32.totalorder %s64, %s66
    %p73 = scmp.eq.s32.totalorder %s14, 3
    %p74 = por %p72, %p73
    %p75 = scmp.ne.s32.totalorder %s66, %s67
    %p76 = scmp.eq.s32.totalorder %s14, 0
    %p77 = por %p75, %p76
    %p78 = scmp.ne.s32.totalorder %s66, %s67
    %p79 = scmp.eq.s32.totalorder %s15, 3
    %p80 = por %p78, %p79
    %p82 = scmp.ne.s32.totalorder %s67, %s81
    %p83 = scmp.eq.s32.totalorder %s15, 0
    %p84 = por %p82, %p83
    %s85 = ssub.s32 %s9, %s16
    %p86 = scmp.eq.s32.totalorder %s85, 0
    %s88 = sadd.s32 %s87, 1
    %s89 = scalar_select %p86, %s87, %s88
    %p92 = pneg %p86
    %p93 = scmp.eq.s32.totalorder %s9, 3
    %p94 = por %p92, %p93
    %p95 = scmp.ne.s32.totalorder %s87, %s90
    %p96 = scmp.eq.s32.totalorder %s9, 0
    %p97 = por %p95, %p96
    %p98 = scmp.ne.s32.totalorder %s87, %s90
    %p99 = scmp.eq.s32.totalorder %s14, 3
    %p100 = por %p98, %p99
    %p101 = scmp.ne.s32.totalorder %s90, %s91
    %p102 = scmp.eq.s32.totalorder %s14, 0
    %p103 = por %p101, %p102
    %p104 = scmp.ne.s32.totalorder %s90, %s91
    %p105 = scmp.eq.s32.totalorder %s15, 3
    %p106 = por %p104, %p105
    %p108 = scmp.ne.s32.totalorder %s91, %s107
    %p109 = scmp.eq.s32.totalorder %s15, 0
    %p110 = por %p108, %p109
    %p111 = scmp.le.s32.totalorder 1, %s9
    %p112 = scmp.lt.s32.totalorder %s9, 5
    %p113 = pnand %p111, %p112
    %p114 = pneg %p113
    // Predicated region
    $region9: #{discriminator_forward.5} parent=5 // pred_check
      _
    $region10: #{discriminator_forward.5} parent=5 // pred_check_branch
      %116 = sbr.rel (%p113) target = $region12
    $region11: #{discriminator_forward.5} parent=5 // pred_region
      %s117 = ssub.s32 %s9, 1
      // Predicated region
      $region13: #{discriminator_forward.5} parent=11 // pred_check
        %p118 = pneg %p56
      $region14: #{discriminator_forward.5} parent=11 // pred_check_branch
        %120 = sbr.rel (%p118) target = $region16
      $region15: #{discriminator_forward.5} parent=11 // pred_region
        _
      $region16: #{discriminator_forward.5} parent=11 // pred_fallthru
        _
      // Predicated region
      $region17: #{discriminator_forward.5} parent=11 // pred_check
        %p121 = pneg %p77
      $region18: #{discriminator_forward.5} parent=11 // pred_check_branch
        %123 = sbr.rel (%p121) target = $region20
      $region19: #{discriminator_forward.5} parent=11 // pred_region
        _
      $region20: #{discriminator_forward.5} parent=11 // pred_fallthru
        _
    $region12: #{discriminator_forward.5} parent=5 // pred_fallthru
      _
    %p124 = scmp.lt.s32.totalorder %s9, 4
    // Predicated region
    $region21: #{discriminator_forward.5} parent=5 // pred_check
      %p125 = pneg %p124
    $region22: #{discriminator_forward.5} parent=5 // pred_check_branch
      %127 = sbr.rel (%p125) target = $region24
    $region23: #{discriminator_forward.5} parent=5 // pred_region
      // Predicated region
      $region25: #{discriminator_forward.5} parent=23 // pred_check
        %p128 = pneg %p29
      $region26: #{discriminator_forward.5} parent=23 // pred_check_branch
        %130 = sbr.rel (%p128) target = $region28
      $region27: #{discriminator_forward.5} parent=23 // pred_region
        %s131 = smul.u32 64, %s9
        %p132 = scmp.lt.s32.totalorder %s131, 255
        %s133 = scalar_select %p132, %s131, 255
        %s134 = smul.addr %s133, 4
        %s135 = scalar_lea.vmem %s0, %s134
        %s136 = smul.u32 64, %s9
      $region28: #{discriminator_forward.5} parent=23 // pred_fallthru
        _
    $region24: #{discriminator_forward.5} parent=5 // pred_fallthru
      _
    %p137 = scmp.le.s32.totalorder 1, %s9
    %p138 = scmp.lt.s32.totalorder %s9, 5
    %p139 = pnand %p137, %p138
    %p140 = pneg %p139
    // Predicated region
    $region29: #{discriminator_forward.5} parent=5 // pred_check
      _
    $region30: #{discriminator_forward.5} parent=5 // pred_check_branch
      %142 = sbr.rel (%p139) target = $region32
    $region31: #{discriminator_forward.5} parent=5 // pred_region
      %s143 = ssub.s32 %s9, 1
      %s144 = smul.u32 64, %s14
      %p145 = scmp.lt.s32.totalorder %s144, 255
      %s146 = scalar_select %p145, %s144, 255
      %s147 = smul.addr %s146, 4
      %s148 = scalar_lea.vmem %s0, %s147
      %p149 = pneg %p35
      %p150 = pneg %p32
      %p151 = pneg %p56
      %p152 = pneg %p53
      %p153 = pneg %p77
      %p154 = pneg %p74
      %p155 = pneg %p103
      %p156 = pneg %p100
      %s157 = smul.u32 64, %s14
      %p158 = scmp.lt.s32.totalorder %s157, 255
      %s159 = scalar_select %p158, %s157, 255
      %s160 = smul.addr %s159, 8
      %s161 = scalar_lea.vmem %s3, %s160
      %s162 = smul.u32 64, %s14
      %p163 = scmp.lt.s32.totalorder %s162, 255
      %s164 = scalar_select %p163, %s162, 255
      %s165 = smul.addr %s164, 4
      %s166 = scalar_lea.vmem %s0, %s165
      %s167 = smul.u32 64, %s14
      %s168 = smul.u32 64, %s14
      %p169 = scmp.lt.s32.totalorder %s168, 255
      %s170 = scalar_select %p169, %s168, 255
      %s171 = smul.addr %s170, 8
      %s172 = scalar_lea.vmem %s3, %s171
      %s173 = smul.u32 64, %s14
      %v174 = vld [vmem:[%s166] sm:$0xf]
      %v175 = vld [vmem:[%s166 + $0x4] sm:$0xf]
      %v176 = vld [vmem:[%s166 + $0x8] sm:$0xf]
      %v177 = vld [vmem:[%s166 + $0xc] sm:$0xf]
      %v178 = vld [vmem:[%s166 + $0x10] sm:$0xf]
      %v179 = vld [vmem:[%s166 + $0x14] sm:$0xf]
      %v180 = vld [vmem:[%s166 + $0x18] sm:$0xf]
      %v181 = vld [vmem:[%s166 + $0x1c] sm:$0xf]
      %v182 = vld [vmem:[%s166 + $0x20] sm:$0xf]
      %v183 = vld [vmem:[%s166 + $0x24] sm:$0xf]
      %v184 = vld [vmem:[%s166 + $0x28] sm:$0xf]
      %v185 = vld [vmem:[%s166 + $0x2c] sm:$0xf]
      %v186 = vld [vmem:[%s166 + $0x30] sm:$0xf]
      %v187 = vld [vmem:[%s166 + $0x34] sm:$0xf]
      %v188 = vld [vmem:[%s166 + $0x38] sm:$0xf]
      %v189 = vld [vmem:[%s166 + $0x3c] sm:$0xf]
      %v190 = vld [vmem:[%s166 + $0x40] sm:$0xf]
      %v191 = vld [vmem:[%s166 + $0x44] sm:$0xf]
      %v192 = vld [vmem:[%s166 + $0x48] sm:$0xf]
      %v193 = vld [vmem:[%s166 + $0x4c] sm:$0xf]
      %v194 = vld [vmem:[%s166 + $0x50] sm:$0xf]
      %v195 = vld [vmem:[%s166 + $0x54] sm:$0xf]
      %v196 = vld [vmem:[%s166 + $0x58] sm:$0xf]
      %v197 = vld [vmem:[%s166 + $0x5c] sm:$0xf]
      %v198 = vld [vmem:[%s166 + $0x60] sm:$0xf]
      %v199 = vld [vmem:[%s166 + $0x64] sm:$0xf]
      %v200 = vld [vmem:[%s166 + $0x68] sm:$0xf]
      %v201 = vld [vmem:[%s166 + $0x6c] sm:$0xf]
      %v202 = vld [vmem:[%s166 + $0x70] sm:$0xf]
      %v203 = vld [vmem:[%s166 + $0x74] sm:$0xf]
      %v204 = vld [vmem:[%s166 + $0x78] sm:$0xf]
      %v205 = vld [vmem:[%s166 + $0x7c] sm:$0xf]
      %v206 = vld [vmem:[%s166 + $0x80] sm:$0xf]
      %v207 = vld [vmem:[%s166 + $0x84] sm:$0xf]
      %v208 = vld [vmem:[%s166 + $0x88] sm:$0xf]
      %v209 = vld [vmem:[%s166 + $0x8c] sm:$0xf]
      %v210 = vld [vmem:[%s166 + $0x90] sm:$0xf]
      %v211 = vld [vmem:[%s166 + $0x94] sm:$0xf]
      %v212 = vld [vmem:[%s166 + $0x98] sm:$0xf]
      %v213 = vld [vmem:[%s166 + $0x9c] sm:$0xf]
      %v214 = vld [vmem:[%s166 + $0xa0] sm:$0xf]
      %v215 = vld [vmem:[%s166 + $0xa4] sm:$0xf]
      %v216 = vld [vmem:[%s166 + $0xa8] sm:$0xf]
      %v217 = vld [vmem:[%s166 + $0xac] sm:$0xf]
      %v218 = vld [vmem:[%s166 + $0xb0] sm:$0xf]
      %v219 = vld [vmem:[%s166 + $0xb4] sm:$0xf]
      %v220 = vld [vmem:[%s166 + $0xb8] sm:$0xf]
      %v221 = vld [vmem:[%s166 + $0xbc] sm:$0xf]
      %v222 = vld [vmem:[%s166 + $0xc0] sm:$0xf]
      %v223 = vld [vmem:[%s166 + $0xc4] sm:$0xf]
      %v224 = vld [vmem:[%s166 + $0xc8] sm:$0xf]
      %v225 = vld [vmem:[%s166 + $0xcc] sm:$0xf]
      %v226 = vld [vmem:[%s166 + $0xd0] sm:$0xf]
      %v227 = vld [vmem:[%s166 + $0xd4] sm:$0xf]
      %v228 = vld [vmem:[%s166 + $0xd8] sm:$0xf]
      %v229 = vld [vmem:[%s166 + $0xdc] sm:$0xf]
      %v230 = vld [vmem:[%s166 + $0xe0] sm:$0xf]
      %v231 = vld [vmem:[%s166 + $0xe4] sm:$0xf]
      %v232 = vld [vmem:[%s166 + $0xe8] sm:$0xf]
      %v233 = vld [vmem:[%s166 + $0xec] sm:$0xf]
      %v234 = vld [vmem:[%s166 + $0xf0] sm:$0xf]
      %v235 = vld [vmem:[%s166 + $0xf4] sm:$0xf]
      %v236 = vld [vmem:[%s166 + $0xf8] sm:$0xf]
      %v237 = vld [vmem:[%s166 + $0xfc] sm:$0xf]
      %v238 = vld [vmem:[%s1] sm:$0xf]
      %v239 = vld [vmem:[%s1 + $0x4] sm:$0xf]
      %v240 = vld [vmem:[%s1 + $0x8] sm:$0xf]
      %v241 = vld [vmem:[%s1 + $0xc] sm:$0xf]
      %v242 = vld [vmem:[%s1 + $0x10] sm:$0xf]
      %v243 = vld [vmem:[%s1 + $0x14] sm:$0xf]
      %v244 = vld [vmem:[%s1 + $0x18] sm:$0xf]
      %v245 = vld [vmem:[%s1 + $0x1c] sm:$0xf]
      %v246 = vld [vmem:[%s1 + $0x20] sm:$0xf]
      %v247 = vld [vmem:[%s1 + $0x24] sm:$0xf]
      %v248 = vld [vmem:[%s1 + $0x28] sm:$0xf]
      %v249 = vld [vmem:[%s1 + $0x2c] sm:$0xf]
      %v250 = vld [vmem:[%s1 + $0x30] sm:$0xf]
      %v251 = vld [vmem:[%s1 + $0x34] sm:$0xf]
      %v252 = vld [vmem:[%s1 + $0x38] sm:$0xf]
      %v253 = vld [vmem:[%s1 + $0x3c] sm:$0xf]
      %v254 = vld [vmem:[%s2] sm:$0x1]
      %v256 = vperm.slane %v254, 0
      %v322 = vunpack.c.l.b16 %v174
      %v323 = vunpack.c.l.b16 %v175
      %v324 = vunpack.c.l.b16 %v176
      %v325 = vunpack.c.l.b16 %v177
      %v326 = vunpack.c.l.b16 %v178
      %v327 = vunpack.c.l.b16 %v179
      %v328 = vunpack.c.l.b16 %v180
      %v329 = vunpack.c.l.b16 %v181
      %v330 = vunpack.c.l.b16 %v182
      %v331 = vunpack.c.l.b16 %v183
      %v332 = vunpack.c.l.b16 %v184
      %v333 = vunpack.c.l.b16 %v185
      %v334 = vunpack.c.l.b16 %v186
      %v335 = vunpack.c.l.b16 %v187
      %v336 = vunpack.c.l.b16 %v188
      %v337 = vunpack.c.l.b16 %v189
      %v338 = vunpack.c.l.b16 %v190
      %v339 = vunpack.c.l.b16 %v191
      %v340 = vunpack.c.l.b16 %v192
      %v341 = vunpack.c.l.b16 %v193
      %v342 = vunpack.c.l.b16 %v194
      %v343 = vunpack.c.l.b16 %v195
      %v344 = vunpack.c.l.b16 %v196
      %v345 = vunpack.c.l.b16 %v197
      %v346 = vunpack.c.l.b16 %v198
      %v347 = vunpack.c.l.b16 %v199
      %v348 = vunpack.c.l.b16 %v200
      %v349 = vunpack.c.l.b16 %v201
      %v350 = vunpack.c.l.b16 %v202
      %v351 = vunpack.c.l.b16 %v203
      %v352 = vunpack.c.l.b16 %v204
      %v353 = vunpack.c.l.b16 %v205
      %v354 = vunpack.c.l.b16 %v206
      %v355 = vunpack.c.l.b16 %v207
      %v356 = vunpack.c.l.b16 %v208
      %v357 = vunpack.c.l.b16 %v209
      %v358 = vunpack.c.l.b16 %v210
      %v359 = vunpack.c.l.b16 %v211
      %v360 = vunpack.c.l.b16 %v212
      %v361 = vunpack.c.l.b16 %v213
      %v362 = vunpack.c.l.b16 %v214
      %v363 = vunpack.c.l.b16 %v215
      %v364 = vunpack.c.l.b16 %v216
      %v365 = vunpack.c.l.b16 %v217
      %v366 = vunpack.c.l.b16 %v218
      %v367 = vunpack.c.l.b16 %v219
      %v368 = vunpack.c.l.b16 %v220
      %v369 = vunpack.c.l.b16 %v221
      %v370 = vunpack.c.l.b16 %v222
      %v371 = vunpack.c.l.b16 %v223
      %v372 = vunpack.c.l.b16 %v224
      %v373 = vunpack.c.l.b16 %v225
      %v374 = vunpack.c.l.b16 %v226
      %v375 = vunpack.c.l.b16 %v227
      %v376 = vunpack.c.l.b16 %v228
      %v377 = vunpack.c.l.b16 %v229
      %v378 = vunpack.c.l.b16 %v230
      %v379 = vunpack.c.l.b16 %v231
      %v380 = vunpack.c.l.b16 %v232
      %v381 = vunpack.c.l.b16 %v233
      %v382 = vunpack.c.l.b16 %v234
      %v383 = vunpack.c.l.b16 %v235
      %v384 = vunpack.c.l.b16 %v236
      %v385 = vunpack.c.l.b16 %v237
      %v386 = vpack.c.b16 %v323, %v322
      %v387 = vpack.c.b16 %v325, %v324
      %v388 = vpack.c.b16 %v327, %v326
      %v389 = vpack.c.b16 %v329, %v328
      %v390 = vpack.c.b16 %v331, %v330
      %v391 = vpack.c.b16 %v333, %v332
      %v392 = vpack.c.b16 %v335, %v334
      %v393 = vpack.c.b16 %v337, %v336
      %v394 = vpack.c.b16 %v339, %v338
      %v395 = vpack.c.b16 %v341, %v340
      %v396 = vpack.c.b16 %v343, %v342
      %v397 = vpack.c.b16 %v345, %v344
      %v398 = vpack.c.b16 %v347, %v346
      %v399 = vpack.c.b16 %v349, %v348
      %v400 = vpack.c.b16 %v351, %v350
      %v401 = vpack.c.b16 %v353, %v352
      %v402 = vpack.c.b16 %v355, %v354
      %v403 = vpack.c.b16 %v357, %v356
      %v404 = vpack.c.b16 %v359, %v358
      %v405 = vpack.c.b16 %v361, %v360
      %v406 = vpack.c.b16 %v363, %v362
      %v407 = vpack.c.b16 %v365, %v364
      %v408 = vpack.c.b16 %v367, %v366
      %v409 = vpack.c.b16 %v369, %v368
      %v410 = vpack.c.b16 %v371, %v370
      %v411 = vpack.c.b16 %v373, %v372
      %v412 = vpack.c.b16 %v375, %v374
      %v413 = vpack.c.b16 %v377, %v376
      %v414 = vpack.c.b16 %v379, %v378
      %v415 = vpack.c.b16 %v381, %v380
      %v416 = vpack.c.b16 %v383, %v382
      %v417 = vpack.c.b16 %v385, %v384
      %v466 = vunpack.c.l.b16 %v238
      %v467 = vunpack.c.l.b16 %v239
      %v468 = vunpack.c.l.b16 %v240
      %v469 = vunpack.c.l.b16 %v241
      %v470 = vunpack.c.l.b16 %v242
      %v471 = vunpack.c.l.b16 %v243
      %v472 = vunpack.c.l.b16 %v244
      %v473 = vunpack.c.l.b16 %v245
      %v474 = vunpack.c.l.b16 %v246
      %v475 = vunpack.c.l.b16 %v247
      %v476 = vunpack.c.l.b16 %v248
      %v477 = vunpack.c.l.b16 %v249
      %v478 = vunpack.c.l.b16 %v250
      %v479 = vunpack.c.l.b16 %v251
      %v480 = vunpack.c.l.b16 %v252
      %v481 = vunpack.c.l.b16 %v253
      %v482 = vpack.c.b16 %v467, %v466
      %v483 = vpack.c.b16 %v469, %v468
      %v484 = vpack.c.b16 %v471, %v470
      %v485 = vpack.c.b16 %v473, %v472
      %v486 = vpack.c.b16 %v475, %v474
      %v487 = vpack.c.b16 %v477, %v476
      %v488 = vpack.c.b16 %v479, %v478
      %v489 = vpack.c.b16 %v481, %v480
      %498 = vmatpush.bf16.msra.mxu0 %v489
      %499 = vmatpush.bf16.msra.mxu0 %v488
      %500 = vmatpush.bf16.msra.mxu0 %v487
      %501 = vmatpush.bf16.msra.mxu0 %v486
      %502 = vmatpush.bf16.msra.mxu0 %v485
      %503 = vmatpush.bf16.msra.mxu0 %v484
      %504 = vmatpush.bf16.msra.mxu0 %v483
      %505 = vmatpush.bf16.msra.mxu0 %v482
      %506 = vmatmul.bf16.gmra.mxu0 %v386
      %v507 = vpop.f32.mrf.mxu0
      %v508 = vadd.f32 %v256, %v507
      %v509 = vpop.f32.mrf.mxu0
      %v510 = vadd.f32 %v256, %v509
      %511 = vmatmul.bf16.gmra.mxu0 %v387
      %v512 = vpop.f32.mrf.mxu0
      %v513 = vadd.f32 %v256, %v512
      %v514 = vpop.f32.mrf.mxu0
      %v515 = vadd.f32 %v256, %v514
      %516 = vmatmul.bf16.gmra.mxu0 %v388
      %v517 = vpop.f32.mrf.mxu0
      %v518 = vadd.f32 %v256, %v517
      %v519 = vpop.f32.mrf.mxu0
      %v520 = vadd.f32 %v256, %v519
      %521 = vmatmul.bf16.gmra.mxu0 %v389
      %v522 = vpop.f32.mrf.mxu0
      %v523 = vadd.f32 %v256, %v522
      %v524 = vpop.f32.mrf.mxu0
      %v525 = vadd.f32 %v256, %v524
      %526 = vmatmul.bf16.gmra.mxu0 %v390
      %v527 = vpop.f32.mrf.mxu0
      %v528 = vadd.f32 %v256, %v527
      %v529 = vpop.f32.mrf.mxu0
      %v530 = vadd.f32 %v256, %v529
      %531 = vmatmul.bf16.gmra.mxu0 %v391
      %v532 = vpop.f32.mrf.mxu0
      %v533 = vadd.f32 %v256, %v532
      %v534 = vpop.f32.mrf.mxu0
      %v535 = vadd.f32 %v256, %v534
      %536 = vmatmul.bf16.gmra.mxu0 %v392
      %v537 = vpop.f32.mrf.mxu0
      %v538 = vadd.f32 %v256, %v537
      %v539 = vpop.f32.mrf.mxu0
      %v540 = vadd.f32 %v256, %v539
      %541 = vmatmul.bf16.gmra.mxu0 %v393
      %v542 = vpop.f32.mrf.mxu0
      %v543 = vadd.f32 %v256, %v542
      %v544 = vpop.f32.mrf.mxu0
      %v545 = vadd.f32 %v256, %v544
      %546 = vmatmul.bf16.gmra.mxu0 %v394
      %v547 = vpop.f32.mrf.mxu0
      %v548 = vadd.f32 %v256, %v547
      %v549 = vpop.f32.mrf.mxu0
      %v550 = vadd.f32 %v256, %v549
      %551 = vmatmul.bf16.gmra.mxu0 %v395
      %v552 = vpop.f32.mrf.mxu0
      %v553 = vadd.f32 %v256, %v552
      %v554 = vpop.f32.mrf.mxu0
      %v555 = vadd.f32 %v256, %v554
      %556 = vmatmul.bf16.gmra.mxu0 %v396
      %v557 = vpop.f32.mrf.mxu0
      %v558 = vadd.f32 %v256, %v557
      %v559 = vpop.f32.mrf.mxu0
      %v560 = vadd.f32 %v256, %v559
      %561 = vmatmul.bf16.gmra.mxu0 %v397
      %v562 = vpop.f32.mrf.mxu0
      %v563 = vadd.f32 %v256, %v562
      %v564 = vpop.f32.mrf.mxu0
      %v565 = vadd.f32 %v256, %v564
      %566 = vmatmul.bf16.gmra.mxu0 %v398
      %v567 = vpop.f32.mrf.mxu0
      %v568 = vadd.f32 %v256, %v567
      %v569 = vpop.f32.mrf.mxu0
      %v570 = vadd.f32 %v256, %v569
      %571 = vmatmul.bf16.gmra.mxu0 %v399
      %v572 = vpop.f32.mrf.mxu0
      %v573 = vadd.f32 %v256, %v572
      %v574 = vpop.f32.mrf.mxu0
      %v575 = vadd.f32 %v256, %v574
      %576 = vmatmul.bf16.gmra.mxu0 %v400
      %v577 = vpop.f32.mrf.mxu0
      %v578 = vadd.f32 %v256, %v577
      %v579 = vpop.f32.mrf.mxu0
      %v580 = vadd.f32 %v256, %v579
      %581 = vmatmul.bf16.gmra.mxu0 %v401
      %v582 = vpop.f32.mrf.mxu0
      %v583 = vadd.f32 %v256, %v582
      %v584 = vpop.f32.mrf.mxu0
      %v585 = vadd.f32 %v256, %v584
      %586 = vmatmul.bf16.gmra.mxu0 %v402
      %v587 = vpop.f32.mrf.mxu0
      %v588 = vadd.f32 %v256, %v587
      %v589 = vpop.f32.mrf.mxu0
      %v590 = vadd.f32 %v256, %v589
      %591 = vmatmul.bf16.gmra.mxu0 %v403
      %v592 = vpop.f32.mrf.mxu0
      %v593 = vadd.f32 %v256, %v592
      %v594 = vpop.f32.mrf.mxu0
      %v595 = vadd.f32 %v256, %v594
      %596 = vmatmul.bf16.gmra.mxu0 %v404
      %v597 = vpop.f32.mrf.mxu0
      %v598 = vadd.f32 %v256, %v597
      %v599 = vpop.f32.mrf.mxu0
      %v600 = vadd.f32 %v256, %v599
      %601 = vmatmul.bf16.gmra.mxu0 %v405
      %v602 = vpop.f32.mrf.mxu0
      %v603 = vadd.f32 %v256, %v602
      %v604 = vpop.f32.mrf.mxu0
      %v605 = vadd.f32 %v256, %v604
      %606 = vmatmul.bf16.gmra.mxu0 %v406
      %v607 = vpop.f32.mrf.mxu0
      %v608 = vadd.f32 %v256, %v607
      %v609 = vpop.f32.mrf.mxu0
      %v610 = vadd.f32 %v256, %v609
      %611 = vmatmul.bf16.gmra.mxu0 %v407
      %v612 = vpop.f32.mrf.mxu0
      %v613 = vadd.f32 %v256, %v612
      %v614 = vpop.f32.mrf.mxu0
      %v615 = vadd.f32 %v256, %v614
      %616 = vmatmul.bf16.gmra.mxu0 %v408
      %v617 = vpop.f32.mrf.mxu0
      %v618 = vadd.f32 %v256, %v617
      %v619 = vpop.f32.mrf.mxu0
      %v620 = vadd.f32 %v256, %v619
      %621 = vmatmul.bf16.gmra.mxu0 %v409
      %v622 = vpop.f32.mrf.mxu0
      %v623 = vadd.f32 %v256, %v622
      %v624 = vpop.f32.mrf.mxu0
      %v625 = vadd.f32 %v256, %v624
      %626 = vmatmul.bf16.gmra.mxu0 %v410
      %v627 = vpop.f32.mrf.mxu0
      %v628 = vadd.f32 %v256, %v627
      %v629 = vpop.f32.mrf.mxu0
      %v630 = vadd.f32 %v256, %v629
      %631 = vmatmul.bf16.gmra.mxu0 %v411
      %v632 = vpop.f32.mrf.mxu0
      %v633 = vadd.f32 %v256, %v632
      %v634 = vpop.f32.mrf.mxu0
      %v635 = vadd.f32 %v256, %v634
      %636 = vmatmul.bf16.gmra.mxu0 %v412
      %v637 = vpop.f32.mrf.mxu0
      %v638 = vadd.f32 %v256, %v637
      %v639 = vpop.f32.mrf.mxu0
      %v640 = vadd.f32 %v256, %v639
      %641 = vmatmul.bf16.gmra.mxu0 %v413
      %v642 = vpop.f32.mrf.mxu0
      %v643 = vadd.f32 %v256, %v642
      %v644 = vpop.f32.mrf.mxu0
      %v645 = vadd.f32 %v256, %v644
      %646 = vmatmul.bf16.gmra.mxu0 %v414
      %v647 = vpop.f32.mrf.mxu0
      %v648 = vadd.f32 %v256, %v647
      %v649 = vpop.f32.mrf.mxu0
      %v650 = vadd.f32 %v256, %v649
      %651 = vmatmul.bf16.gmra.mxu0 %v415
      %v652 = vpop.f32.mrf.mxu0
      %v653 = vadd.f32 %v256, %v652
      %v654 = vpop.f32.mrf.mxu0
      %v655 = vadd.f32 %v256, %v654
      %656 = vmatmul.bf16.gmra.mxu0 %v416
      %v657 = vpop.f32.mrf.mxu0
      %v658 = vadd.f32 %v256, %v657
      %v659 = vpop.f32.mrf.mxu0
      %v660 = vadd.f32 %v256, %v659
      %661 = vmatmul.bf16.gmra.mxu0 %v417
      %v662 = vpop.f32.mrf.mxu0
      %v663 = vadd.f32 %v256, %v662
      %v664 = vpop.f32.mrf.mxu0
      %v665 = vadd.f32 %v256, %v664
      %666 = vdwg.mxu0
      %vm667 = vcmp.ge.f32.partialorder %v508, 0.0
      %vm668 = vcmp.ge.f32.partialorder %v510, 0.0
      %vm669 = vcmp.ge.f32.partialorder %v513, 0.0
      %vm670 = vcmp.ge.f32.partialorder %v515, 0.0
      %vm671 = vcmp.ge.f32.partialorder %v518, 0.0
      %vm672 = vcmp.ge.f32.partialorder %v520, 0.0
      %vm673 = vcmp.ge.f32.partialorder %v523, 0.0
      %vm674 = vcmp.ge.f32.partialorder %v525, 0.0
      %vm675 = vcmp.ge.f32.partialorder %v528, 0.0
      %vm676 = vcmp.ge.f32.partialorder %v530, 0.0
      %vm677 = vcmp.ge.f32.partialorder %v533, 0.0
      %vm678 = vcmp.ge.f32.partialorder %v535, 0.0
      %vm679 = vcmp.ge.f32.partialorder %v538, 0.0
      %vm680 = vcmp.ge.f32.partialorder %v540, 0.0
      %vm681 = vcmp.ge.f32.partialorder %v543, 0.0
      %vm682 = vcmp.ge.f32.partialorder %v545, 0.0
      %vm683 = vcmp.ge.f32.partialorder %v548, 0.0
      %vm684 = vcmp.ge.f32.partialorder %v550, 0.0
      %vm685 = vcmp.ge.f32.partialorder %v553, 0.0
      %vm686 = vcmp.ge.f32.partialorder %v555, 0.0
      %vm687 = vcmp.ge.f32.partialorder %v558, 0.0
      %vm688 = vcmp.ge.f32.partialorder %v560, 0.0
      %vm689 = vcmp.ge.f32.partialorder %v563, 0.0
      %vm690 = vcmp.ge.f32.partialorder %v565, 0.0
      %vm691 = vcmp.ge.f32.partialorder %v568, 0.0
      %vm692 = vcmp.ge.f32.partialorder %v570, 0.0
      %vm693 = vcmp.ge.f32.partialorder %v573, 0.0
      %vm694 = vcmp.ge.f32.partialorder %v575, 0.0
      %vm695 = vcmp.ge.f32.partialorder %v578, 0.0
      %vm696 = vcmp.ge.f32.partialorder %v580, 0.0
      %vm697 = vcmp.ge.f32.partialorder %v583, 0.0
      %vm698 = vcmp.ge.f32.partialorder %v585, 0.0
      %vm699 = vcmp.ge.f32.partialorder %v588, 0.0
      %vm700 = vcmp.ge.f32.partialorder %v590, 0.0
      %vm701 = vcmp.ge.f32.partialorder %v593, 0.0
      %vm702 = vcmp.ge.f32.partialorder %v595, 0.0
      %vm703 = vcmp.ge.f32.partialorder %v598, 0.0
      %vm704 = vcmp.ge.f32.partialorder %v600, 0.0
      %vm705 = vcmp.ge.f32.partialorder %v603, 0.0
      %vm706 = vcmp.ge.f32.partialorder %v605, 0.0
      %vm707 = vcmp.ge.f32.partialorder %v608, 0.0
      %vm708 = vcmp.ge.f32.partialorder %v610, 0.0
      %vm709 = vcmp.ge.f32.partialorder %v613, 0.0
      %vm710 = vcmp.ge.f32.partialorder %v615, 0.0
      %vm711 = vcmp.ge.f32.partialorder %v618, 0.0
      %vm712 = vcmp.ge.f32.partialorder %v620, 0.0
      %vm713 = vcmp.ge.f32.partialorder %v623, 0.0
      %vm714 = vcmp.ge.f32.partialorder %v625, 0.0
      %vm715 = vcmp.ge.f32.partialorder %v628, 0.0
      %vm716 = vcmp.ge.f32.partialorder %v630, 0.0
      %vm717 = vcmp.ge.f32.partialorder %v633, 0.0
      %vm718 = vcmp.ge.f32.partialorder %v635, 0.0
      %vm719 = vcmp.ge.f32.partialorder %v638, 0.0
      %vm720 = vcmp.ge.f32.partialorder %v640, 0.0
      %vm721 = vcmp.ge.f32.partialorder %v643, 0.0
      %vm722 = vcmp.ge.f32.partialorder %v645, 0.0
      %vm723 = vcmp.ge.f32.partialorder %v648, 0.0
      %vm724 = vcmp.ge.f32.partialorder %v650, 0.0
      %vm725 = vcmp.ge.f32.partialorder %v653, 0.0
      %vm726 = vcmp.ge.f32.partialorder %v655, 0.0
      %vm727 = vcmp.ge.f32.partialorder %v658, 0.0
      %vm728 = vcmp.ge.f32.partialorder %v660, 0.0
      %vm729 = vcmp.ge.f32.partialorder %v663, 0.0
      %vm730 = vcmp.ge.f32.partialorder %v665, 0.0
      %v731 = vmul.f32 %v508, 0.2
      %v732 = vmul.f32 %v510, 0.2
      %v733 = vmul.f32 %v513, 0.2
      %v734 = vmul.f32 %v515, 0.2
      %v735 = vmul.f32 %v518, 0.2
      %v736 = vmul.f32 %v520, 0.2
      %v737 = vmul.f32 %v523, 0.2
      %v738 = vmul.f32 %v525, 0.2
      %v739 = vmul.f32 %v528, 0.2
      %v740 = vmul.f32 %v530, 0.2
      %v741 = vmul.f32 %v533, 0.2
      %v742 = vmul.f32 %v535, 0.2
      %v743 = vmul.f32 %v538, 0.2
      %v744 = vmul.f32 %v540, 0.2
      %v745 = vmul.f32 %v543, 0.2
      %v746 = vmul.f32 %v545, 0.2
      %v747 = vmul.f32 %v548, 0.2
      %v748 = vmul.f32 %v550, 0.2
      %v749 = vmul.f32 %v553, 0.2
      %v750 = vmul.f32 %v555, 0.2
      %v751 = vmul.f32 %v558, 0.2
      %v752 = vmul.f32 %v560, 0.2
      %v753 = vmul.f32 %v563, 0.2
      %v754 = vmul.f32 %v565, 0.2
      %v755 = vmul.f32 %v568, 0.2
      %v756 = vmul.f32 %v570, 0.2
      %v757 = vmul.f32 %v573, 0.2
      %v758 = vmul.f32 %v575, 0.2
      %v759 = vmul.f32 %v578, 0.2
      %v760 = vmul.f32 %v580, 0.2
      %v761 = vmul.f32 %v583, 0.2
      %v762 = vmul.f32 %v585, 0.2
      %v763 = vmul.f32 %v588, 0.2
      %v764 = vmul.f32 %v590, 0.2
      %v765 = vmul.f32 %v593, 0.2
      %v766 = vmul.f32 %v595, 0.2
      %v767 = vmul.f32 %v598, 0.2
      %v768 = vmul.f32 %v600, 0.2
      %v769 = vmul.f32 %v603, 0.2
      %v770 = vmul.f32 %v605, 0.2
      %v771 = vmul.f32 %v608, 0.2
      %v772 = vmul.f32 %v610, 0.2
      %v773 = vmul.f32 %v613, 0.2
      %v774 = vmul.f32 %v615, 0.2
      %v775 = vmul.f32 %v618, 0.2
      %v776 = vmul.f32 %v620, 0.2
      %v777 = vmul.f32 %v623, 0.2
      %v778 = vmul.f32 %v625, 0.2
      %v779 = vmul.f32 %v628, 0.2
      %v780 = vmul.f32 %v630, 0.2
      %v781 = vmul.f32 %v633, 0.2
      %v782 = vmul.f32 %v635, 0.2
      %v783 = vmul.f32 %v638, 0.2
      %v784 = vmul.f32 %v640, 0.2
      %v785 = vmul.f32 %v643, 0.2
      %v786 = vmul.f32 %v645, 0.2
      %v787 = vmul.f32 %v648, 0.2
      %v788 = vmul.f32 %v650, 0.2
      %v789 = vmul.f32 %v653, 0.2
      %v790 = vmul.f32 %v655, 0.2
      %v791 = vmul.f32 %v658, 0.2
      %v792 = vmul.f32 %v660, 0.2
      %v793 = vmul.f32 %v663, 0.2
      %v794 = vmul.f32 %v665, 0.2
      %v795 = vsel %vm667, %v508, %v731
      %v796 = vsel %vm668, %v510, %v732
      %v797 = vsel %vm669, %v513, %v733
      %v798 = vsel %vm670, %v515, %v734
      %v799 = vsel %vm671, %v518, %v735
      %v800 = vsel %vm672, %v520, %v736
      %v801 = vsel %vm673, %v523, %v737
      %v802 = vsel %vm674, %v525, %v738
      %v803 = vsel %vm675, %v528, %v739
      %v804 = vsel %vm676, %v530, %v740
      %v805 = vsel %vm677, %v533, %v741
      %v806 = vsel %vm678, %v535, %v742
      %v807 = vsel %vm679, %v538, %v743
      %v808 = vsel %vm680, %v540, %v744
      %v809 = vsel %vm681, %v543, %v745
      %v810 = vsel %vm682, %v545, %v746
      %v811 = vsel %vm683, %v548, %v747
      %v812 = vsel %vm684, %v550, %v748
      %v813 = vsel %vm685, %v553, %v749
      %v814 = vsel %vm686, %v555, %v750
      %v815 = vsel %vm687, %v558, %v751
      %v816 = vsel %vm688, %v560, %v752
      %v817 = vsel %vm689, %v563, %v753
      %v818 = vsel %vm690, %v565, %v754
      %v819 = vsel %vm691, %v568, %v755
      %v820 = vsel %vm692, %v570, %v756
      %v821 = vsel %vm693, %v573, %v757
      %v822 = vsel %vm694, %v575, %v758
      %v823 = vsel %vm695, %v578, %v759
      %v824 = vsel %vm696, %v580, %v760
      %v825 = vsel %vm697, %v583, %v761
      %v826 = vsel %vm698, %v585, %v762
      %v827 = vsel %vm699, %v588, %v763
      %v828 = vsel %vm700, %v590, %v764
      %v829 = vsel %vm701, %v593, %v765
      %v830 = vsel %vm702, %v595, %v766
      %v831 = vsel %vm703, %v598, %v767
      %v832 = vsel %vm704, %v600, %v768
      %v833 = vsel %vm705, %v603, %v769
      %v834 = vsel %vm706, %v605, %v770
      %v835 = vsel %vm707, %v608, %v771
      %v836 = vsel %vm708, %v610, %v772
      %v837 = vsel %vm709, %v613, %v773
      %v838 = vsel %vm710, %v615, %v774
      %v839 = vsel %vm711, %v618, %v775
      %v840 = vsel %vm712, %v620, %v776
      %v841 = vsel %vm713, %v623, %v777
      %v842 = vsel %vm714, %v625, %v778
      %v843 = vsel %vm715, %v628, %v779
      %v844 = vsel %vm716, %v630, %v780
      %v845 = vsel %vm717, %v633, %v781
      %v846 = vsel %vm718, %v635, %v782
      %v847 = vsel %vm719, %v638, %v783
      %v848 = vsel %vm720, %v640, %v784
      %v849 = vsel %vm721, %v643, %v785
      %v850 = vsel %vm722, %v645, %v786
      %v851 = vsel %vm723, %v648, %v787
      %v852 = vsel %vm724, %v650, %v788
      %v853 = vsel %vm725, %v653, %v789
      %v854 = vsel %vm726, %v655, %v790
      %v855 = vsel %vm727, %v658, %v791
      %v856 = vsel %vm728, %v660, %v792
      %v857 = vsel %vm729, %v663, %v793
      %v858 = vsel %vm730, %v665, %v794
      %859 = vst [vmem:[%s172] sm:$0xff] %v795
      %860 = vst [vmem:[%s172 + $0x8] sm:$0xff] %v796
      %861 = vst [vmem:[%s172 + $0x10] sm:$0xff] %v797
      %862 = vst [vmem:[%s172 + $0x18] sm:$0xff] %v798
      %863 = vst [vmem:[%s172 + $0x20] sm:$0xff] %v799
      %864 = vst [vmem:[%s172 + $0x28] sm:$0xff] %v800
      %865 = vst [vmem:[%s172 + $0x30] sm:$0xff] %v801
      %866 = vst [vmem:[%s172 + $0x38] sm:$0xff] %v802
      %867 = vst [vmem:[%s172 + $0x40] sm:$0xff] %v803
      %868 = vst [vmem:[%s172 + $0x48] sm:$0xff] %v804
      %869 = vst [vmem:[%s172 + $0x50] sm:$0xff] %v805
      %870 = vst [vmem:[%s172 + $0x58] sm:$0xff] %v806
      %871 = vst [vmem:[%s172 + $0x60] sm:$0xff] %v807
      %872 = vst [vmem:[%s172 + $0x68] sm:$0xff] %v808
      %873 = vst [vmem:[%s172 + $0x70] sm:$0xff] %v809
      %874 = vst [vmem:[%s172 + $0x78] sm:$0xff] %v810
      %875 = vst [vmem:[%s172 + $0x80] sm:$0xff] %v811
      %876 = vst [vmem:[%s172 + $0x88] sm:$0xff] %v812
      %877 = vst [vmem:[%s172 + $0x90] sm:$0xff] %v813
      %878 = vst [vmem:[%s172 + $0x98] sm:$0xff] %v814
      %879 = vst [vmem:[%s172 + $0xa0] sm:$0xff] %v815
      %880 = vst [vmem:[%s172 + $0xa8] sm:$0xff] %v816
      %881 = vst [vmem:[%s172 + $0xb0] sm:$0xff] %v817
      %882 = vst [vmem:[%s172 + $0xb8] sm:$0xff] %v818
      %883 = vst [vmem:[%s172 + $0xc0] sm:$0xff] %v819
      %884 = vst [vmem:[%s172 + $0xc8] sm:$0xff] %v820
      %885 = vst [vmem:[%s172 + $0xd0] sm:$0xff] %v821
      %886 = vst [vmem:[%s172 + $0xd8] sm:$0xff] %v822
      %887 = vst [vmem:[%s172 + $0xe0] sm:$0xff] %v823
      %888 = vst [vmem:[%s172 + $0xe8] sm:$0xff] %v824
      %889 = vst [vmem:[%s172 + $0xf0] sm:$0xff] %v825
      %890 = vst [vmem:[%s172 + $0xf8] sm:$0xff] %v826
      %891 = vst [vmem:[%s172 + $0x100] sm:$0xff] %v827
      %892 = vst [vmem:[%s172 + $0x108] sm:$0xff] %v828
      %893 = vst [vmem:[%s172 + $0x110] sm:$0xff] %v829
      %894 = vst [vmem:[%s172 + $0x118] sm:$0xff] %v830
      %895 = vst [vmem:[%s172 + $0x120] sm:$0xff] %v831
      %896 = vst [vmem:[%s172 + $0x128] sm:$0xff] %v832
      %897 = vst [vmem:[%s172 + $0x130] sm:$0xff] %v833
      %898 = vst [vmem:[%s172 + $0x138] sm:$0xff] %v834
      %899 = vst [vmem:[%s172 + $0x140] sm:$0xff] %v835
      %900 = vst [vmem:[%s172 + $0x148] sm:$0xff] %v836
      %901 = vst [vmem:[%s172 + $0x150] sm:$0xff] %v837
      %902 = vst [vmem:[%s172 + $0x158] sm:$0xff] %v838
      %903 = vst [vmem:[%s172 + $0x160] sm:$0xff] %v839
      %904 = vst [vmem:[%s172 + $0x168] sm:$0xff] %v840
      %905 = vst [vmem:[%s172 + $0x170] sm:$0xff] %v841
      %906 = vst [vmem:[%s172 + $0x178] sm:$0xff] %v842
      %907 = vst [vmem:[%s172 + $0x180] sm:$0xff] %v843
      %908 = vst [vmem:[%s172 + $0x188] sm:$0xff] %v844
      %909 = vst [vmem:[%s172 + $0x190] sm:$0xff] %v845
      %910 = vst [vmem:[%s172 + $0x198] sm:$0xff] %v846
      %911 = vst [vmem:[%s172 + $0x1a0] sm:$0xff] %v847
      %912 = vst [vmem:[%s172 + $0x1a8] sm:$0xff] %v848
      %913 = vst [vmem:[%s172 + $0x1b0] sm:$0xff] %v849
      %914 = vst [vmem:[%s172 + $0x1b8] sm:$0xff] %v850
      %915 = vst [vmem:[%s172 + $0x1c0] sm:$0xff] %v851
      %916 = vst [vmem:[%s172 + $0x1c8] sm:$0xff] %v852
      %917 = vst [vmem:[%s172 + $0x1d0] sm:$0xff] %v853
      %918 = vst [vmem:[%s172 + $0x1d8] sm:$0xff] %v854
      %919 = vst [vmem:[%s172 + $0x1e0] sm:$0xff] %v855
      %920 = vst [vmem:[%s172 + $0x1e8] sm:$0xff] %v856
      %921 = vst [vmem:[%s172 + $0x1f0] sm:$0xff] %v857
      %922 = vst [vmem:[%s172 + $0x1f8] sm:$0xff] %v858
      %s923 = smul.u32 64, %s14
      %p924 = scmp.lt.s32.totalorder %s923, 255
      %s925 = scalar_select %p924, %s923, 255
      %s926 = smul.addr %s925, 8
      %s927 = scalar_lea.vmem %s3, %s926
      // Predicated region
      $region33: #{discriminator_forward.5} parent=31 // pred_check
        %p928 = pneg %p100
      $region34: #{discriminator_forward.5} parent=31 // pred_check_branch
        %930 = sbr.rel (%p928) target = $region36
      $region35: #{discriminator_forward.5} parent=31 // pred_region
        %s931 = smul.u32 64, %s14
      $region36: #{discriminator_forward.5} parent=31 // pred_fallthru
        _
    $region32: #{discriminator_forward.5} parent=5 // pred_fallthru
      _
    %p932 = scmp.le.s32.totalorder 2, %s9
    // Predicated region
    $region37: #{discriminator_forward.5} parent=5 // pred_check
      %p933 = pneg %p932
    $region38: #{discriminator_forward.5} parent=5 // pred_check_branch
      %935 = sbr.rel (%p933) target = $region40
    $region39: #{discriminator_forward.5} parent=5 // pred_region
      %s936 = ssub.s32 %s9, 2
      // Predicated region
      $region41: #{discriminator_forward.5} parent=39 // pred_check
        %p937 = pneg %p106
      $region42: #{discriminator_forward.5} parent=39 // pred_check_branch
        %939 = sbr.rel (%p937) target = $region44
      $region43: #{discriminator_forward.5} parent=39 // pred_region
        %s940 = smul.u32 64, %s15
        %p941 = scmp.lt.s32.totalorder %s940, 255
        %s942 = scalar_select %p941, %s940, 255
        %s943 = smul.addr %s942, 8
        %s944 = scalar_lea.vmem %s3, %s943
      $region44: #{discriminator_forward.5} parent=39 // pred_fallthru
        _
    $region40: #{discriminator_forward.5} parent=5 // pred_fallthru
      _
  $region6: #{discriminator_forward.5} parent=0 // loop_footer
    %s13 = sadd.s32 1, %s9
  $region7: #{discriminator_forward.5} parent=0 // loop_footer_branch
    %8 = sbr.rel target = $region3
  $region8: #{discriminator_forward.5} parent=0 // loop_exit
    _

// kernel: discriminator_forward.6
$region0: #{discriminator_forward.6}
  #allocation0 [shape = 'u32[]', space=smem, size = 0x4, offset = 0x4, fixed_abs, tag = 'smem constant byte address 0x4 - core index']
  #allocation1 [shape = 'u32[72,128]{1,0:T(1,128)}', space=vmem, size = 0x9000, scoped, tag = 'internal scratch']
  #allocation2 [shape = 'f32[2,128]{1,0:T(2,128)}', space=vmem, size = 0x400, scoped, tag = 'scratch operand']
  %s0 = inlined_call_operand.vmem [shape: bf16[512,128], index: 0, kind: input, shape index: {}]
  %s1 = inlined_call_operand.vmem [shape: bf16[128,128], index: 1, kind: input, shape index: {}]
  %s2 = inlined_call_operand.vmem [shape: f32[1,128], index: 2, kind: input, shape index: {}]
  %s3 = inlined_call_operand.vmem [shape: f32[1,128], index: 3, kind: input, shape index: {}]
  %s4 = inlined_call_operand.vmem [shape: f32[512,128], index: 4, kind: output, shape index: {}]
  %s5 = sld [smem:[#allocation0]]
  $region61: #{discriminator_forward.6} parent=0
    _
  %s7 = ssub.s32 1, %s5
  %s8 = scalar_select 0, %s7, %s5
  loop: start=0, step=1, limit=4
  $region2: #{discriminator_forward.6} parent=0 // loop_pre_header
    _
  $region3: #{discriminator_forward.6} parent=0 // loop_header
    %s10 = sphi 0, %s14
    %p11 = scmp.ge.s32.totalorder %s10, 4
    %s17 = sphi 0, %s29
    %s18 = sphi 0, %s25
    %s19 = sphi 0, %s17
    %s20 = sphi 0, %s18
    %s21 = sphi 0, %s19
    %s22 = sphi 0, %s20
    %s32 = sphi 0, %s34
    %s35 = sphi 0, %s32
    %s36 = sphi 0, %s35
    %s52 = sphi 0, %s36
    %s56 = sphi 0, %s56
    %s58 = sphi 0, %s56
    %s59 = sphi 0, %s58
    %s73 = sphi 0, %s59
    %s77 = sphi 0, %s77
    %s79 = sphi 0, %s77
    %s80 = sphi 0, %s79
    %s94 = sphi 0, %s80
    %s98 = sphi 0, %s98
    %s100 = sphi 0, %s98
    %s101 = sphi 0, %s100
    %s115 = sphi 0, %s101
    %s121 = sphi 0, %s123
    %s124 = sphi 0, %s121
    %s125 = sphi 0, %s124
    %s141 = sphi 0, %s125
  $region4: #{discriminator_forward.6} parent=0 // loop_header_branch
    %13 = sbr.rel (%p11) target = $region8
  $region5: #{discriminator_forward.6} parent=0 // loop_body
    %s15 = ssub.s32 %s10, 1
    %s16 = ssub.s32 %s10, 2
    %s23 = sadd.s32 1, %s18
    %p24 = scmp.ge.s32.totalorder %s23, 1
    %s25 = scalar_select %p24, 0, %s23
    %s26 = sadd.s32 1, %s17
    %s27 = scalar_select %p24, %s26, %s17
    %p28 = scmp.ge.s32.totalorder %s27, 2
    %s29 = scalar_select %p28, 0, %s27
    %s30 = ssub.s32 %s18, %s25
    %p31 = scmp.eq.s32.totalorder %s30, 0
    %s33 = sadd.s32 %s32, 1
    %s34 = scalar_select %p31, %s32, %s33
    %p37 = pneg %p31
    %p38 = scmp.eq.s32.totalorder %s10, 1
    %p39 = por %p37, %p38
    %p40 = scmp.ne.s32.totalorder %s32, %s35
    %p41 = scmp.eq.s32.totalorder %s10, 0
    %p42 = por %p40, %p41
    %p43 = scmp.ne.s32.totalorder %s32, %s35
    %p44 = scmp.eq.s32.totalorder %s15, 1
    %p45 = por %p43, %p44
    %p46 = scmp.ne.s32.totalorder %s35, %s36
    %p47 = scmp.eq.s32.totalorder %s15, 0
    %p48 = por %p46, %p47
    %p49 = scmp.ne.s32.totalorder %s35, %s36
    %p50 = scmp.eq.s32.totalorder %s16, 1
    %p51 = por %p49, %p50
    %p53 = scmp.ne.s32.totalorder %s36, %s52
    %p54 = scmp.eq.s32.totalorder %s16, 0
    %p55 = por %p53, %p54
    %s57 = sadd.s32 %s56, 1
    %p60 = scmp.eq.s32.totalorder %s10, 1
    %p61 = scmp.ne.s32.totalorder %s56, %s58
    %p62 = scmp.eq.s32.totalorder %s10, 0
    %p63 = por %p61, %p62
    %p64 = scmp.ne.s32.totalorder %s56, %s58
    %p65 = scmp.eq.s32.totalorder %s15, 1
    %p66 = por %p64, %p65
    %p67 = scmp.ne.s32.totalorder %s58, %s59
    %p68 = scmp.eq.s32.totalorder %s15, 0
    %p69 = por %p67, %p68
    %p70 = scmp.ne.s32.totalorder %s58, %s59
    %p71 = scmp.eq.s32.totalorder %s16, 1
    %p72 = por %p70, %p71
    %p74 = scmp.ne.s32.totalorder %s59, %s73
    %p75 = scmp.eq.s32.totalorder %s16, 0
    %p76 = por %p74, %p75
    %s78 = sadd.s32 %s77, 1
    %p81 = scmp.eq.s32.totalorder %s10, 1
    %p82 = scmp.ne.s32.totalorder %s77, %s79
    %p83 = scmp.eq.s32.totalorder %s10, 0
    %p84 = por %p82, %p83
    %p85 = scmp.ne.s32.totalorder %s77, %s79
    %p86 = scmp.eq.s32.totalorder %s15, 1
    %p87 = por %p85, %p86
    %p88 = scmp.ne.s32.totalorder %s79, %s80
    %p89 = scmp.eq.s32.totalorder %s15, 0
    %p90 = por %p88, %p89
    %p91 = scmp.ne.s32.totalorder %s79, %s80
    %p92 = scmp.eq.s32.totalorder %s16, 1
    %p93 = por %p91, %p92
    %p95 = scmp.ne.s32.totalorder %s80, %s94
    %p96 = scmp.eq.s32.totalorder %s16, 0
    %p97 = por %p95, %p96
    %s99 = sadd.s32 %s98, 1
    %p102 = scmp.eq.s32.totalorder %s10, 1
    %p103 = scmp.ne.s32.totalorder %s98, %s100
    %p104 = scmp.eq.s32.totalorder %s10, 0
    %p105 = por %p103, %p104
    %p106 = scmp.ne.s32.totalorder %s98, %s100
    %p107 = scmp.eq.s32.totalorder %s15, 1
    %p108 = por %p106, %p107
    %p109 = scmp.ne.s32.totalorder %s100, %s101
    %p110 = scmp.eq.s32.totalorder %s15, 0
    %p111 = por %p109, %p110
    %p112 = scmp.ne.s32.totalorder %s100, %s101
    %p113 = scmp.eq.s32.totalorder %s16, 1
    %p114 = por %p112, %p113
    %p116 = scmp.ne.s32.totalorder %s101, %s115
    %p117 = scmp.eq.s32.totalorder %s16, 0
    %p118 = por %p116, %p117
    %s119 = ssub.s32 %s18, %s25
    %p120 = scmp.eq.s32.totalorder %s119, 0
    %s122 = sadd.s32 %s121, 1
    %s123 = scalar_select %p120, %s121, %s122
    %p126 = pneg %p120
    %p127 = scmp.eq.s32.totalorder %s10, 1
    %p128 = por %p126, %p127
    %p129 = scmp.ne.s32.totalorder %s121, %s124
    %p130 = scmp.eq.s32.totalorder %s10, 0
    %p131 = por %p129, %p130
    %p132 = scmp.ne.s32.totalorder %s121, %s124
    %p133 = scmp.eq.s32.totalorder %s15, 1
    %p134 = por %p132, %p133
    %p135 = scmp.ne.s32.totalorder %s124, %s125
    %p136 = scmp.eq.s32.totalorder %s15, 0
    %p137 = por %p135, %p136
    %p138 = scmp.ne.s32.totalorder %s124, %s125
    %p139 = scmp.eq.s32.totalorder %s16, 1
    %p140 = por %p138, %p139
    %p142 = scmp.ne.s32.totalorder %s125, %s141
    %p143 = scmp.eq.s32.totalorder %s16, 0
    %p144 = por %p142, %p143
    %p145 = scmp.le.s32.totalorder 1, %s10
    %p146 = scmp.lt.s32.totalorder %s10, 3
    %p147 = pnand %p145, %p146
    %p148 = pneg %p147
    // Predicated region
    $region9: #{discriminator_forward.6} parent=5 // pred_check
      _
    $region10: #{discriminator_forward.6} parent=5 // pred_check_branch
      %150 = sbr.rel (%p147) target = $region12
    $region11: #{discriminator_forward.6} parent=5 // pred_region
      %s151 = ssub.s32 %s10, 1
      // Predicated region
      $region13: #{discriminator_forward.6} parent=11 // pred_check
        %p152 = pneg %p48
      $region14: #{discriminator_forward.6} parent=11 // pred_check_branch
        %154 = sbr.rel (%p152) target = $region16
      $region15: #{discriminator_forward.6} parent=11 // pred_region
        %s155 = smul.u32 64, %s20
        %p156 = scmp.lt.s32.totalorder %s155, 63
        %s157 = scalar_select %p156, %s155, 63
        %s158 = smul.addr %s157, 4
        %s159 = scalar_lea.vmem %s0, %s158
        %s160 = smul.u32 64, %s20
      $region16: #{discriminator_forward.6} parent=11 // pred_fallthru
        _
      // Predicated region
      $region17: #{discriminator_forward.6} parent=11 // pred_check
        %p161 = pneg %p69
      $region18: #{discriminator_forward.6} parent=11 // pred_check_branch
        %163 = sbr.rel (%p161) target = $region20
      $region19: #{discriminator_forward.6} parent=11 // pred_region
        _
      $region20: #{discriminator_forward.6} parent=11 // pred_fallthru
        _
      // Predicated region
      $region21: #{discriminator_forward.6} parent=11 // pred_check
        %p164 = pneg %p90
      $region22: #{discriminator_forward.6} parent=11 // pred_check_branch
        %166 = sbr.rel (%p164) target = $region24
      $region23: #{discriminator_forward.6} parent=11 // pred_region
        _
      $region24: #{discriminator_forward.6} parent=11 // pred_fallthru
        _
      // Predicated region
      $region25: #{discriminator_forward.6} parent=11 // pred_check
        %p167 = pneg %p111
      $region26: #{discriminator_forward.6} parent=11 // pred_check_branch
        %169 = sbr.rel (%p167) target = $region28
      $region27: #{discriminator_forward.6} parent=11 // pred_region
        _
      $region28: #{discriminator_forward.6} parent=11 // pred_fallthru
        _
    $region12: #{discriminator_forward.6} parent=5 // pred_fallthru
      _
    %p170 = scmp.lt.s32.totalorder %s10, 2
    // Predicated region
    $region29: #{discriminator_forward.6} parent=5 // pred_check
      %p171 = pneg %p170
    $region30: #{discriminator_forward.6} parent=5 // pred_check_branch
      %173 = sbr.rel (%p171) target = $region32
    $region31: #{discriminator_forward.6} parent=5 // pred_region
      _
    $region32: #{discriminator_forward.6} parent=5 // pred_fallthru
      _
    %p174 = scmp.le.s32.totalorder 1, %s10
    %p175 = scmp.lt.s32.totalorder %s10, 3
    %p176 = pnand %p174, %p175
    %p177 = pneg %p176
    // Predicated region
    $region33: #{discriminator_forward.6} parent=5 // pred_check
      _
    $region34: #{discriminator_forward.6} parent=5 // pred_check_branch
      %179 = sbr.rel (%p176) target = $region36
    $region35: #{discriminator_forward.6} parent=5 // pred_region
      %s180 = ssub.s32 %s10, 1
      %s181 = smul.u32 64, %s20
      %p182 = scmp.lt.s32.totalorder %s181, 63
      %s183 = scalar_select %p182, %s181, 63
      %s184 = smul.addr %s183, 4
      %s185 = scalar_lea.vmem %s0, %s184
      %p186 = pneg %p48
      %p187 = pneg %p45
      %p188 = pneg %p69
      %p189 = pneg %p66
      %p190 = pneg %p90
      %p191 = pneg %p87
      %p192 = pneg %p111
      %p193 = pneg %p108
      %p194 = pneg %p137
      %p195 = pneg %p134
      %s196 = smul.u32 64, %s20
      %p197 = scmp.lt.s32.totalorder %s196, 63
      %s198 = scalar_select %p197, %s196, 63
      %s199 = smul.addr %s198, 8
      %s200 = scalar_lea.vmem %s4, %s199
      %s201 = smul.u32 64, %s20
      %p202 = scmp.lt.s32.totalorder %s201, 63
      %s203 = scalar_select %p202, %s201, 63
      %s204 = smul.addr %s203, 4
      %s205 = scalar_lea.vmem %s0, %s204
      %s206 = smul.u32 64, %s20
      %s207 = smul.u32 64, %s20
      %p208 = scmp.lt.s32.totalorder %s207, 63
      %s209 = scalar_select %p208, %s207, 63
      %s210 = smul.addr %s209, 8
      %s211 = scalar_lea.vmem %s4, %s210
      %s212 = smul.u32 64, %s20
      %p213 = scmp.eq.s32.totalorder %s19, 0
      %p214 = scmp.eq.s32.totalorder %s20, 0
      %p215 = pnand %p213, %p214
      %p216 = pneg %p215
      // Predicated region
      $region37: #{discriminator_forward.6} parent=35 // pred_check
        _
      $region38: #{discriminator_forward.6} parent=35 // pred_check_branch
        %218 = sbr.rel (%p215) target = $region40
      $region39: #{discriminator_forward.6} parent=35 // pred_region
        %219 = vst [vmem:[#allocation2] sm:$0x3] 0.0
      $region40: #{discriminator_forward.6} parent=35 // pred_fallthru
        _
      %v220 = vld [vmem:[%s205] sm:$0xf]
      %v221 = vld [vmem:[%s205 + $0x4] sm:$0xf]
      %v222 = vld [vmem:[%s205 + $0x8] sm:$0xf]
      %v223 = vld [vmem:[%s205 + $0xc] sm:$0xf]
      %v224 = vld [vmem:[%s205 + $0x10] sm:$0xf]
      %v225 = vld [vmem:[%s205 + $0x14] sm:$0xf]
      %v226 = vld [vmem:[%s205 + $0x18] sm:$0xf]
      %v227 = vld [vmem:[%s205 + $0x1c] sm:$0xf]
      %v228 = vld [vmem:[%s205 + $0x20] sm:$0xf]
      %v229 = vld [vmem:[%s205 + $0x24] sm:$0xf]
      %v230 = vld [vmem:[%s205 + $0x28] sm:$0xf]
      %v231 = vld [vmem:[%s205 + $0x2c] sm:$0xf]
      %v232 = vld [vmem:[%s205 + $0x30] sm:$0xf]
      %v233 = vld [vmem:[%s205 + $0x34] sm:$0xf]
      %v234 = vld [vmem:[%s205 + $0x38] sm:$0xf]
      %v235 = vld [vmem:[%s205 + $0x3c] sm:$0xf]
      %v236 = vld [vmem:[%s205 + $0x40] sm:$0xf]
      %v237 = vld [vmem:[%s205 + $0x44] sm:$0xf]
      %v238 = vld [vmem:[%s205 + $0x48] sm:$0xf]
      %v239 = vld [vmem:[%s205 + $0x4c] sm:$0xf]
      %v240 = vld [vmem:[%s205 + $0x50] sm:$0xf]
      %v241 = vld [vmem:[%s205 + $0x54] sm:$0xf]
      %v242 = vld [vmem:[%s205 + $0x58] sm:$0xf]
      %v243 = vld [vmem:[%s205 + $0x5c] sm:$0xf]
      %v244 = vld [vmem:[%s205 + $0x60] sm:$0xf]
      %v245 = vld [vmem:[%s205 + $0x64] sm:$0xf]
      %v246 = vld [vmem:[%s205 + $0x68] sm:$0xf]
      %v247 = vld [vmem:[%s205 + $0x6c] sm:$0xf]
      %v248 = vld [vmem:[%s205 + $0x70] sm:$0xf]
      %v249 = vld [vmem:[%s205 + $0x74] sm:$0xf]
      %v250 = vld [vmem:[%s205 + $0x78] sm:$0xf]
      %v251 = vld [vmem:[%s205 + $0x7c] sm:$0xf]
      %v252 = vld [vmem:[%s205 + $0x80] sm:$0xf]
      %v253 = vld [vmem:[%s205 + $0x84] sm:$0xf]
      %v254 = vld [vmem:[%s205 + $0x88] sm:$0xf]
      %v255 = vld [vmem:[%s205 + $0x8c] sm:$0xf]
      %v256 = vld [vmem:[%s205 + $0x90] sm:$0xf]
      %v257 = vld [vmem:[%s205 + $0x94] sm:$0xf]
      %v258 = vld [vmem:[%s205 + $0x98] sm:$0xf]
      %v259 = vld [vmem:[%s205 + $0x9c] sm:$0xf]
      %v260 = vld [vmem:[%s205 + $0xa0] sm:$0xf]
      %v261 = vld [vmem:[%s205 + $0xa4] sm:$0xf]
      %v262 = vld [vmem:[%s205 + $0xa8] sm:$0xf]
      %v263 = vld [vmem:[%s205 + $0xac] sm:$0xf]
      %v264 = vld [vmem:[%s205 + $0xb0] sm:$0xf]
      %v265 = vld [vmem:[%s205 + $0xb4] sm:$0xf]
      %v266 = vld [vmem:[%s205 + $0xb8] sm:$0xf]
      %v267 = vld [vmem:[%s205 + $0xbc] sm:$0xf]
      %v268 = vld [vmem:[%s205 + $0xc0] sm:$0xf]
      %v269 = vld [vmem:[%s205 + $0xc4] sm:$0xf]
      %v270 = vld [vmem:[%s205 + $0xc8] sm:$0xf]
      %v271 = vld [vmem:[%s205 + $0xcc] sm:$0xf]
      %v272 = vld [vmem:[%s205 + $0xd0] sm:$0xf]
      %v273 = vld [vmem:[%s205 + $0xd4] sm:$0xf]
      %v274 = vld [vmem:[%s205 + $0xd8] sm:$0xf]
      %v275 = vld [vmem:[%s205 + $0xdc] sm:$0xf]
      %v276 = vld [vmem:[%s205 + $0xe0] sm:$0xf]
      %v277 = vld [vmem:[%s205 + $0xe4] sm:$0xf]
      %v278 = vld [vmem:[%s205 + $0xe8] sm:$0xf]
      %v279 = vld [vmem:[%s205 + $0xec] sm:$0xf]
      %v280 = vld [vmem:[%s205 + $0xf0] sm:$0xf]
      %v281 = vld [vmem:[%s205 + $0xf4] sm:$0xf]
      %v282 = vld [vmem:[%s205 + $0xf8] sm:$0xf]
      %v283 = vld [vmem:[%s205 + $0xfc] sm:$0xf]
      %v284 = vld [vmem:[%s1] sm:$0xf]
      %v285 = vld [vmem:[%s1 + $0x4] sm:$0xf]
      %v286 = vld [vmem:[%s1 + $0x8] sm:$0xf]
      %v287 = vld [vmem:[%s1 + $0xc] sm:$0xf]
      %v288 = vld [vmem:[%s1 + $0x10] sm:$0xf]
      %v289 = vld [vmem:[%s1 + $0x14] sm:$0xf]
      %v290 = vld [vmem:[%s1 + $0x18] sm:$0xf]
      %v291 = vld [vmem:[%s1 + $0x1c] sm:$0xf]
      %v292 = vld [vmem:[%s1 + $0x20] sm:$0xf]
      %v293 = vld [vmem:[%s1 + $0x24] sm:$0xf]
      %v294 = vld [vmem:[%s1 + $0x28] sm:$0xf]
      %v295 = vld [vmem:[%s1 + $0x2c] sm:$0xf]
      %v296 = vld [vmem:[%s1 + $0x30] sm:$0xf]
      %v297 = vld [vmem:[%s1 + $0x34] sm:$0xf]
      %v298 = vld [vmem:[%s1 + $0x38] sm:$0xf]
      %v299 = vld [vmem:[%s1 + $0x3c] sm:$0xf]
      %v364 = vunpack.c.l.b16 %v220
      %v365 = vunpack.c.l.b16 %v221
      %v366 = vunpack.c.l.b16 %v222
      %v367 = vunpack.c.l.b16 %v223
      %v368 = vunpack.c.l.b16 %v224
      %v369 = vunpack.c.l.b16 %v225
      %v370 = vunpack.c.l.b16 %v226
      %v371 = vunpack.c.l.b16 %v227
      %v372 = vunpack.c.l.b16 %v228
      %v373 = vunpack.c.l.b16 %v229
      %v374 = vunpack.c.l.b16 %v230
      %v375 = vunpack.c.l.b16 %v231
      %v376 = vunpack.c.l.b16 %v232
      %v377 = vunpack.c.l.b16 %v233
      %v378 = vunpack.c.l.b16 %v234
      %v379 = vunpack.c.l.b16 %v235
      %v380 = vunpack.c.l.b16 %v236
      %v381 = vunpack.c.l.b16 %v237
      %v382 = vunpack.c.l.b16 %v238
      %v383 = vunpack.c.l.b16 %v239
      %v384 = vunpack.c.l.b16 %v240
      %v385 = vunpack.c.l.b16 %v241
      %v386 = vunpack.c.l.b16 %v242
      %v387 = vunpack.c.l.b16 %v243
      %v388 = vunpack.c.l.b16 %v244
      %v389 = vunpack.c.l.b16 %v245
      %v390 = vunpack.c.l.b16 %v246
      %v391 = vunpack.c.l.b16 %v247
      %v392 = vunpack.c.l.b16 %v248
      %v393 = vunpack.c.l.b16 %v249
      %v394 = vunpack.c.l.b16 %v250
      %v395 = vunpack.c.l.b16 %v251
      %v396 = vunpack.c.l.b16 %v252
      %v397 = vunpack.c.l.b16 %v253
      %v398 = vunpack.c.l.b16 %v254
      %v399 = vunpack.c.l.b16 %v255
      %v400 = vunpack.c.l.b16 %v256
      %v401 = vunpack.c.l.b16 %v257
      %v402 = vunpack.c.l.b16 %v258
      %v403 = vunpack.c.l.b16 %v259
      %v404 = vunpack.c.l.b16 %v260
      %v405 = vunpack.c.l.b16 %v261
      %v406 = vunpack.c.l.b16 %v262
      %v407 = vunpack.c.l.b16 %v263
      %v408 = vunpack.c.l.b16 %v264
      %v409 = vunpack.c.l.b16 %v265
      %v410 = vunpack.c.l.b16 %v266
      %v411 = vunpack.c.l.b16 %v267
      %v412 = vunpack.c.l.b16 %v268
      %v413 = vunpack.c.l.b16 %v269
      %v414 = vunpack.c.l.b16 %v270
      %v415 = vunpack.c.l.b16 %v271
      %v416 = vunpack.c.l.b16 %v272
      %v417 = vunpack.c.l.b16 %v273
      %v418 = vunpack.c.l.b16 %v274
      %v419 = vunpack.c.l.b16 %v275
      %v420 = vunpack.c.l.b16 %v276
      %v421 = vunpack.c.l.b16 %v277
      %v422 = vunpack.c.l.b16 %v278
      %v423 = vunpack.c.l.b16 %v279
      %v424 = vunpack.c.l.b16 %v280
      %v425 = vunpack.c.l.b16 %v281
      %v426 = vunpack.c.l.b16 %v282
      %v427 = vunpack.c.l.b16 %v283
      %v428 = vpack.c.b16 %v365, %v364
      %v429 = vpack.c.b16 %v367, %v366
      %v430 = vpack.c.b16 %v369, %v368
      %v431 = vpack.c.b16 %v371, %v370
      %v432 = vpack.c.b16 %v373, %v372
      %v433 = vpack.c.b16 %v375, %v374
      %v434 = vpack.c.b16 %v377, %v376
      %v435 = vpack.c.b16 %v379, %v378
      %v436 = vpack.c.b16 %v381, %v380
      %v437 = vpack.c.b16 %v383, %v382
      %v438 = vpack.c.b16 %v385, %v384
      %v439 = vpack.c.b16 %v387, %v386
      %v440 = vpack.c.b16 %v389, %v388
      %v441 = vpack.c.b16 %v391, %v390
      %v442 = vpack.c.b16 %v393, %v392
      %v443 = vpack.c.b16 %v395, %v394
      %v444 = vpack.c.b16 %v397, %v396
      %v445 = vpack.c.b16 %v399, %v398
      %v446 = vpack.c.b16 %v401, %v400
      %v447 = vpack.c.b16 %v403, %v402
      %v448 = vpack.c.b16 %v405, %v404
      %v449 = vpack.c.b16 %v407, %v406
      %v450 = vpack.c.b16 %v409, %v408
      %v451 = vpack.c.b16 %v411, %v410
      %v452 = vpack.c.b16 %v413, %v412
      %v453 = vpack.c.b16 %v415, %v414
      %v454 = vpack.c.b16 %v417, %v416
      %v455 = vpack.c.b16 %v419, %v418
      %v456 = vpack.c.b16 %v421, %v420
      %v457 = vpack.c.b16 %v423, %v422
      %v458 = vpack.c.b16 %v425, %v424
      %v459 = vpack.c.b16 %v427, %v426
      %v508 = vunpack.c.l.b16 %v284
      %v509 = vunpack.c.l.b16 %v285
      %v510 = vunpack.c.l.b16 %v286
      %v511 = vunpack.c.l.b16 %v287
      %v512 = vunpack.c.l.b16 %v288
      %v513 = vunpack.c.l.b16 %v289
      %v514 = vunpack.c.l.b16 %v290
      %v515 = vunpack.c.l.b16 %v291
      %v516 = vunpack.c.l.b16 %v292
      %v517 = vunpack.c.l.b16 %v293
      %v518 = vunpack.c.l.b16 %v294
      %v519 = vunpack.c.l.b16 %v295
      %v520 = vunpack.c.l.b16 %v296
      %v521 = vunpack.c.l.b16 %v297
      %v522 = vunpack.c.l.b16 %v298
      %v523 = vunpack.c.l.b16 %v299
      %v524 = vpack.c.b16 %v509, %v508
      %v525 = vpack.c.b16 %v511, %v510
      %v526 = vpack.c.b16 %v513, %v512
      %v527 = vpack.c.b16 %v515, %v514
      %v528 = vpack.c.b16 %v517, %v516
      %v529 = vpack.c.b16 %v519, %v518
      %v530 = vpack.c.b16 %v521, %v520
      %v531 = vpack.c.b16 %v523, %v522
      %540 = vmatpush.bf16.msra.mxu0 %v531
      %541 = vmatpush.bf16.msra.mxu0 %v530
      %542 = vmatpush.bf16.msra.mxu0 %v529
      %543 = vmatpush.bf16.msra.mxu0 %v528
      %544 = vmatpush.bf16.msra.mxu0 %v527
      %545 = vmatpush.bf16.msra.mxu0 %v526
      %546 = vmatpush.bf16.msra.mxu0 %v525
      %547 = vmatpush.bf16.msra.mxu0 %v524
      %548 = vmatmul.bf16.gmra.mxu0 %v428
      %v549 = vpop.f32.mrf.mxu0
      %v550 = vadd.f32 0.0, %v549
      %v551 = vpop.f32.mrf.mxu0
      %v552 = vadd.f32 0.0, %v551
      %553 = vmatmul.bf16.gmra.mxu0 %v429
      %v554 = vpop.f32.mrf.mxu0
      %v555 = vadd.f32 0.0, %v554
      %v556 = vpop.f32.mrf.mxu0
      %v557 = vadd.f32 0.0, %v556
      %558 = vmatmul.bf16.gmra.mxu0 %v430
      %v559 = vpop.f32.mrf.mxu0
      %v560 = vadd.f32 0.0, %v559
      %v561 = vpop.f32.mrf.mxu0
      %v562 = vadd.f32 0.0, %v561
      %563 = vmatmul.bf16.gmra.mxu0 %v431
      %v564 = vpop.f32.mrf.mxu0
      %v565 = vadd.f32 0.0, %v564
      %v566 = vpop.f32.mrf.mxu0
      %v567 = vadd.f32 0.0, %v566
      %568 = vmatmul.bf16.gmra.mxu0 %v432
      %v569 = vpop.f32.mrf.mxu0
      %v570 = vadd.f32 0.0, %v569
      %v571 = vpop.f32.mrf.mxu0
      %v572 = vadd.f32 0.0, %v571
      %573 = vmatmul.bf16.gmra.mxu0 %v433
      %v574 = vpop.f32.mrf.mxu0
      %v575 = vadd.f32 0.0, %v574
      %v576 = vpop.f32.mrf.mxu0
      %v577 = vadd.f32 0.0, %v576
      %578 = vmatmul.bf16.gmra.mxu0 %v434
      %v579 = vpop.f32.mrf.mxu0
      %v580 = vadd.f32 0.0, %v579
      %v581 = vpop.f32.mrf.mxu0
      %v582 = vadd.f32 0.0, %v581
      %583 = vmatmul.bf16.gmra.mxu0 %v435
      %v584 = vpop.f32.mrf.mxu0
      %v585 = vadd.f32 0.0, %v584
      %v586 = vpop.f32.mrf.mxu0
      %v587 = vadd.f32 0.0, %v586
      %588 = vmatmul.bf16.gmra.mxu0 %v436
      %v589 = vpop.f32.mrf.mxu0
      %v590 = vadd.f32 0.0, %v589
      %v591 = vpop.f32.mrf.mxu0
      %v592 = vadd.f32 0.0, %v591
      %593 = vmatmul.bf16.gmra.mxu0 %v437
      %v594 = vpop.f32.mrf.mxu0
      %v595 = vadd.f32 0.0, %v594
      %v596 = vpop.f32.mrf.mxu0
      %v597 = vadd.f32 0.0, %v596
      %598 = vmatmul.bf16.gmra.mxu0 %v438
      %v599 = vpop.f32.mrf.mxu0
      %v600 = vadd.f32 0.0, %v599
      %v601 = vpop.f32.mrf.mxu0
      %v602 = vadd.f32 0.0, %v601
      %603 = vmatmul.bf16.gmra.mxu0 %v439
      %v604 = vpop.f32.mrf.mxu0
      %v605 = vadd.f32 0.0, %v604
      %v606 = vpop.f32.mrf.mxu0
      %v607 = vadd.f32 0.0, %v606
      %608 = vmatmul.bf16.gmra.mxu0 %v440
      %v609 = vpop.f32.mrf.mxu0
      %v610 = vadd.f32 0.0, %v609
      %v611 = vpop.f32.mrf.mxu0
      %v612 = vadd.f32 0.0, %v611
      %613 = vmatmul.bf16.gmra.mxu0 %v441
      %v614 = vpop.f32.mrf.mxu0
      %v615 = vadd.f32 0.0, %v614
      %v616 = vpop.f32.mrf.mxu0
      %v617 = vadd.f32 0.0, %v616
      %618 = vmatmul.bf16.gmra.mxu0 %v442
      %v619 = vpop.f32.mrf.mxu0
      %v620 = vadd.f32 0.0, %v619
      %v621 = vpop.f32.mrf.mxu0
      %v622 = vadd.f32 0.0, %v621
      %623 = vmatmul.bf16.gmra.mxu0 %v443
      %v624 = vpop.f32.mrf.mxu0
      %v625 = vadd.f32 0.0, %v624
      %v626 = vpop.f32.mrf.mxu0
      %v627 = vadd.f32 0.0, %v626
      %628 = vmatmul.bf16.gmra.mxu0 %v444
      %v629 = vpop.f32.mrf.mxu0
      %v630 = vadd.f32 0.0, %v629
      %v631 = vpop.f32.mrf.mxu0
      %v632 = vadd.f32 0.0, %v631
      %633 = vmatmul.bf16.gmra.mxu0 %v445
      %v634 = vpop.f32.mrf.mxu0
      %v635 = vadd.f32 0.0, %v634
      %v636 = vpop.f32.mrf.mxu0
      %v637 = vadd.f32 0.0, %v636
      %638 = vmatmul.bf16.gmra.mxu0 %v446
      %v639 = vpop.f32.mrf.mxu0
      %v640 = vadd.f32 0.0, %v639
      %v641 = vpop.f32.mrf.mxu0
      %v642 = vadd.f32 0.0, %v641
      %643 = vmatmul.bf16.gmra.mxu0 %v447
      %v644 = vpop.f32.mrf.mxu0
      %v645 = vadd.f32 0.0, %v644
      %v646 = vpop.f32.mrf.mxu0
      %v647 = vadd.f32 0.0, %v646
      %648 = vmatmul.bf16.gmra.mxu0 %v448
      %v649 = vpop.f32.mrf.mxu0
      %v650 = vadd.f32 0.0, %v649
      %v651 = vpop.f32.mrf.mxu0
      %v652 = vadd.f32 0.0, %v651
      %653 = vmatmul.bf16.gmra.mxu0 %v449
      %v654 = vpop.f32.mrf.mxu0
      %v655 = vadd.f32 0.0, %v654
      %v656 = vpop.f32.mrf.mxu0
      %v657 = vadd.f32 0.0, %v656
      %658 = vmatmul.bf16.gmra.mxu0 %v450
      %v659 = vpop.f32.mrf.mxu0
      %v660 = vadd.f32 0.0, %v659
      %v661 = vpop.f32.mrf.mxu0
      %v662 = vadd.f32 0.0, %v661
      %663 = vmatmul.bf16.gmra.mxu0 %v451
      %v664 = vpop.f32.mrf.mxu0
      %v665 = vadd.f32 0.0, %v664
      %v666 = vpop.f32.mrf.mxu0
      %v667 = vadd.f32 0.0, %v666
      %668 = vmatmul.bf16.gmra.mxu0 %v452
      %v669 = vpop.f32.mrf.mxu0
      %v670 = vadd.f32 0.0, %v669
      %v671 = vpop.f32.mrf.mxu0
      %v672 = vadd.f32 0.0, %v671
      %673 = vmatmul.bf16.gmra.mxu0 %v453
      %v674 = vpop.f32.mrf.mxu0
      %v675 = vadd.f32 0.0, %v674
      %v676 = vpop.f32.mrf.mxu0
      %v677 = vadd.f32 0.0, %v676
      %678 = vmatmul.bf16.gmra.mxu0 %v454
      %v679 = vpop.f32.mrf.mxu0
      %v680 = vadd.f32 0.0, %v679
      %v681 = vpop.f32.mrf.mxu0
      %v682 = vadd.f32 0.0, %v681
      %683 = vmatmul.bf16.gmra.mxu0 %v455
      %v684 = vpop.f32.mrf.mxu0
      %v685 = vadd.f32 0.0, %v684
      %v686 = vpop.f32.mrf.mxu0
      %v687 = vadd.f32 0.0, %v686
      %688 = vmatmul.bf16.gmra.mxu0 %v456
      %v689 = vpop.f32.mrf.mxu0
      %v690 = vadd.f32 0.0, %v689
      %v691 = vpop.f32.mrf.mxu0
      %v692 = vadd.f32 0.0, %v691
      %693 = vmatmul.bf16.gmra.mxu0 %v457
      %v694 = vpop.f32.mrf.mxu0
      %v695 = vadd.f32 0.0, %v694
      %v696 = vpop.f32.mrf.mxu0
      %v697 = vadd.f32 0.0, %v696
      %698 = vmatmul.bf16.gmra.mxu0 %v458
      %v699 = vpop.f32.mrf.mxu0
      %v700 = vadd.f32 0.0, %v699
      %v701 = vpop.f32.mrf.mxu0
      %v702 = vadd.f32 0.0, %v701
      %703 = vmatmul.bf16.gmra.mxu0 %v459
      %v704 = vpop.f32.mrf.mxu0
      %v705 = vadd.f32 0.0, %v704
      %v706 = vpop.f32.mrf.mxu0
      %v707 = vadd.f32 0.0, %v706
      %708 = vdwg.mxu0
      // Predicated region
      $region41: #{discriminator_forward.6} parent=35 // pred_check
        %p709 = pneg %p213
      $region42: #{discriminator_forward.6} parent=35 // pred_check_branch
        %711 = sbr.rel (%p709) target = $region44
      $region43: #{discriminator_forward.6} parent=35 // pred_region
        %v712 = vld [vmem:[#allocation2] sm:$0x1]
        %v713 = vadd.f32 %v550, %v552
        %v714 = vadd.f32 %v713, %v555
        %v715 = vadd.f32 %v714, %v557
        %v716 = vadd.f32 %v715, %v560
        %v717 = vadd.f32 %v716, %v562
        %v718 = vadd.f32 %v717, %v565
        %v719 = vadd.f32 %v718, %v567
        %v720 = vadd.f32 %v719, %v570
        %v721 = vadd.f32 %v720, %v572
        %v722 = vadd.f32 %v721, %v575
        %v723 = vadd.f32 %v722, %v577
        %v724 = vadd.f32 %v723, %v580
        %v725 = vadd.f32 %v724, %v582
        %v726 = vadd.f32 %v725, %v585
        %v727 = vadd.f32 %v726, %v587
        %v728 = vadd.f32 %v727, %v590
        %v729 = vadd.f32 %v728, %v592
        %v730 = vadd.f32 %v729, %v595
        %v731 = vadd.f32 %v730, %v597
        %v732 = vadd.f32 %v731, %v600
        %v733 = vadd.f32 %v732, %v602
        %v734 = vadd.f32 %v733, %v605
        %v735 = vadd.f32 %v734, %v607
        %v736 = vadd.f32 %v735, %v610
        %v737 = vadd.f32 %v736, %v612
        %v738 = vadd.f32 %v737, %v615
        %v739 = vadd.f32 %v738, %v617
        %v740 = vadd.f32 %v739, %v620
        %v741 = vadd.f32 %v740, %v622
        %v742 = vadd.f32 %v741, %v625
        %v743 = vadd.f32 %v742, %v627
        %v744 = vadd.f32 %v743, %v630
        %v745 = vadd.f32 %v744, %v632
        %v746 = vadd.f32 %v745, %v635
        %v747 = vadd.f32 %v746, %v637
        %v748 = vadd.f32 %v747, %v640
        %v749 = vadd.f32 %v748, %v642
        %v750 = vadd.f32 %v749, %v645
        %v751 = vadd.f32 %v750, %v647
        %v752 = vadd.f32 %v751, %v650
        %v753 = vadd.f32 %v752, %v652
        %v754 = vadd.f32 %v753, %v655
        %v755 = vadd.f32 %v754, %v657
        %v756 = vadd.f32 %v755, %v660
        %v757 = vadd.f32 %v756, %v662
        %v758 = vadd.f32 %v757, %v665
        %v759 = vadd.f32 %v758, %v667
        %v760 = vadd.f32 %v759, %v670
        %v761 = vadd.f32 %v760, %v672
        %v762 = vadd.f32 %v761, %v675
        %v763 = vadd.f32 %v762, %v677
        %v764 = vadd.f32 %v763, %v680
        %v765 = vadd.f32 %v764, %v682
        %v766 = vadd.f32 %v765, %v685
        %v767 = vadd.f32 %v766, %v687
        %v768 = vadd.f32 %v767, %v690
        %v769 = vadd.f32 %v768, %v692
        %v770 = vadd.f32 %v769, %v695
        %v771 = vadd.f32 %v770, %v697
        %v772 = vadd.f32 %v771, %v700
        %v773 = vadd.f32 %v772, %v702
        %v774 = vadd.f32 %v773, %v705
        %v775 = vadd.f32 %v774, %v707
        %v776 = vrot.slane %v775, 4
        %v777 = vadd.f32 %v775, %v776
        %v778 = vrot.slane %v777, 2
        %v779 = vadd.f32 %v777, %v778
        %v780 = vrot.slane %v779, 1
        %v781 = vadd.f32 %v779, %v780
        %v782 = vadd.f32 %v712, %v781
        %783 = vst [vmem:[#allocation2] sm:$0x1] %v782
        %v784 = vld [vmem:[#allocation2 + $0x1] sm:$0x1]
        %v785 = vmul.f32 %v550, %v550
        %v786 = vmul.f32 %v552, %v552
        %v787 = vmul.f32 %v555, %v555
        %v788 = vmul.f32 %v557, %v557
        %v789 = vmul.f32 %v560, %v560
        %v790 = vmul.f32 %v562, %v562
        %v791 = vmul.f32 %v565, %v565
        %v792 = vmul.f32 %v567, %v567
        %v793 = vmul.f32 %v570, %v570
        %v794 = vmul.f32 %v572, %v572
        %v795 = vmul.f32 %v575, %v575
        %v796 = vmul.f32 %v577, %v577
        %v797 = vmul.f32 %v580, %v580
        %v798 = vmul.f32 %v582, %v582
        %v799 = vmul.f32 %v585, %v585
        %v800 = vmul.f32 %v587, %v587
        %v801 = vmul.f32 %v590, %v590
        %v802 = vmul.f32 %v592, %v592
        %v803 = vmul.f32 %v595, %v595
        %v804 = vmul.f32 %v597, %v597
        %v805 = vmul.f32 %v600, %v600
        %v806 = vmul.f32 %v602, %v602
        %v807 = vmul.f32 %v605, %v605
        %v808 = vmul.f32 %v607, %v607
        %v809 = vmul.f32 %v610, %v610
        %v810 = vmul.f32 %v612, %v612
        %v811 = vmul.f32 %v615, %v615
        %v812 = vmul.f32 %v617, %v617
        %v813 = vmul.f32 %v620, %v620
        %v814 = vmul.f32 %v622, %v622
        %v815 = vmul.f32 %v625, %v625
        %v816 = vmul.f32 %v627, %v627
        %v817 = vmul.f32 %v630, %v630
        %v818 = vmul.f32 %v632, %v632
        %v819 = vmul.f32 %v635, %v635
        %v820 = vmul.f32 %v637, %v637
        %v821 = vmul.f32 %v640, %v640
        %v822 = vmul.f32 %v642, %v642
        %v823 = vmul.f32 %v645, %v645
        %v824 = vmul.f32 %v647, %v647
        %v825 = vmul.f32 %v650, %v650
        %v826 = vmul.f32 %v652, %v652
        %v827 = vmul.f32 %v655, %v655
        %v828 = vmul.f32 %v657, %v657
        %v829 = vmul.f32 %v660, %v660
        %v830 = vmul.f32 %v662, %v662
        %v831 = vmul.f32 %v665, %v665
        %v832 = vmul.f32 %v667, %v667
        %v833 = vmul.f32 %v670, %v670
        %v834 = vmul.f32 %v672, %v672
        %v835 = vmul.f32 %v675, %v675
        %v836 = vmul.f32 %v677, %v677
        %v837 = vmul.f32 %v680, %v680
        %v838 = vmul.f32 %v682, %v682
        %v839 = vmul.f32 %v685, %v685
        %v840 = vmul.f32 %v687, %v687
        %v841 = vmul.f32 %v690, %v690
        %v842 = vmul.f32 %v692, %v692
        %v843 = vmul.f32 %v695, %v695
        %v844 = vmul.f32 %v697, %v697
        %v845 = vmul.f32 %v700, %v700
        %v846 = vmul.f32 %v702, %v702
        %v847 = vmul.f32 %v705, %v705
        %v848 = vmul.f32 %v707, %v707
        %v849 = vadd.f32 %v785, %v786
        %v850 = vadd.f32 %v849, %v787
        %v851 = vadd.f32 %v850, %v788
        %v852 = vadd.f32 %v851, %v789
        %v853 = vadd.f32 %v852, %v790
        %v854 = vadd.f32 %v853, %v791
        %v855 = vadd.f32 %v854, %v792
        %v856 = vadd.f32 %v855, %v793
        %v857 = vadd.f32 %v856, %v794
        %v858 = vadd.f32 %v857, %v795
        %v859 = vadd.f32 %v858, %v796
        %v860 = vadd.f32 %v859, %v797
        %v861 = vadd.f32 %v860, %v798
        %v862 = vadd.f32 %v861, %v799
        %v863 = vadd.f32 %v862, %v800
        %v864 = vadd.f32 %v863, %v801
        %v865 = vadd.f32 %v864, %v802
        %v866 = vadd.f32 %v865, %v803
        %v867 = vadd.f32 %v866, %v804
        %v868 = vadd.f32 %v867, %v805
        %v869 = vadd.f32 %v868, %v806
        %v870 = vadd.f32 %v869, %v807
        %v871 = vadd.f32 %v870, %v808
        %v872 = vadd.f32 %v871, %v809
        %v873 = vadd.f32 %v872, %v810
        %v874 = vadd.f32 %v873, %v811
        %v875 = vadd.f32 %v874, %v812
        %v876 = vadd.f32 %v875, %v813
        %v877 = vadd.f32 %v876, %v814
        %v878 = vadd.f32 %v877, %v815
        %v879 = vadd.f32 %v878, %v816
        %v880 = vadd.f32 %v879, %v817
        %v881 = vadd.f32 %v880, %v818
        %v882 = vadd.f32 %v881, %v819
        %v883 = vadd.f32 %v882, %v820
        %v884 = vadd.f32 %v883, %v821
        %v885 = vadd.f32 %v884, %v822
        %v886 = vadd.f32 %v885, %v823
        %v887 = vadd.f32 %v886, %v824
        %v888 = vadd.f32 %v887, %v825
        %v889 = vadd.f32 %v888, %v826
        %v890 = vadd.f32 %v889, %v827
        %v891 = vadd.f32 %v890, %v828
        %v892 = vadd.f32 %v891, %v829
        %v893 = vadd.f32 %v892, %v830
        %v894 = vadd.f32 %v893, %v831
        %v895 = vadd.f32 %v894, %v832
        %v896 = vadd.f32 %v895, %v833
        %v897 = vadd.f32 %v896, %v834
        %v898 = vadd.f32 %v897, %v835
        %v899 = vadd.f32 %v898, %v836
        %v900 = vadd.f32 %v899, %v837
        %v901 = vadd.f32 %v900, %v838
        %v902 = vadd.f32 %v901, %v839
        %v903 = vadd.f32 %v902, %v840
        %v904 = vadd.f32 %v903, %v841
        %v905 = vadd.f32 %v904, %v842
        %v906 = vadd.f32 %v905, %v843
        %v907 = vadd.f32 %v906, %v844
        %v908 = vadd.f32 %v907, %v845
        %v909 = vadd.f32 %v908, %v846
        %v910 = vadd.f32 %v909, %v847
        %v911 = vadd.f32 %v910, %v848
        %v912 = vrot.slane %v911, 4
        %v913 = vadd.f32 %v911, %v912
        %v914 = vrot.slane %v913, 2
        %v915 = vadd.f32 %v913, %v914
        %v916 = vrot.slane %v915, 1
        %v917 = vadd.f32 %v915, %v916
        %v918 = vadd.f32 %v784, %v917
        %919 = vst [vmem:[#allocation2 + $0x1] sm:$0x1] %v918
      $region44: #{discriminator_forward.6} parent=35 // pred_fallthru
        _
      %p920 = scmp.eq.s32.totalorder %s19, 1
      // Predicated region
      $region45: #{discriminator_forward.6} parent=35 // pred_check
        %p921 = pneg %p920
      $region46: #{discriminator_forward.6} parent=35 // pred_check_branch
        %923 = sbr.rel (%p921) target = $region48
      $region47: #{discriminator_forward.6} parent=35 // pred_region
        %v924 = vld [vmem:[#allocation2] sm:$0x1]
        %v925 = vmul.f32 %v924, 0.001953125
        %v926 = vld [vmem:[#allocation2 + $0x1] sm:$0x1]
        %v927 = vmul.f32 %v926, 0.001953125
        %v928 = vmul.f32 %v925, %v925
        %v929 = vsub.f32 %v927, %v928
        %v930 = vmax.f32 %v929, 0.0
        %v931 = vperm.slane %v925, 0
        %v932 = vsub.f32 %v550, %v931
        %v933 = vsub.f32 %v552, %v931
        %v934 = vsub.f32 %v555, %v931
        %v935 = vsub.f32 %v557, %v931
        %v936 = vsub.f32 %v560, %v931
        %v937 = vsub.f32 %v562, %v931
        %v938 = vsub.f32 %v565, %v931
        %v939 = vsub.f32 %v567, %v931
        %v940 = vsub.f32 %v570, %v931
        %v941 = vsub.f32 %v572, %v931
        %v942 = vsub.f32 %v575, %v931
        %v943 = vsub.f32 %v577, %v931
        %v944 = vsub.f32 %v580, %v931
        %v945 = vsub.f32 %v582, %v931
        %v946 = vsub.f32 %v585, %v931
        %v947 = vsub.f32 %v587, %v931
        %v948 = vsub.f32 %v590, %v931
        %v949 = vsub.f32 %v592, %v931
        %v950 = vsub.f32 %v595, %v931
        %v951 = vsub.f32 %v597, %v931
        %v952 = vsub.f32 %v600, %v931
        %v953 = vsub.f32 %v602, %v931
        %v954 = vsub.f32 %v605, %v931
        %v955 = vsub.f32 %v607, %v931
        %v956 = vsub.f32 %v610, %v931
        %v957 = vsub.f32 %v612, %v931
        %v958 = vsub.f32 %v615, %v931
        %v959 = vsub.f32 %v617, %v931
        %v960 = vsub.f32 %v620, %v931
        %v961 = vsub.f32 %v622, %v931
        %v962 = vsub.f32 %v625, %v931
        %v963 = vsub.f32 %v627, %v931
        %v964 = vsub.f32 %v630, %v931
        %v965 = vsub.f32 %v632, %v931
        %v966 = vsub.f32 %v635, %v931
        %v967 = vsub.f32 %v637, %v931
        %v968 = vsub.f32 %v640, %v931
        %v969 = vsub.f32 %v642, %v931
        %v970 = vsub.f32 %v645, %v931
        %v971 = vsub.f32 %v647, %v931
        %v972 = vsub.f32 %v650, %v931
        %v973 = vsub.f32 %v652, %v931
        %v974 = vsub.f32 %v655, %v931
        %v975 = vsub.f32 %v657, %v931
        %v976 = vsub.f32 %v660, %v931
        %v977 = vsub.f32 %v662, %v931
        %v978 = vsub.f32 %v665, %v931
        %v979 = vsub.f32 %v667, %v931
        %v980 = vsub.f32 %v670, %v931
        %v981 = vsub.f32 %v672, %v931
        %v982 = vsub.f32 %v675, %v931
        %v983 = vsub.f32 %v677, %v931
        %v984 = vsub.f32 %v680, %v931
        %v985 = vsub.f32 %v682, %v931
        %v986 = vsub.f32 %v685, %v931
        %v987 = vsub.f32 %v687, %v931
        %v988 = vsub.f32 %v690, %v931
        %v989 = vsub.f32 %v692, %v931
        %v990 = vsub.f32 %v695, %v931
        %v991 = vsub.f32 %v697, %v931
        %v992 = vsub.f32 %v700, %v931
        %v993 = vsub.f32 %v702, %v931
        %v994 = vsub.f32 %v705, %v931
        %v995 = vsub.f32 %v707, %v931
        %v996 = vadd.f32 %v930, 1e-05
        %v997 = vrsqrt.pop %v996
        %v998 = vmul.f32 %v997, %v996
        %v999 = vmul.f32 %v998, %v997
        %v1000 = vmul.f32 0.5, %v999
        %v1001 = vsub.f32 1.5, %v1000
        %v1002 = vmul.f32 %v997, %v1001
        %vm1003 = vweird.f32 %v996
        %vm1004 = vweird.f32 %v997
        %vm1005 = vmor %vm1003, %vm1004
        %v1006 = vsel %vm1005, %v997, %v1002
        %v1007 = vperm.slane %v1006, 0
        %v1008 = vmul.f32 %v932, %v1007
        %v1009 = vmul.f32 %v933, %v1007
        %v1010 = vmul.f32 %v934, %v1007
        %v1011 = vmul.f32 %v935, %v1007
        %v1012 = vmul.f32 %v936, %v1007
        %v1013 = vmul.f32 %v937, %v1007
        %v1014 = vmul.f32 %v938, %v1007
        %v1015 = vmul.f32 %v939, %v1007
        %v1016 = vmul.f32 %v940, %v1007
        %v1017 = vmul.f32 %v941, %v1007
        %v1018 = vmul.f32 %v942, %v1007
        %v1019 = vmul.f32 %v943, %v1007
        %v1020 = vmul.f32 %v944, %v1007
        %v1021 = vmul.f32 %v945, %v1007
        %v1022 = vmul.f32 %v946, %v1007
        %v1023 = vmul.f32 %v947, %v1007
        %v1024 = vmul.f32 %v948, %v1007
        %v1025 = vmul.f32 %v949, %v1007
        %v1026 = vmul.f32 %v950, %v1007
        %v1027 = vmul.f32 %v951, %v1007
        %v1028 = vmul.f32 %v952, %v1007
        %v1029 = vmul.f32 %v953, %v1007
        %v1030 = vmul.f32 %v954, %v1007
        %v1031 = vmul.f32 %v955, %v1007
        %v1032 = vmul.f32 %v956, %v1007
        %v1033 = vmul.f32 %v957, %v1007
        %v1034 = vmul.f32 %v958, %v1007
        %v1035 = vmul.f32 %v959, %v1007
        %v1036 = vmul.f32 %v960, %v1007
        %v1037 = vmul.f32 %v961, %v1007
        %v1038 = vmul.f32 %v962, %v1007
        %v1039 = vmul.f32 %v963, %v1007
        %v1040 = vmul.f32 %v964, %v1007
        %v1041 = vmul.f32 %v965, %v1007
        %v1042 = vmul.f32 %v966, %v1007
        %v1043 = vmul.f32 %v967, %v1007
        %v1044 = vmul.f32 %v968, %v1007
        %v1045 = vmul.f32 %v969, %v1007
        %v1046 = vmul.f32 %v970, %v1007
        %v1047 = vmul.f32 %v971, %v1007
        %v1048 = vmul.f32 %v972, %v1007
        %v1049 = vmul.f32 %v973, %v1007
        %v1050 = vmul.f32 %v974, %v1007
        %v1051 = vmul.f32 %v975, %v1007
        %v1052 = vmul.f32 %v976, %v1007
        %v1053 = vmul.f32 %v977, %v1007
        %v1054 = vmul.f32 %v978, %v1007
        %v1055 = vmul.f32 %v979, %v1007
        %v1056 = vmul.f32 %v980, %v1007
        %v1057 = vmul.f32 %v981, %v1007
        %v1058 = vmul.f32 %v982, %v1007
        %v1059 = vmul.f32 %v983, %v1007
        %v1060 = vmul.f32 %v984, %v1007
        %v1061 = vmul.f32 %v985, %v1007
        %v1062 = vmul.f32 %v986, %v1007
        %v1063 = vmul.f32 %v987, %v1007
        %v1064 = vmul.f32 %v988, %v1007
        %v1065 = vmul.f32 %v989, %v1007
        %v1066 = vmul.f32 %v990, %v1007
        %v1067 = vmul.f32 %v991, %v1007
        %v1068 = vmul.f32 %v992, %v1007
        %v1069 = vmul.f32 %v993, %v1007
        %v1070 = vmul.f32 %v994, %v1007
        %v1071 = vmul.f32 %v995, %v1007
        %v1072 = vld [vmem:[%s2] sm:$0x1]
        %v1074 = vperm.slane %v1072, 0
        %v1076 = vmul.f32 %v1008, %v1074
        %v1077 = vmul.f32 %v1009, %v1074
        %v1078 = vmul.f32 %v1010, %v1074
        %v1079 = vmul.f32 %v1011, %v1074
        %v1080 = vmul.f32 %v1012, %v1074
        %v1081 = vmul.f32 %v1013, %v1074
        %v1082 = vmul.f32 %v1014, %v1074
        %v1083 = vmul.f32 %v1015, %v1074
        %v1084 = vmul.f32 %v1016, %v1074
        %v1085 = vmul.f32 %v1017, %v1074
        %v1086 = vmul.f32 %v1018, %v1074
        %v1087 = vmul.f32 %v1019, %v1074
        %v1088 = vmul.f32 %v1020, %v1074
        %v1089 = vmul.f32 %v1021, %v1074
        %v1090 = vmul.f32 %v1022, %v1074
        %v1091 = vmul.f32 %v1023, %v1074
        %v1092 = vmul.f32 %v1024, %v1074
        %v1093 = vmul.f32 %v1025, %v1074
        %v1094 = vmul.f32 %v1026, %v1074
        %v1095 = vmul.f32 %v1027, %v1074
        %v1096 = vmul.f32 %v1028, %v1074
        %v1097 = vmul.f32 %v1029, %v1074
        %v1098 = vmul.f32 %v1030, %v1074
        %v1099 = vmul.f32 %v1031, %v1074
        %v1100 = vmul.f32 %v1032, %v1074
        %v1101 = vmul.f32 %v1033, %v1074
        %v1102 = vmul.f32 %v1034, %v1074
        %v1103 = vmul.f32 %v1035, %v1074
        %v1104 = vmul.f32 %v1036, %v1074
        %v1105 = vmul.f32 %v1037, %v1074
        %v1106 = vmul.f32 %v1038, %v1074
        %v1107 = vmul.f32 %v1039, %v1074
        %v1108 = vmul.f32 %v1040, %v1074
        %v1109 = vmul.f32 %v1041, %v1074
        %v1110 = vmul.f32 %v1042, %v1074
        %v1111 = vmul.f32 %v1043, %v1074
        %v1112 = vmul.f32 %v1044, %v1074
        %v1113 = vmul.f32 %v1045, %v1074
        %v1114 = vmul.f32 %v1046, %v1074
        %v1115 = vmul.f32 %v1047, %v1074
        %v1116 = vmul.f32 %v1048, %v1074
        %v1117 = vmul.f32 %v1049, %v1074
        %v1118 = vmul.f32 %v1050, %v1074
        %v1119 = vmul.f32 %v1051, %v1074
        %v1120 = vmul.f32 %v1052, %v1074
        %v1121 = vmul.f32 %v1053, %v1074
        %v1122 = vmul.f32 %v1054, %v1074
        %v1123 = vmul.f32 %v1055, %v1074
        %v1124 = vmul.f32 %v1056, %v1074
        %v1125 = vmul.f32 %v1057, %v1074
        %v1126 = vmul.f32 %v1058, %v1074
        %v1127 = vmul.f32 %v1059, %v1074
        %v1128 = vmul.f32 %v1060, %v1074
        %v1129 = vmul.f32 %v1061, %v1074
        %v1130 = vmul.f32 %v1062, %v1074
        %v1131 = vmul.f32 %v1063, %v1074
        %v1132 = vmul.f32 %v1064, %v1074
        %v1133 = vmul.f32 %v1065, %v1074
        %v1134 = vmul.f32 %v1066, %v1074
        %v1135 = vmul.f32 %v1067, %v1074
        %v1136 = vmul.f32 %v1068, %v1074
        %v1137 = vmul.f32 %v1069, %v1074
        %v1138 = vmul.f32 %v1070, %v1074
        %v1139 = vmul.f32 %v1071, %v1074
        %v1140 = vld [vmem:[%s3] sm:$0x1]
        %v1142 = vperm.slane %v1140, 0
        %v1144 = vadd.f32 %v1076, %v1142
        %v1145 = vadd.f32 %v1077, %v1142
        %v1146 = vadd.f32 %v1078, %v1142
        %v1147 = vadd.f32 %v1079, %v1142
        %v1148 = vadd.f32 %v1080, %v1142
        %v1149 = vadd.f32 %v1081, %v1142
        %v1150 = vadd.f32 %v1082, %v1142
        %v1151 = vadd.f32 %v1083, %v1142
        %v1152 = vadd.f32 %v1084, %v1142
        %v1153 = vadd.f32 %v1085, %v1142
        %v1154 = vadd.f32 %v1086, %v1142
        %v1155 = vadd.f32 %v1087, %v1142
        %v1156 = vadd.f32 %v1088, %v1142
        %v1157 = vadd.f32 %v1089, %v1142
        %v1158 = vadd.f32 %v1090, %v1142
        %v1159 = vadd.f32 %v1091, %v1142
        %v1160 = vadd.f32 %v1092, %v1142
        %v1161 = vadd.f32 %v1093, %v1142
        %v1162 = vadd.f32 %v1094, %v1142
        %v1163 = vadd.f32 %v1095, %v1142
        %v1164 = vadd.f32 %v1096, %v1142
        %v1165 = vadd.f32 %v1097, %v1142
        %v1166 = vadd.f32 %v1098, %v1142
        %v1167 = vadd.f32 %v1099, %v1142
        %v1168 = vadd.f32 %v1100, %v1142
        %v1169 = vadd.f32 %v1101, %v1142
        %v1170 = vadd.f32 %v1102, %v1142
        %v1171 = vadd.f32 %v1103, %v1142
        %v1172 = vadd.f32 %v1104, %v1142
        %v1173 = vadd.f32 %v1105, %v1142
        %v1174 = vadd.f32 %v1106, %v1142
        %v1175 = vadd.f32 %v1107, %v1142
        %v1176 = vadd.f32 %v1108, %v1142
        %v1177 = vadd.f32 %v1109, %v1142
        %v1178 = vadd.f32 %v1110, %v1142
        %v1179 = vadd.f32 %v1111, %v1142
        %v1180 = vadd.f32 %v1112, %v1142
        %v1181 = vadd.f32 %v1113, %v1142
        %v1182 = vadd.f32 %v1114, %v1142
        %v1183 = vadd.f32 %v1115, %v1142
        %v1184 = vadd.f32 %v1116, %v1142
        %v1185 = vadd.f32 %v1117, %v1142
        %v1186 = vadd.f32 %v1118, %v1142
        %v1187 = vadd.f32 %v1119, %v1142
        %v1188 = vadd.f32 %v1120, %v1142
        %v1189 = vadd.f32 %v1121, %v1142
        %v1190 = vadd.f32 %v1122, %v1142
        %v1191 = vadd.f32 %v1123, %v1142
        %v1192 = vadd.f32 %v1124, %v1142
        %v1193 = vadd.f32 %v1125, %v1142
        %v1194 = vadd.f32 %v1126, %v1142
        %v1195 = vadd.f32 %v1127, %v1142
        %v1196 = vadd.f32 %v1128, %v1142
        %v1197 = vadd.f32 %v1129, %v1142
        %v1198 = vadd.f32 %v1130, %v1142
        %v1199 = vadd.f32 %v1131, %v1142
        %v1200 = vadd.f32 %v1132, %v1142
        %v1201 = vadd.f32 %v1133, %v1142
        %v1202 = vadd.f32 %v1134, %v1142
        %v1203 = vadd.f32 %v1135, %v1142
        %v1204 = vadd.f32 %v1136, %v1142
        %v1205 = vadd.f32 %v1137, %v1142
        %v1206 = vadd.f32 %v1138, %v1142
        %v1207 = vadd.f32 %v1139, %v1142
        %vm1208 = vcmp.ge.f32.partialorder %v1144, 0.0
        %vm1209 = vcmp.ge.f32.partialorder %v1145, 0.0
        %vm1210 = vcmp.ge.f32.partialorder %v1146, 0.0
        %vm1211 = vcmp.ge.f32.partialorder %v1147, 0.0
        %vm1212 = vcmp.ge.f32.partialorder %v1148, 0.0
        %vm1213 = vcmp.ge.f32.partialorder %v1149, 0.0
        %vm1214 = vcmp.ge.f32.partialorder %v1150, 0.0
        %vm1215 = vcmp.ge.f32.partialorder %v1151, 0.0
        %vm1216 = vcmp.ge.f32.partialorder %v1152, 0.0
        %vm1217 = vcmp.ge.f32.partialorder %v1153, 0.0
        %vm1218 = vcmp.ge.f32.partialorder %v1154, 0.0
        %vm1219 = vcmp.ge.f32.partialorder %v1155, 0.0
        %vm1220 = vcmp.ge.f32.partialorder %v1156, 0.0
        %vm1221 = vcmp.ge.f32.partialorder %v1157, 0.0
        %vm1222 = vcmp.ge.f32.partialorder %v1158, 0.0
        %vm1223 = vcmp.ge.f32.partialorder %v1159, 0.0
        %vm1224 = vcmp.ge.f32.partialorder %v1160, 0.0
        %vm1225 = vcmp.ge.f32.partialorder %v1161, 0.0
        %vm1226 = vcmp.ge.f32.partialorder %v1162, 0.0
        %vm1227 = vcmp.ge.f32.partialorder %v1163, 0.0
        %vm1228 = vcmp.ge.f32.partialorder %v1164, 0.0
        %vm1229 = vcmp.ge.f32.partialorder %v1165, 0.0
        %vm1230 = vcmp.ge.f32.partialorder %v1166, 0.0
        %vm1231 = vcmp.ge.f32.partialorder %v1167, 0.0
        %vm1232 = vcmp.ge.f32.partialorder %v1168, 0.0
        %vm1233 = vcmp.ge.f32.partialorder %v1169, 0.0
        %vm1234 = vcmp.ge.f32.partialorder %v1170, 0.0
        %vm1235 = vcmp.ge.f32.partialorder %v1171, 0.0
        %vm1236 = vcmp.ge.f32.partialorder %v1172, 0.0
        %vm1237 = vcmp.ge.f32.partialorder %v1173, 0.0
        %vm1238 = vcmp.ge.f32.partialorder %v1174, 0.0
        %vm1239 = vcmp.ge.f32.partialorder %v1175, 0.0
        %vm1240 = vcmp.ge.f32.partialorder %v1176, 0.0
        %vm1241 = vcmp.ge.f32.partialorder %v1177, 0.0
        %vm1242 = vcmp.ge.f32.partialorder %v1178, 0.0
        %vm1243 = vcmp.ge.f32.partialorder %v1179, 0.0
        %vm1244 = vcmp.ge.f32.partialorder %v1180, 0.0
        %vm1245 = vcmp.ge.f32.partialorder %v1181, 0.0
        %vm1246 = vcmp.ge.f32.partialorder %v1182, 0.0
        %vm1247 = vcmp.ge.f32.partialorder %v1183, 0.0
        %vm1248 = vcmp.ge.f32.partialorder %v1184, 0.0
        %vm1249 = vcmp.ge.f32.partialorder %v1185, 0.0
        %vm1250 = vcmp.ge.f32.partialorder %v1186, 0.0
        %vm1251 = vcmp.ge.f32.partialorder %v1187, 0.0
        %vm1252 = vcmp.ge.f32.partialorder %v1188, 0.0
        %vm1253 = vcmp.ge.f32.partialorder %v1189, 0.0
        %vm1254 = vcmp.ge.f32.partialorder %v1190, 0.0
        %vm1255 = vcmp.ge.f32.partialorder %v1191, 0.0
        %vm1256 = vcmp.ge.f32.partialorder %v1192, 0.0
        %vm1257 = vcmp.ge.f32.partialorder %v1193, 0.0
        %vm1258 = vcmp.ge.f32.partialorder %v1194, 0.0
        %vm1259 = vcmp.ge.f32.partialorder %v1195, 0.0
        %vm1260 = vcmp.ge.f32.partialorder %v1196, 0.0
        %vm1261 = vcmp.ge.f32.partialorder %v1197, 0.0
        %vm1262 = vcmp.ge.f32.partialorder %v1198, 0.0
        %vm1263 = vcmp.ge.f32.partialorder %v1199, 0.0
        %vm1264 = vcmp.ge.f32.partialorder %v1200, 0.0
        %vm1265 = vcmp.ge.f32.partialorder %v1201, 0.0
        %vm1266 = vcmp.ge.f32.partialorder %v1202, 0.0
        %vm1267 = vcmp.ge.f32.partialorder %v1203, 0.0
        %vm1268 = vcmp.ge.f32.partialorder %v1204, 0.0
        %vm1269 = vcmp.ge.f32.partialorder %v1205, 0.0
        %vm1270 = vcmp.ge.f32.partialorder %v1206, 0.0
        %vm1271 = vcmp.ge.f32.partialorder %v1207, 0.0
        %v1272 = vmul.f32 %v1144, 0.2
        %v1273 = vmul.f32 %v1145, 0.2
        %v1274 = vmul.f32 %v1146, 0.2
        %v1275 = vmul.f32 %v1147, 0.2
        %v1276 = vmul.f32 %v1148, 0.2
        %v1277 = vmul.f32 %v1149, 0.2
        %v1278 = vmul.f32 %v1150, 0.2
        %v1279 = vmul.f32 %v1151, 0.2
        %v1280 = vmul.f32 %v1152, 0.2
        %v1281 = vmul.f32 %v1153, 0.2
        %v1282 = vmul.f32 %v1154, 0.2
        %v1283 = vmul.f32 %v1155, 0.2
        %v1284 = vmul.f32 %v1156, 0.2
        %v1285 = vmul.f32 %v1157, 0.2
        %v1286 = vmul.f32 %v1158, 0.2
        %v1287 = vmul.f32 %v1159, 0.2
        %v1288 = vmul.f32 %v1160, 0.2
        %v1289 = vmul.f32 %v1161, 0.2
        %v1290 = vmul.f32 %v1162, 0.2
        %v1291 = vmul.f32 %v1163, 0.2
        %v1292 = vmul.f32 %v1164, 0.2
        %v1293 = vmul.f32 %v1165, 0.2
        %v1294 = vmul.f32 %v1166, 0.2
        %v1295 = vmul.f32 %v1167, 0.2
        %v1296 = vmul.f32 %v1168, 0.2
        %v1297 = vmul.f32 %v1169, 0.2
        %v1298 = vmul.f32 %v1170, 0.2
        %v1299 = vmul.f32 %v1171, 0.2
        %v1300 = vmul.f32 %v1172, 0.2
        %v1301 = vmul.f32 %v1173, 0.2
        %v1302 = vmul.f32 %v1174, 0.2
        %v1303 = vmul.f32 %v1175, 0.2
        %v1304 = vmul.f32 %v1176, 0.2
        %v1305 = vmul.f32 %v1177, 0.2
        %v1306 = vmul.f32 %v1178, 0.2
        %v1307 = vmul.f32 %v1179, 0.2
        %v1308 = vmul.f32 %v1180, 0.2
        %v1309 = vmul.f32 %v1181, 0.2
        %v1310 = vmul.f32 %v1182, 0.2
        %v1311 = vmul.f32 %v1183, 0.2
        %v1312 = vmul.f32 %v1184, 0.2
        %v1313 = vmul.f32 %v1185, 0.2
        %v1314 = vmul.f32 %v1186, 0.2
        %v1315 = vmul.f32 %v1187, 0.2
        %v1316 = vmul.f32 %v1188, 0.2
        %v1317 = vmul.f32 %v1189, 0.2
        %v1318 = vmul.f32 %v1190, 0.2
        %v1319 = vmul.f32 %v1191, 0.2
        %v1320 = vmul.f32 %v1192, 0.2
        %v1321 = vmul.f32 %v1193, 0.2
        %v1322 = vmul.f32 %v1194, 0.2
        %v1323 = vmul.f32 %v1195, 0.2
        %v1324 = vmul.f32 %v1196, 0.2
        %v1325 = vmul.f32 %v1197, 0.2
        %v1326 = vmul.f32 %v1198, 0.2
        %v1327 = vmul.f32 %v1199, 0.2
        %v1328 = vmul.f32 %v1200, 0.2
        %v1329 = vmul.f32 %v1201, 0.2
        %v1330 = vmul.f32 %v1202, 0.2
        %v1331 = vmul.f32 %v1203, 0.2
        %v1332 = vmul.f32 %v1204, 0.2
        %v1333 = vmul.f32 %v1205, 0.2
        %v1334 = vmul.f32 %v1206, 0.2
        %v1335 = vmul.f32 %v1207, 0.2
        %v1336 = vsel %vm1208, %v1144, %v1272
        %v1337 = vsel %vm1209, %v1145, %v1273
        %v1338 = vsel %vm1210, %v1146, %v1274
        %v1339 = vsel %vm1211, %v1147, %v1275
        %v1340 = vsel %vm1212, %v1148, %v1276
        %v1341 = vsel %vm1213, %v1149, %v1277
        %v1342 = vsel %vm1214, %v1150, %v1278
        %v1343 = vsel %vm1215, %v1151, %v1279
        %v1344 = vsel %vm1216, %v1152, %v1280
        %v1345 = vsel %vm1217, %v1153, %v1281
        %v1346 = vsel %vm1218, %v1154, %v1282
        %v1347 = vsel %vm1219, %v1155, %v1283
        %v1348 = vsel %vm1220, %v1156, %v1284
        %v1349 = vsel %vm1221, %v1157, %v1285
        %v1350 = vsel %vm1222, %v1158, %v1286
        %v1351 = vsel %vm1223, %v1159, %v1287
        %v1352 = vsel %vm1224, %v1160, %v1288
        %v1353 = vsel %vm1225, %v1161, %v1289
        %v1354 = vsel %vm1226, %v1162, %v1290
        %v1355 = vsel %vm1227, %v1163, %v1291
        %v1356 = vsel %vm1228, %v1164, %v1292
        %v1357 = vsel %vm1229, %v1165, %v1293
        %v1358 = vsel %vm1230, %v1166, %v1294
        %v1359 = vsel %vm1231, %v1167, %v1295
        %v1360 = vsel %vm1232, %v1168, %v1296
        %v1361 = vsel %vm1233, %v1169, %v1297
        %v1362 = vsel %vm1234, %v1170, %v1298
        %v1363 = vsel %vm1235, %v1171, %v1299
        %v1364 = vsel %vm1236, %v1172, %v1300
        %v1365 = vsel %vm1237, %v1173, %v1301
        %v1366 = vsel %vm1238, %v1174, %v1302
        %v1367 = vsel %vm1239, %v1175, %v1303
        %v1368 = vsel %vm1240, %v1176, %v1304
        %v1369 = vsel %vm1241, %v1177, %v1305
        %v1370 = vsel %vm1242, %v1178, %v1306
        %v1371 = vsel %vm1243, %v1179, %v1307
        %v1372 = vsel %vm1244, %v1180, %v1308
        %v1373 = vsel %vm1245, %v1181, %v1309
        %v1374 = vsel %vm1246, %v1182, %v1310
        %v1375 = vsel %vm1247, %v1183, %v1311
        %v1376 = vsel %vm1248, %v1184, %v1312
        %v1377 = vsel %vm1249, %v1185, %v1313
        %v1378 = vsel %vm1250, %v1186, %v1314
        %v1379 = vsel %vm1251, %v1187, %v1315
        %v1380 = vsel %vm1252, %v1188, %v1316
        %v1381 = vsel %vm1253, %v1189, %v1317
        %v1382 = vsel %vm1254, %v1190, %v1318
        %v1383 = vsel %vm1255, %v1191, %v1319
        %v1384 = vsel %vm1256, %v1192, %v1320
        %v1385 = vsel %vm1257, %v1193, %v1321
        %v1386 = vsel %vm1258, %v1194, %v1322
        %v1387 = vsel %vm1259, %v1195, %v1323
        %v1388 = vsel %vm1260, %v1196, %v1324
        %v1389 = vsel %vm1261, %v1197, %v1325
        %v1390 = vsel %vm1262, %v1198, %v1326
        %v1391 = vsel %vm1263, %v1199, %v1327
        %v1392 = vsel %vm1264, %v1200, %v1328
        %v1393 = vsel %vm1265, %v1201, %v1329
        %v1394 = vsel %vm1266, %v1202, %v1330
        %v1395 = vsel %vm1267, %v1203, %v1331
        %v1396 = vsel %vm1268, %v1204, %v1332
        %v1397 = vsel %vm1269, %v1205, %v1333
        %v1398 = vsel %vm1270, %v1206, %v1334
        %v1399 = vsel %vm1271, %v1207, %v1335
        %1400 = vst [vmem:[%s211] sm:$0xff] %v1336
        %1401 = vst [vmem:[%s211 + $0x8] sm:$0xff] %v1337
        %1402 = vst [vmem:[%s211 + $0x10] sm:$0xff] %v1338
        %1403 = vst [vmem:[%s211 + $0x18] sm:$0xff] %v1339
        %1404 = vst [vmem:[%s211 + $0x20] sm:$0xff] %v1340
        %1405 = vst [vmem:[%s211 + $0x28] sm:$0xff] %v1341
        %1406 = vst [vmem:[%s211 + $0x30] sm:$0xff] %v1342
        %1407 = vst [vmem:[%s211 + $0x38] sm:$0xff] %v1343
        %1408 = vst [vmem:[%s211 + $0x40] sm:$0xff] %v1344
        %1409 = vst [vmem:[%s211 + $0x48] sm:$0xff] %v1345
        %1410 = vst [vmem:[%s211 + $0x50] sm:$0xff] %v1346
        %1411 = vst [vmem:[%s211 + $0x58] sm:$0xff] %v1347
        %1412 = vst [vmem:[%s211 + $0x60] sm:$0xff] %v1348
        %1413 = vst [vmem:[%s211 + $0x68] sm:$0xff] %v1349
        %1414 = vst [vmem:[%s211 + $0x70] sm:$0xff] %v1350
        %1415 = vst [vmem:[%s211 + $0x78] sm:$0xff] %v1351
        %1416 = vst [vmem:[%s211 + $0x80] sm:$0xff] %v1352
        %1417 = vst [vmem:[%s211 + $0x88] sm:$0xff] %v1353
        %1418 = vst [vmem:[%s211 + $0x90] sm:$0xff] %v1354
        %1419 = vst [vmem:[%s211 + $0x98] sm:$0xff] %v1355
        %1420 = vst [vmem:[%s211 + $0xa0] sm:$0xff] %v1356
        %1421 = vst [vmem:[%s211 + $0xa8] sm:$0xff] %v1357
        %1422 = vst [vmem:[%s211 + $0xb0] sm:$0xff] %v1358
        %1423 = vst [vmem:[%s211 + $0xb8] sm:$0xff] %v1359
        %1424 = vst [vmem:[%s211 + $0xc0] sm:$0xff] %v1360
        %1425 = vst [vmem:[%s211 + $0xc8] sm:$0xff] %v1361
        %1426 = vst [vmem:[%s211 + $0xd0] sm:$0xff] %v1362
        %1427 = vst [vmem:[%s211 + $0xd8] sm:$0xff] %v1363
        %1428 = vst [vmem:[%s211 + $0xe0] sm:$0xff] %v1364
        %1429 = vst [vmem:[%s211 + $0xe8] sm:$0xff] %v1365
        %1430 = vst [vmem:[%s211 + $0xf0] sm:$0xff] %v1366
        %1431 = vst [vmem:[%s211 + $0xf8] sm:$0xff] %v1367
        %1432 = vst [vmem:[%s211 + $0x100] sm:$0xff] %v1368
        %1433 = vst [vmem:[%s211 + $0x108] sm:$0xff] %v1369
        %1434 = vst [vmem:[%s211 + $0x110] sm:$0xff] %v1370
        %1435 = vst [vmem:[%s211 + $0x118] sm:$0xff] %v1371
        %1436 = vst [vmem:[%s211 + $0x120] sm:$0xff] %v1372
        %1437 = vst [vmem:[%s211 + $0x128] sm:$0xff] %v1373
        %1438 = vst [vmem:[%s211 + $0x130] sm:$0xff] %v1374
        %1439 = vst [vmem:[%s211 + $0x138] sm:$0xff] %v1375
        %1440 = vst [vmem:[%s211 + $0x140] sm:$0xff] %v1376
        %1441 = vst [vmem:[%s211 + $0x148] sm:$0xff] %v1377
        %1442 = vst [vmem:[%s211 + $0x150] sm:$0xff] %v1378
        %1443 = vst [vmem:[%s211 + $0x158] sm:$0xff] %v1379
        %1444 = vst [vmem:[%s211 + $0x160] sm:$0xff] %v1380
        %1445 = vst [vmem:[%s211 + $0x168] sm:$0xff] %v1381
        %1446 = vst [vmem:[%s211 + $0x170] sm:$0xff] %v1382
        %1447 = vst [vmem:[%s211 + $0x178] sm:$0xff] %v1383
        %1448 = vst [vmem:[%s211 + $0x180] sm:$0xff] %v1384
        %1449 = vst [vmem:[%s211 + $0x188] sm:$0xff] %v1385
        %1450 = vst [vmem:[%s211 + $0x190] sm:$0xff] %v1386
        %1451 = vst [vmem:[%s211 + $0x198] sm:$0xff] %v1387
        %1452 = vst [vmem:[%s211 + $0x1a0] sm:$0xff] %v1388
        %1453 = vst [vmem:[%s211 + $0x1a8] sm:$0xff] %v1389
        %1454 = vst [vmem:[%s211 + $0x1b0] sm:$0xff] %v1390
        %1455 = vst [vmem:[%s211 + $0x1b8] sm:$0xff] %v1391
        %1456 = vst [vmem:[%s211 + $0x1c0] sm:$0xff] %v1392
        %1457 = vst [vmem:[%s211 + $0x1c8] sm:$0xff] %v1393
        %1458 = vst [vmem:[%s211 + $0x1d0] sm:$0xff] %v1394
        %1459 = vst [vmem:[%s211 + $0x1d8] sm:$0xff] %v1395
        %1460 = vst [vmem:[%s211 + $0x1e0] sm:$0xff] %v1396
        %1461 = vst [vmem:[%s211 + $0x1e8] sm:$0xff] %v1397
        %1462 = vst [vmem:[%s211 + $0x1f0] sm:$0xff] %v1398
        %1463 = vst [vmem:[%s211 + $0x1f8] sm:$0xff] %v1399
      $region48: #{discriminator_forward.6} parent=35 // pred_fallthru
        _
      %s1464 = smul.u32 64, %s20
      %p1465 = scmp.lt.s32.totalorder %s1464, 63
      %s1466 = scalar_select %p1465, %s1464, 63
      %s1467 = smul.addr %s1466, 8
      %s1468 = scalar_lea.vmem %s4, %s1467
      // Predicated region
      $region49: #{discriminator_forward.6} parent=35 // pred_check
        %p1469 = pneg %p134
      $region50: #{discriminator_forward.6} parent=35 // pred_check_branch
        %1471 = sbr.rel (%p1469) target = $region52
      $region51: #{discriminator_forward.6} parent=35 // pred_region
        %s1472 = smul.u32 64, %s20
      $region52: #{discriminator_forward.6} parent=35 // pred_fallthru
        _
      // Predicated region
      $region53: #{discriminator_forward.6} parent=35 // pred_check
        %p1473 = pneg %p134
      $region54: #{discriminator_forward.6} parent=35 // pred_check_branch
        %1475 = sbr.rel (%p1473) target = $region56
      $region55: #{discriminator_forward.6} parent=35 // pred_region
        %s1476 = smul.u32 64, %s20
        %p1477 = scmp.lt.s32.totalorder %s1476, 63
        %s1478 = scalar_select %p1477, %s1476, 63
        %s1479 = smul.addr %s1478, 8
        %s1480 = scalar_lea.vmem %s4, %s1479
      $region56: #{discriminator_forward.6} parent=35 // pred_fallthru
        _
    $region36: #{discriminator_forward.6} parent=5 // pred_fallthru
      _
    %p1481 = scmp.le.s32.totalorder 2, %s10
    // Predicated region
    $region57: #{discriminator_forward.6} parent=5 // pred_check
      %p1482 = pneg %p1481
    $region58: #{discriminator_forward.6} parent=5 // pred_check_branch
      %1484 = sbr.rel (%p1482) target = $region60
    $region59: #{discriminator_forward.6} parent=5 // pred_region
      %s1485 = ssub.s32 %s10, 2
    $region60: #{discriminator_forward.6} parent=5 // pred_fallthru
      _
  $region6: #{discriminator_forward.6} parent=0 // loop_footer
    %s14 = sadd.s32 1, %s10
  $region7: #{discriminator_forward.6} parent=0 // loop_footer_branch
    %9 = sbr.rel target = $region3
  $region8: #{discriminator_forward.6} parent=0 // loop_exit
    _

// kernel: discriminator_forward.7
$region0: #{discriminator_forward.7}
  #allocation0 [shape = 'u32[]', space=smem, size = 0x4, offset = 0x4, fixed_abs, tag = 'smem constant byte address 0x4 - core index']
  #allocation1 [shape = 'u32[72,128]{1,0:T(1,128)}', space=vmem, size = 0x9000, scoped, tag = 'internal scratch']
  #allocation2 [shape = 'f32[2,128]{1,0:T(2,128)}', space=vmem, size = 0x400, scoped, tag = 'scratch operand']
  %s0 = inlined_call_operand.vmem [shape: bf16[128,256], index: 0, kind: input, shape index: {}]
  %s1 = inlined_call_operand.vmem [shape: bf16[256,128], index: 1, kind: input, shape index: {}]
  %s2 = inlined_call_operand.vmem [shape: f32[1,128], index: 2, kind: input, shape index: {}]
  %s3 = inlined_call_operand.vmem [shape: f32[1,128], index: 3, kind: input, shape index: {}]
  %s4 = inlined_call_operand.vmem [shape: f32[128,128], index: 4, kind: output, shape index: {}]
  %s5 = sld [smem:[#allocation0]]
  $region61: #{discriminator_forward.7} parent=0
    _
  %s7 = ssub.s32 1, %s5
  %s8 = scalar_select 0, %s7, %s5
  loop: start=0, step=1, limit=4
  $region2: #{discriminator_forward.7} parent=0 // loop_pre_header
    _
  $region3: #{discriminator_forward.7} parent=0 // loop_header
    %s10 = sphi 0, %s14
    %p11 = scmp.ge.s32.totalorder %s10, 4
    %s17 = sphi 0, %s29
    %s18 = sphi 0, %s25
    %s19 = sphi 0, %s17
    %s20 = sphi 0, %s18
    %s21 = sphi 0, %s19
    %s22 = sphi 0, %s20
    %s32 = sphi 0, %s34
    %s35 = sphi 0, %s32
    %s36 = sphi 0, %s35
    %s52 = sphi 0, %s36
    %s56 = sphi 0, %s56
    %s58 = sphi 0, %s56
    %s59 = sphi 0, %s58
    %s73 = sphi 0, %s59
    %s77 = sphi 0, %s77
    %s79 = sphi 0, %s77
    %s80 = sphi 0, %s79
    %s94 = sphi 0, %s80
    %s98 = sphi 0, %s98
    %s100 = sphi 0, %s98
    %s101 = sphi 0, %s100
    %s115 = sphi 0, %s101
    %s121 = sphi 0, %s123
    %s124 = sphi 0, %s121
    %s125 = sphi 0, %s124
    %s141 = sphi 0, %s125
  $region4: #{discriminator_forward.7} parent=0 // loop_header_branch
    %13 = sbr.rel (%p11) target = $region8
  $region5: #{discriminator_forward.7} parent=0 // loop_body
    %s15 = ssub.s32 %s10, 1
    %s16 = ssub.s32 %s10, 2
    %s23 = sadd.s32 1, %s18
    %p24 = scmp.ge.s32.totalorder %s23, 1
    %s25 = scalar_select %p24, 0, %s23
    %s26 = sadd.s32 1, %s17
    %s27 = scalar_select %p24, %s26, %s17
    %p28 = scmp.ge.s32.totalorder %s27, 2
    %s29 = scalar_select %p28, 0, %s27
    %s30 = ssub.s32 %s18, %s25
    %p31 = scmp.eq.s32.totalorder %s30, 0
    %s33 = sadd.s32 %s32, 1
    %s34 = scalar_select %p31, %s32, %s33
    %p37 = pneg %p31
    %p38 = scmp.eq.s32.totalorder %s10, 1
    %p39 = por %p37, %p38
    %p40 = scmp.ne.s32.totalorder %s32, %s35
    %p41 = scmp.eq.s32.totalorder %s10, 0
    %p42 = por %p40, %p41
    %p43 = scmp.ne.s32.totalorder %s32, %s35
    %p44 = scmp.eq.s32.totalorder %s15, 1
    %p45 = por %p43, %p44
    %p46 = scmp.ne.s32.totalorder %s35, %s36
    %p47 = scmp.eq.s32.totalorder %s15, 0
    %p48 = por %p46, %p47
    %p49 = scmp.ne.s32.totalorder %s35, %s36
    %p50 = scmp.eq.s32.totalorder %s16, 1
    %p51 = por %p49, %p50
    %p53 = scmp.ne.s32.totalorder %s36, %s52
    %p54 = scmp.eq.s32.totalorder %s16, 0
    %p55 = por %p53, %p54
    %s57 = sadd.s32 %s56, 1
    %p60 = scmp.eq.s32.totalorder %s10, 1
    %p61 = scmp.ne.s32.totalorder %s56, %s58
    %p62 = scmp.eq.s32.totalorder %s10, 0
    %p63 = por %p61, %p62
    %p64 = scmp.ne.s32.totalorder %s56, %s58
    %p65 = scmp.eq.s32.totalorder %s15, 1
    %p66 = por %p64, %p65
    %p67 = scmp.ne.s32.totalorder %s58, %s59
    %p68 = scmp.eq.s32.totalorder %s15, 0
    %p69 = por %p67, %p68
    %p70 = scmp.ne.s32.totalorder %s58, %s59
    %p71 = scmp.eq.s32.totalorder %s16, 1
    %p72 = por %p70, %p71
    %p74 = scmp.ne.s32.totalorder %s59, %s73
    %p75 = scmp.eq.s32.totalorder %s16, 0
    %p76 = por %p74, %p75
    %s78 = sadd.s32 %s77, 1
    %p81 = scmp.eq.s32.totalorder %s10, 1
    %p82 = scmp.ne.s32.totalorder %s77, %s79
    %p83 = scmp.eq.s32.totalorder %s10, 0
    %p84 = por %p82, %p83
    %p85 = scmp.ne.s32.totalorder %s77, %s79
    %p86 = scmp.eq.s32.totalorder %s15, 1
    %p87 = por %p85, %p86
    %p88 = scmp.ne.s32.totalorder %s79, %s80
    %p89 = scmp.eq.s32.totalorder %s15, 0
    %p90 = por %p88, %p89
    %p91 = scmp.ne.s32.totalorder %s79, %s80
    %p92 = scmp.eq.s32.totalorder %s16, 1
    %p93 = por %p91, %p92
    %p95 = scmp.ne.s32.totalorder %s80, %s94
    %p96 = scmp.eq.s32.totalorder %s16, 0
    %p97 = por %p95, %p96
    %s99 = sadd.s32 %s98, 1
    %p102 = scmp.eq.s32.totalorder %s10, 1
    %p103 = scmp.ne.s32.totalorder %s98, %s100
    %p104 = scmp.eq.s32.totalorder %s10, 0
    %p105 = por %p103, %p104
    %p106 = scmp.ne.s32.totalorder %s98, %s100
    %p107 = scmp.eq.s32.totalorder %s15, 1
    %p108 = por %p106, %p107
    %p109 = scmp.ne.s32.totalorder %s100, %s101
    %p110 = scmp.eq.s32.totalorder %s15, 0
    %p111 = por %p109, %p110
    %p112 = scmp.ne.s32.totalorder %s100, %s101
    %p113 = scmp.eq.s32.totalorder %s16, 1
    %p114 = por %p112, %p113
    %p116 = scmp.ne.s32.totalorder %s101, %s115
    %p117 = scmp.eq.s32.totalorder %s16, 0
    %p118 = por %p116, %p117
    %s119 = ssub.s32 %s18, %s25
    %p120 = scmp.eq.s32.totalorder %s119, 0
    %s122 = sadd.s32 %s121, 1
    %s123 = scalar_select %p120, %s121, %s122
    %p126 = pneg %p120
    %p127 = scmp.eq.s32.totalorder %s10, 1
    %p128 = por %p126, %p127
    %p129 = scmp.ne.s32.totalorder %s121, %s124
    %p130 = scmp.eq.s32.totalorder %s10, 0
    %p131 = por %p129, %p130
    %p132 = scmp.ne.s32.totalorder %s121, %s124
    %p133 = scmp.eq.s32.totalorder %s15, 1
    %p134 = por %p132, %p133
    %p135 = scmp.ne.s32.totalorder %s124, %s125
    %p136 = scmp.eq.s32.totalorder %s15, 0
    %p137 = por %p135, %p136
    %p138 = scmp.ne.s32.totalorder %s124, %s125
    %p139 = scmp.eq.s32.totalorder %s16, 1
    %p140 = por %p138, %p139
    %p142 = scmp.ne.s32.totalorder %s125, %s141
    %p143 = scmp.eq.s32.totalorder %s16, 0
    %p144 = por %p142, %p143
    %p145 = scmp.le.s32.totalorder 1, %s10
    %p146 = scmp.lt.s32.totalorder %s10, 3
    %p147 = pnand %p145, %p146
    %p148 = pneg %p147
    // Predicated region
    $region9: #{discriminator_forward.7} parent=5 // pred_check
      _
    $region10: #{discriminator_forward.7} parent=5 // pred_check_branch
      %150 = sbr.rel (%p147) target = $region12
    $region11: #{discriminator_forward.7} parent=5 // pred_region
      %s151 = ssub.s32 %s10, 1
      // Predicated region
      $region13: #{discriminator_forward.7} parent=11 // pred_check
        %p152 = pneg %p48
      $region14: #{discriminator_forward.7} parent=11 // pred_check_branch
        %154 = sbr.rel (%p152) target = $region16
      $region15: #{discriminator_forward.7} parent=11 // pred_region
        %s155 = smul.u32 16, %s20
        %p156 = scmp.lt.s32.totalorder %s155, 15
        %s157 = scalar_select %p156, %s155, 15
        %s158 = smul.addr %s157, 2
        %s159 = smul.addr %s158, 4
        %s160 = scalar_lea.vmem %s0, %s159
        %s161 = smul.u32 16, %s20
      $region16: #{discriminator_forward.7} parent=11 // pred_fallthru
        _
      // Predicated region
      $region17: #{discriminator_forward.7} parent=11 // pred_check
        %p162 = pneg %p69
      $region18: #{discriminator_forward.7} parent=11 // pred_check_branch
        %164 = sbr.rel (%p162) target = $region20
      $region19: #{discriminator_forward.7} parent=11 // pred_region
        _
      $region20: #{discriminator_forward.7} parent=11 // pred_fallthru
        _
      // Predicated region
      $region21: #{discriminator_forward.7} parent=11 // pred_check
        %p165 = pneg %p90
      $region22: #{discriminator_forward.7} parent=11 // pred_check_branch
        %167 = sbr.rel (%p165) target = $region24
      $region23: #{discriminator_forward.7} parent=11 // pred_region
        _
      $region24: #{discriminator_forward.7} parent=11 // pred_fallthru
        _
      // Predicated region
      $region25: #{discriminator_forward.7} parent=11 // pred_check
        %p168 = pneg %p111
      $region26: #{discriminator_forward.7} parent=11 // pred_check_branch
        %170 = sbr.rel (%p168) target = $region28
      $region27: #{discriminator_forward.7} parent=11 // pred_region
        _
      $region28: #{discriminator_forward.7} parent=11 // pred_fallthru
        _
    $region12: #{discriminator_forward.7} parent=5 // pred_fallthru
      _
    %p171 = scmp.lt.s32.totalorder %s10, 2
    // Predicated region
    $region29: #{discriminator_forward.7} parent=5 // pred_check
      %p172 = pneg %p171
    $region30: #{discriminator_forward.7} parent=5 // pred_check_branch
      %174 = sbr.rel (%p172) target = $region32
    $region31: #{discriminator_forward.7} parent=5 // pred_region
      _
    $region32: #{discriminator_forward.7} parent=5 // pred_fallthru
      _
    %p175 = scmp.le.s32.totalorder 1, %s10
    %p176 = scmp.lt.s32.totalorder %s10, 3
    %p177 = pnand %p175, %p176
    %p178 = pneg %p177
    // Predicated region
    $region33: #{discriminator_forward.7} parent=5 // pred_check
      _
    $region34: #{discriminator_forward.7} parent=5 // pred_check_branch
      %180 = sbr.rel (%p177) target = $region36
    $region35: #{discriminator_forward.7} parent=5 // pred_region
      %s181 = ssub.s32 %s10, 1
      %s182 = smul.u32 16, %s20
      %p183 = scmp.lt.s32.totalorder %s182, 15
      %s184 = scalar_select %p183, %s182, 15
      %s185 = smul.addr %s184, 2
      %s186 = smul.addr %s185, 4
      %s187 = scalar_lea.vmem %s0, %s186
      %p188 = pneg %p48
      %p189 = pneg %p45
      %p190 = pneg %p69
      %p191 = pneg %p66
      %p192 = pneg %p90
      %p193 = pneg %p87
      %p194 = pneg %p111
      %p195 = pneg %p108
      %p196 = pneg %p137
      %p197 = pneg %p134
      %s198 = smul.u32 16, %s20
      %p199 = scmp.lt.s32.totalorder %s198, 15
      %s200 = scalar_select %p199, %s198, 15
      %s201 = smul.addr %s200, 8
      %s202 = scalar_lea.vmem %s4, %s201
      %s203 = smul.u32 16, %s20
      %p204 = scmp.lt.s32.totalorder %s203, 15
      %s205 = scalar_select %p204, %s203, 15
      %s206 = smul.addr %s205, 2
      %s207 = smul.addr %s206, 4
      %s208 = scalar_lea.vmem %s0, %s207
      %s209 = smul.u32 16, %s20
      %s210 = smul.u32 16, %s20
      %p211 = scmp.lt.s32.totalorder %s210, 15
      %s212 = scalar_select %p211, %s210, 15
      %s213 = smul.addr %s212, 8
      %s214 = scalar_lea.vmem %s4, %s213
      %s215 = smul.u32 16, %s20
      %p216 = scmp.eq.s32.totalorder %s19, 0
      %p217 = scmp.eq.s32.totalorder %s20, 0
      %p218 = pnand %p216, %p217
      %p219 = pneg %p218
      // Predicated region
      $region37: #{discriminator_forward.7} parent=35 // pred_check
        _
      $region38: #{discriminator_forward.7} parent=35 // pred_check_branch
        %221 = sbr.rel (%p218) target = $region40
      $region39: #{discriminator_forward.7} parent=35 // pred_region
        %222 = vst [vmem:[#allocation2] sm:$0x3] 0.0
      $region40: #{discriminator_forward.7} parent=35 // pred_fallthru
        _
      %v223 = vld [vmem:[%s208] sm:$0xff]
      %v224 = vld [vmem:[%s208 + $0x8] sm:$0xff]
      %v225 = vld [vmem:[%s208 + $0x10] sm:$0xff]
      %v226 = vld [vmem:[%s208 + $0x18] sm:$0xff]
      %v227 = vld [vmem:[%s208 + $0x20] sm:$0xff]
      %v228 = vld [vmem:[%s208 + $0x28] sm:$0xff]
      %v229 = vld [vmem:[%s208 + $0x30] sm:$0xff]
      %v230 = vld [vmem:[%s208 + $0x38] sm:$0xff]
      %v231 = vld [vmem:[%s208 + $0x40] sm:$0xff]
      %v232 = vld [vmem:[%s208 + $0x48] sm:$0xff]
      %v233 = vld [vmem:[%s208 + $0x50] sm:$0xff]
      %v234 = vld [vmem:[%s208 + $0x58] sm:$0xff]
      %v235 = vld [vmem:[%s208 + $0x60] sm:$0xff]
      %v236 = vld [vmem:[%s208 + $0x68] sm:$0xff]
      %v237 = vld [vmem:[%s208 + $0x70] sm:$0xff]
      %v238 = vld [vmem:[%s208 + $0x78] sm:$0xff]
      %v239 = vld [vmem:[%s1] sm:$0xf]
      %v240 = vld [vmem:[%s1 + $0x4] sm:$0xf]
      %v241 = vld [vmem:[%s1 + $0x8] sm:$0xf]
      %v242 = vld [vmem:[%s1 + $0xc] sm:$0xf]
      %v243 = vld [vmem:[%s1 + $0x10] sm:$0xf]
      %v244 = vld [vmem:[%s1 + $0x14] sm:$0xf]
      %v245 = vld [vmem:[%s1 + $0x18] sm:$0xf]
      %v246 = vld [vmem:[%s1 + $0x1c] sm:$0xf]
      %v247 = vld [vmem:[%s1 + $0x20] sm:$0xf]
      %v248 = vld [vmem:[%s1 + $0x24] sm:$0xf]
      %v249 = vld [vmem:[%s1 + $0x28] sm:$0xf]
      %v250 = vld [vmem:[%s1 + $0x2c] sm:$0xf]
      %v251 = vld [vmem:[%s1 + $0x30] sm:$0xf]
      %v252 = vld [vmem:[%s1 + $0x34] sm:$0xf]
      %v253 = vld [vmem:[%s1 + $0x38] sm:$0xf]
      %v254 = vld [vmem:[%s1 + $0x3c] sm:$0xf]
      %v255 = vld [vmem:[%s1 + $0x40] sm:$0xf]
      %v256 = vld [vmem:[%s1 + $0x44] sm:$0xf]
      %v257 = vld [vmem:[%s1 + $0x48] sm:$0xf]
      %v258 = vld [vmem:[%s1 + $0x4c] sm:$0xf]
      %v259 = vld [vmem:[%s1 + $0x50] sm:$0xf]
      %v260 = vld [vmem:[%s1 + $0x54] sm:$0xf]
      %v261 = vld [vmem:[%s1 + $0x58] sm:$0xf]
      %v262 = vld [vmem:[%s1 + $0x5c] sm:$0xf]
      %v263 = vld [vmem:[%s1 + $0x60] sm:$0xf]
      %v264 = vld [vmem:[%s1 + $0x64] sm:$0xf]
      %v265 = vld [vmem:[%s1 + $0x68] sm:$0xf]
      %v266 = vld [vmem:[%s1 + $0x6c] sm:$0xf]
      %v267 = vld [vmem:[%s1 + $0x70] sm:$0xf]
      %v268 = vld [vmem:[%s1 + $0x74] sm:$0xf]
      %v269 = vld [vmem:[%s1 + $0x78] sm:$0xf]
      %v270 = vld [vmem:[%s1 + $0x7c] sm:$0xf]
      %v287 = vunpack.c.l.b16 %v223
      %v288 = vunpack.c.h.b16 %v223
      %v289 = vunpack.c.l.b16 %v224
      %v290 = vunpack.c.h.b16 %v224
      %v291 = vunpack.c.l.b16 %v225
      %v292 = vunpack.c.h.b16 %v225
      %v293 = vunpack.c.l.b16 %v226
      %v294 = vunpack.c.h.b16 %v226
      %v295 = vunpack.c.l.b16 %v227
      %v296 = vunpack.c.h.b16 %v227
      %v297 = vunpack.c.l.b16 %v228
      %v298 = vunpack.c.h.b16 %v228
      %v299 = vunpack.c.l.b16 %v229
      %v300 = vunpack.c.h.b16 %v229
      %v301 = vunpack.c.l.b16 %v230
      %v302 = vunpack.c.h.b16 %v230
      %v303 = vunpack.c.l.b16 %v231
      %v304 = vunpack.c.h.b16 %v231
      %v305 = vunpack.c.l.b16 %v232
      %v306 = vunpack.c.h.b16 %v232
      %v307 = vunpack.c.l.b16 %v233
      %v308 = vunpack.c.h.b16 %v233
      %v309 = vunpack.c.l.b16 %v234
      %v310 = vunpack.c.h.b16 %v234
      %v311 = vunpack.c.l.b16 %v235
      %v312 = vunpack.c.h.b16 %v235
      %v313 = vunpack.c.l.b16 %v236
      %v314 = vunpack.c.h.b16 %v236
      %v315 = vunpack.c.l.b16 %v237
      %v316 = vunpack.c.h.b16 %v237
      %v317 = vunpack.c.l.b16 %v238
      %v318 = vunpack.c.h.b16 %v238
      %v319 = vpack.c.b16 %v289, %v287
      %v320 = vpack.c.b16 %v290, %v288
      %v321 = vpack.c.b16 %v293, %v291
      %v322 = vpack.c.b16 %v294, %v292
      %v323 = vpack.c.b16 %v297, %v295
      %v324 = vpack.c.b16 %v298, %v296
      %v325 = vpack.c.b16 %v301, %v299
      %v326 = vpack.c.b16 %v302, %v300
      %v327 = vpack.c.b16 %v305, %v303
      %v328 = vpack.c.b16 %v306, %v304
      %v329 = vpack.c.b16 %v309, %v307
      %v330 = vpack.c.b16 %v310, %v308
      %v331 = vpack.c.b16 %v313, %v311
      %v332 = vpack.c.b16 %v314, %v312
      %v333 = vpack.c.b16 %v317, %v315
      %v334 = vpack.c.b16 %v318, %v316
      %v383 = vunpack.c.l.b16 %v239
      %v384 = vunpack.c.l.b16 %v240
      %v385 = vunpack.c.l.b16 %v241
      %v386 = vunpack.c.l.b16 %v242
      %v387 = vunpack.c.l.b16 %v243
      %v388 = vunpack.c.l.b16 %v244
      %v389 = vunpack.c.l.b16 %v245
      %v390 = vunpack.c.l.b16 %v246
      %v391 = vunpack.c.l.b16 %v247
      %v392 = vunpack.c.l.b16 %v248
      %v393 = vunpack.c.l.b16 %v249
      %v394 = vunpack.c.l.b16 %v250
      %v395 = vunpack.c.l.b16 %v251
      %v396 = vunpack.c.l.b16 %v252
      %v397 = vunpack.c.l.b16 %v253
      %v398 = vunpack.c.l.b16 %v254
      %v399 = vunpack.c.l.b16 %v255
      %v400 = vunpack.c.l.b16 %v256
      %v401 = vunpack.c.l.b16 %v257
      %v402 = vunpack.c.l.b16 %v258
      %v403 = vunpack.c.l.b16 %v259
      %v404 = vunpack.c.l.b16 %v260
      %v405 = vunpack.c.l.b16 %v261
      %v406 = vunpack.c.l.b16 %v262
      %v407 = vunpack.c.l.b16 %v263
      %v408 = vunpack.c.l.b16 %v264
      %v409 = vunpack.c.l.b16 %v265
      %v410 = vunpack.c.l.b16 %v266
      %v411 = vunpack.c.l.b16 %v267
      %v412 = vunpack.c.l.b16 %v268
      %v413 = vunpack.c.l.b16 %v269
      %v414 = vunpack.c.l.b16 %v270
      %v415 = vpack.c.b16 %v384, %v383
      %v416 = vpack.c.b16 %v386, %v385
      %v417 = vpack.c.b16 %v388, %v387
      %v418 = vpack.c.b16 %v390, %v389
      %v419 = vpack.c.b16 %v392, %v391
      %v420 = vpack.c.b16 %v394, %v393
      %v421 = vpack.c.b16 %v396, %v395
      %v422 = vpack.c.b16 %v398, %v397
      %v423 = vpack.c.b16 %v400, %v399
      %v424 = vpack.c.b16 %v402, %v401
      %v425 = vpack.c.b16 %v404, %v403
      %v426 = vpack.c.b16 %v406, %v405
      %v427 = vpack.c.b16 %v408, %v407
      %v428 = vpack.c.b16 %v410, %v409
      %v429 = vpack.c.b16 %v412, %v411
      %v430 = vpack.c.b16 %v414, %v413
      %447 = vmatpush.bf16.msra.mxu0 %v422
      %448 = vmatpush.bf16.msra.mxu0 %v421
      %449 = vmatpush.bf16.msra.mxu0 %v420
      %450 = vmatpush.bf16.msra.mxu0 %v419
      %451 = vmatpush.bf16.msra.mxu0 %v418
      %452 = vmatpush.bf16.msra.mxu0 %v417
      %453 = vmatpush.bf16.msra.mxu0 %v416
      %454 = vmatpush.bf16.msra.mxu0 %v415
      %455 = vmatmul.bf16.gmra.mxu0 %v319
      %v456 = vpop.f32.mrf.mxu0
      %v457 = vadd.f32 0.0, %v456
      %v458 = vpop.f32.mrf.mxu0
      %v459 = vadd.f32 0.0, %v458
      %460 = vmatmul.bf16.gmra.mxu0 %v321
      %v461 = vpop.f32.mrf.mxu0
      %v462 = vadd.f32 0.0, %v461
      %v463 = vpop.f32.mrf.mxu0
      %v464 = vadd.f32 0.0, %v463
      %465 = vmatmul.bf16.gmra.mxu0 %v323
      %v466 = vpop.f32.mrf.mxu0
      %v467 = vadd.f32 0.0, %v466
      %v468 = vpop.f32.mrf.mxu0
      %v469 = vadd.f32 0.0, %v468
      %470 = vmatmul.bf16.gmra.mxu0 %v325
      %v471 = vpop.f32.mrf.mxu0
      %v472 = vadd.f32 0.0, %v471
      %v473 = vpop.f32.mrf.mxu0
      %v474 = vadd.f32 0.0, %v473
      %475 = vmatmul.bf16.gmra.mxu0 %v327
      %v476 = vpop.f32.mrf.mxu0
      %v477 = vadd.f32 0.0, %v476
      %v478 = vpop.f32.mrf.mxu0
      %v479 = vadd.f32 0.0, %v478
      %480 = vmatmul.bf16.gmra.mxu0 %v329
      %v481 = vpop.f32.mrf.mxu0
      %v482 = vadd.f32 0.0, %v481
      %v483 = vpop.f32.mrf.mxu0
      %v484 = vadd.f32 0.0, %v483
      %485 = vmatmul.bf16.gmra.mxu0 %v331
      %v486 = vpop.f32.mrf.mxu0
      %v487 = vadd.f32 0.0, %v486
      %v488 = vpop.f32.mrf.mxu0
      %v489 = vadd.f32 0.0, %v488
      %490 = vmatmul.bf16.gmra.mxu0 %v333
      %v491 = vpop.f32.mrf.mxu0
      %v492 = vadd.f32 0.0, %v491
      %v493 = vpop.f32.mrf.mxu0
      %v494 = vadd.f32 0.0, %v493
      %495 = vdwg.mxu0
      %496 = vmatpush.bf16.msra.mxu0 %v430
      %497 = vmatpush.bf16.msra.mxu0 %v429
      %498 = vmatpush.bf16.msra.mxu0 %v428
      %499 = vmatpush.bf16.msra.mxu0 %v427
      %500 = vmatpush.bf16.msra.mxu0 %v426
      %501 = vmatpush.bf16.msra.mxu0 %v425
      %502 = vmatpush.bf16.msra.mxu0 %v424
      %503 = vmatpush.bf16.msra.mxu0 %v423
      %504 = vmatmul.bf16.gmra.mxu0 %v320
      %v505 = vpop.f32.mrf.mxu0
      %v506 = vadd.f32 %v457, %v505
      %v507 = vpop.f32.mrf.mxu0
      %v508 = vadd.f32 %v459, %v507
      %509 = vmatmul.bf16.gmra.mxu0 %v322
      %v510 = vpop.f32.mrf.mxu0
      %v511 = vadd.f32 %v462, %v510
      %v512 = vpop.f32.mrf.mxu0
      %v513 = vadd.f32 %v464, %v512
      %514 = vmatmul.bf16.gmra.mxu0 %v324
      %v515 = vpop.f32.mrf.mxu0
      %v516 = vadd.f32 %v467, %v515
      %v517 = vpop.f32.mrf.mxu0
      %v518 = vadd.f32 %v469, %v517
      %519 = vmatmul.bf16.gmra.mxu0 %v326
      %v520 = vpop.f32.mrf.mxu0
      %v521 = vadd.f32 %v472, %v520
      %v522 = vpop.f32.mrf.mxu0
      %v523 = vadd.f32 %v474, %v522
      %524 = vmatmul.bf16.gmra.mxu0 %v328
      %v525 = vpop.f32.mrf.mxu0
      %v526 = vadd.f32 %v477, %v525
      %v527 = vpop.f32.mrf.mxu0
      %v528 = vadd.f32 %v479, %v527
      %529 = vmatmul.bf16.gmra.mxu0 %v330
      %v530 = vpop.f32.mrf.mxu0
      %v531 = vadd.f32 %v482, %v530
      %v532 = vpop.f32.mrf.mxu0
      %v533 = vadd.f32 %v484, %v532
      %534 = vmatmul.bf16.gmra.mxu0 %v332
      %v535 = vpop.f32.mrf.mxu0
      %v536 = vadd.f32 %v487, %v535
      %v537 = vpop.f32.mrf.mxu0
      %v538 = vadd.f32 %v489, %v537
      %539 = vmatmul.bf16.gmra.mxu0 %v334
      %v540 = vpop.f32.mrf.mxu0
      %v541 = vadd.f32 %v492, %v540
      %v542 = vpop.f32.mrf.mxu0
      %v543 = vadd.f32 %v494, %v542
      %544 = vdwg.mxu0
      // Predicated region
      $region41: #{discriminator_forward.7} parent=35 // pred_check
        %p545 = pneg %p216
      $region42: #{discriminator_forward.7} parent=35 // pred_check_branch
        %547 = sbr.rel (%p545) target = $region44
      $region43: #{discriminator_forward.7} parent=35 // pred_region
        %v548 = vld [vmem:[#allocation2] sm:$0x1]
        %v549 = vadd.f32 %v506, %v508
        %v550 = vadd.f32 %v549, %v511
        %v551 = vadd.f32 %v550, %v513
        %v552 = vadd.f32 %v551, %v516
        %v553 = vadd.f32 %v552, %v518
        %v554 = vadd.f32 %v553, %v521
        %v555 = vadd.f32 %v554, %v523
        %v556 = vadd.f32 %v555, %v526
        %v557 = vadd.f32 %v556, %v528
        %v558 = vadd.f32 %v557, %v531
        %v559 = vadd.f32 %v558, %v533
        %v560 = vadd.f32 %v559, %v536
        %v561 = vadd.f32 %v560, %v538
        %v562 = vadd.f32 %v561, %v541
        %v563 = vadd.f32 %v562, %v543
        %v564 = vrot.slane %v563, 4
        %v565 = vadd.f32 %v563, %v564
        %v566 = vrot.slane %v565, 2
        %v567 = vadd.f32 %v565, %v566
        %v568 = vrot.slane %v567, 1
        %v569 = vadd.f32 %v567, %v568
        %v570 = vadd.f32 %v548, %v569
        %571 = vst [vmem:[#allocation2] sm:$0x1] %v570
        %v572 = vld [vmem:[#allocation2 + $0x1] sm:$0x1]
        %v573 = vmul.f32 %v506, %v506
        %v574 = vmul.f32 %v508, %v508
        %v575 = vmul.f32 %v511, %v511
        %v576 = vmul.f32 %v513, %v513
        %v577 = vmul.f32 %v516, %v516
        %v578 = vmul.f32 %v518, %v518
        %v579 = vmul.f32 %v521, %v521
        %v580 = vmul.f32 %v523, %v523
        %v581 = vmul.f32 %v526, %v526
        %v582 = vmul.f32 %v528, %v528
        %v583 = vmul.f32 %v531, %v531
        %v584 = vmul.f32 %v533, %v533
        %v585 = vmul.f32 %v536, %v536
        %v586 = vmul.f32 %v538, %v538
        %v587 = vmul.f32 %v541, %v541
        %v588 = vmul.f32 %v543, %v543
        %v589 = vadd.f32 %v573, %v574
        %v590 = vadd.f32 %v589, %v575
        %v591 = vadd.f32 %v590, %v576
        %v592 = vadd.f32 %v591, %v577
        %v593 = vadd.f32 %v592, %v578
        %v594 = vadd.f32 %v593, %v579
        %v595 = vadd.f32 %v594, %v580
        %v596 = vadd.f32 %v595, %v581
        %v597 = vadd.f32 %v596, %v582
        %v598 = vadd.f32 %v597, %v583
        %v599 = vadd.f32 %v598, %v584
        %v600 = vadd.f32 %v599, %v585
        %v601 = vadd.f32 %v600, %v586
        %v602 = vadd.f32 %v601, %v587
        %v603 = vadd.f32 %v602, %v588
        %v604 = vrot.slane %v603, 4
        %v605 = vadd.f32 %v603, %v604
        %v606 = vrot.slane %v605, 2
        %v607 = vadd.f32 %v605, %v606
        %v608 = vrot.slane %v607, 1
        %v609 = vadd.f32 %v607, %v608
        %v610 = vadd.f32 %v572, %v609
        %611 = vst [vmem:[#allocation2 + $0x1] sm:$0x1] %v610
      $region44: #{discriminator_forward.7} parent=35 // pred_fallthru
        _
      %p612 = scmp.eq.s32.totalorder %s19, 1
      // Predicated region
      $region45: #{discriminator_forward.7} parent=35 // pred_check
        %p613 = pneg %p612
      $region46: #{discriminator_forward.7} parent=35 // pred_check_branch
        %615 = sbr.rel (%p613) target = $region48
      $region47: #{discriminator_forward.7} parent=35 // pred_region
        %v616 = vld [vmem:[#allocation2] sm:$0x1]
        %v617 = vmul.f32 %v616, 0.0078125
        %v618 = vld [vmem:[#allocation2 + $0x1] sm:$0x1]
        %v619 = vmul.f32 %v618, 0.0078125
        %v620 = vmul.f32 %v617, %v617
        %v621 = vsub.f32 %v619, %v620
        %v622 = vmax.f32 %v621, 0.0
        %v623 = vperm.slane %v617, 0
        %v624 = vsub.f32 %v506, %v623
        %v625 = vsub.f32 %v508, %v623
        %v626 = vsub.f32 %v511, %v623
        %v627 = vsub.f32 %v513, %v623
        %v628 = vsub.f32 %v516, %v623
        %v629 = vsub.f32 %v518, %v623
        %v630 = vsub.f32 %v521, %v623
        %v631 = vsub.f32 %v523, %v623
        %v632 = vsub.f32 %v526, %v623
        %v633 = vsub.f32 %v528, %v623
        %v634 = vsub.f32 %v531, %v623
        %v635 = vsub.f32 %v533, %v623
        %v636 = vsub.f32 %v536, %v623
        %v637 = vsub.f32 %v538, %v623
        %v638 = vsub.f32 %v541, %v623
        %v639 = vsub.f32 %v543, %v623
        %v640 = vadd.f32 %v622, 1e-05
        %v641 = vrsqrt.pop %v640
        %v642 = vmul.f32 %v641, %v640
        %v643 = vmul.f32 %v642, %v641
        %v644 = vmul.f32 0.5, %v643
        %v645 = vsub.f32 1.5, %v644
        %v646 = vmul.f32 %v641, %v645
        %vm647 = vweird.f32 %v640
        %vm648 = vweird.f32 %v641
        %vm649 = vmor %vm647, %vm648
        %v650 = vsel %vm649, %v641, %v646
        %v651 = vperm.slane %v650, 0
        %v652 = vmul.f32 %v624, %v651
        %v653 = vmul.f32 %v625, %v651
        %v654 = vmul.f32 %v626, %v651
        %v655 = vmul.f32 %v627, %v651
        %v656 = vmul.f32 %v628, %v651
        %v657 = vmul.f32 %v629, %v651
        %v658 = vmul.f32 %v630, %v651
        %v659 = vmul.f32 %v631, %v651
        %v660 = vmul.f32 %v632, %v651
        %v661 = vmul.f32 %v633, %v651
        %v662 = vmul.f32 %v634, %v651
        %v663 = vmul.f32 %v635, %v651
        %v664 = vmul.f32 %v636, %v651
        %v665 = vmul.f32 %v637, %v651
        %v666 = vmul.f32 %v638, %v651
        %v667 = vmul.f32 %v639, %v651
        %v668 = vld [vmem:[%s2] sm:$0x1]
        %v670 = vperm.slane %v668, 0
        %v672 = vmul.f32 %v652, %v670
        %v673 = vmul.f32 %v653, %v670
        %v674 = vmul.f32 %v654, %v670
        %v675 = vmul.f32 %v655, %v670
        %v676 = vmul.f32 %v656, %v670
        %v677 = vmul.f32 %v657, %v670
        %v678 = vmul.f32 %v658, %v670
        %v679 = vmul.f32 %v659, %v670
        %v680 = vmul.f32 %v660, %v670
        %v681 = vmul.f32 %v661, %v670
        %v682 = vmul.f32 %v662, %v670
        %v683 = vmul.f32 %v663, %v670
        %v684 = vmul.f32 %v664, %v670
        %v685 = vmul.f32 %v665, %v670
        %v686 = vmul.f32 %v666, %v670
        %v687 = vmul.f32 %v667, %v670
        %v688 = vld [vmem:[%s3] sm:$0x1]
        %v690 = vperm.slane %v688, 0
        %v692 = vadd.f32 %v672, %v690
        %v693 = vadd.f32 %v673, %v690
        %v694 = vadd.f32 %v674, %v690
        %v695 = vadd.f32 %v675, %v690
        %v696 = vadd.f32 %v676, %v690
        %v697 = vadd.f32 %v677, %v690
        %v698 = vadd.f32 %v678, %v690
        %v699 = vadd.f32 %v679, %v690
        %v700 = vadd.f32 %v680, %v690
        %v701 = vadd.f32 %v681, %v690
        %v702 = vadd.f32 %v682, %v690
        %v703 = vadd.f32 %v683, %v690
        %v704 = vadd.f32 %v684, %v690
        %v705 = vadd.f32 %v685, %v690
        %v706 = vadd.f32 %v686, %v690
        %v707 = vadd.f32 %v687, %v690
        %vm708 = vcmp.ge.f32.partialorder %v692, 0.0
        %vm709 = vcmp.ge.f32.partialorder %v693, 0.0
        %vm710 = vcmp.ge.f32.partialorder %v694, 0.0
        %vm711 = vcmp.ge.f32.partialorder %v695, 0.0
        %vm712 = vcmp.ge.f32.partialorder %v696, 0.0
        %vm713 = vcmp.ge.f32.partialorder %v697, 0.0
        %vm714 = vcmp.ge.f32.partialorder %v698, 0.0
        %vm715 = vcmp.ge.f32.partialorder %v699, 0.0
        %vm716 = vcmp.ge.f32.partialorder %v700, 0.0
        %vm717 = vcmp.ge.f32.partialorder %v701, 0.0
        %vm718 = vcmp.ge.f32.partialorder %v702, 0.0
        %vm719 = vcmp.ge.f32.partialorder %v703, 0.0
        %vm720 = vcmp.ge.f32.partialorder %v704, 0.0
        %vm721 = vcmp.ge.f32.partialorder %v705, 0.0
        %vm722 = vcmp.ge.f32.partialorder %v706, 0.0
        %vm723 = vcmp.ge.f32.partialorder %v707, 0.0
        %v724 = vmul.f32 %v692, 0.2
        %v725 = vmul.f32 %v693, 0.2
        %v726 = vmul.f32 %v694, 0.2
        %v727 = vmul.f32 %v695, 0.2
        %v728 = vmul.f32 %v696, 0.2
        %v729 = vmul.f32 %v697, 0.2
        %v730 = vmul.f32 %v698, 0.2
        %v731 = vmul.f32 %v699, 0.2
        %v732 = vmul.f32 %v700, 0.2
        %v733 = vmul.f32 %v701, 0.2
        %v734 = vmul.f32 %v702, 0.2
        %v735 = vmul.f32 %v703, 0.2
        %v736 = vmul.f32 %v704, 0.2
        %v737 = vmul.f32 %v705, 0.2
        %v738 = vmul.f32 %v706, 0.2
        %v739 = vmul.f32 %v707, 0.2
        %v740 = vsel %vm708, %v692, %v724
        %v741 = vsel %vm709, %v693, %v725
        %v742 = vsel %vm710, %v694, %v726
        %v743 = vsel %vm711, %v695, %v727
        %v744 = vsel %vm712, %v696, %v728
        %v745 = vsel %vm713, %v697, %v729
        %v746 = vsel %vm714, %v698, %v730
        %v747 = vsel %vm715, %v699, %v731
        %v748 = vsel %vm716, %v700, %v732
        %v749 = vsel %vm717, %v701, %v733
        %v750 = vsel %vm718, %v702, %v734
        %v751 = vsel %vm719, %v703, %v735
        %v752 = vsel %vm720, %v704, %v736
        %v753 = vsel %vm721, %v705, %v737
        %v754 = vsel %vm722, %v706, %v738
        %v755 = vsel %vm723, %v707, %v739
        %756 = vst [vmem:[%s214] sm:$0xff] %v740
        %757 = vst [vmem:[%s214 + $0x8] sm:$0xff] %v741
        %758 = vst [vmem:[%s214 + $0x10] sm:$0xff] %v742
        %759 = vst [vmem:[%s214 + $0x18] sm:$0xff] %v743
        %760 = vst [vmem:[%s214 + $0x20] sm:$0xff] %v744
        %761 = vst [vmem:[%s214 + $0x28] sm:$0xff] %v745
        %762 = vst [vmem:[%s214 + $0x30] sm:$0xff] %v746
        %763 = vst [vmem:[%s214 + $0x38] sm:$0xff] %v747
        %764 = vst [vmem:[%s214 + $0x40] sm:$0xff] %v748
        %765 = vst [vmem:[%s214 + $0x48] sm:$0xff] %v749
        %766 = vst [vmem:[%s214 + $0x50] sm:$0xff] %v750
        %767 = vst [vmem:[%s214 + $0x58] sm:$0xff] %v751
        %768 = vst [vmem:[%s214 + $0x60] sm:$0xff] %v752
        %769 = vst [vmem:[%s214 + $0x68] sm:$0xff] %v753
        %770 = vst [vmem:[%s214 + $0x70] sm:$0xff] %v754
        %771 = vst [vmem:[%s214 + $0x78] sm:$0xff] %v755
      $region48: #{discriminator_forward.7} parent=35 // pred_fallthru
        _
      %s772 = smul.u32 16, %s20
      %p773 = scmp.lt.s32.totalorder %s772, 15
      %s774 = scalar_select %p773, %s772, 15
      %s775 = smul.addr %s774, 8
      %s776 = scalar_lea.vmem %s4, %s775
      // Predicated region
      $region49: #{discriminator_forward.7} parent=35 // pred_check
        %p777 = pneg %p134
      $region50: #{discriminator_forward.7} parent=35 // pred_check_branch
        %779 = sbr.rel (%p777) target = $region52
      $region51: #{discriminator_forward.7} parent=35 // pred_region
        %s780 = smul.u32 16, %s20
      $region52: #{discriminator_forward.7} parent=35 // pred_fallthru
        _
      // Predicated region
      $region53: #{discriminator_forward.7} parent=35 // pred_check
        %p781 = pneg %p134
      $region54: #{discriminator_forward.7} parent=35 // pred_check_branch
        %783 = sbr.rel (%p781) target = $region56
      $region55: #{discriminator_forward.7} parent=35 // pred_region
        %s784 = smul.u32 16, %s20
        %p785 = scmp.lt.s32.totalorder %s784, 15
        %s786 = scalar_select %p785, %s784, 15
        %s787 = smul.addr %s786, 8
        %s788 = scalar_lea.vmem %s4, %s787
      $region56: #{discriminator_forward.7} parent=35 // pred_fallthru
        _
    $region36: #{discriminator_forward.7} parent=5 // pred_fallthru
      _
    %p789 = scmp.le.s32.totalorder 2, %s10
    // Predicated region
    $region57: #{discriminator_forward.7} parent=5 // pred_check
      %p790 = pneg %p789
    $region58: #{discriminator_forward.7} parent=5 // pred_check_branch
      %792 = sbr.rel (%p790) target = $region60
    $region59: #{discriminator_forward.7} parent=5 // pred_region
      %s793 = ssub.s32 %s10, 2
    $region60: #{discriminator_forward.7} parent=5 // pred_fallthru
      _
  $region6: #{discriminator_forward.7} parent=0 // loop_footer
    %s14 = sadd.s32 1, %s10
  $region7: #{discriminator_forward.7} parent=0 // loop_footer_branch
    %9 = sbr.rel target = $region3
  $region8: #{discriminator_forward.7} parent=0 // loop_exit
    _

// kernel: discriminator_forward.8
$region0: #{discriminator_forward.8}
  #allocation0 [shape = 'u32[]', space=smem, size = 0x4, offset = 0x4, fixed_abs, tag = 'smem constant byte address 0x4 - core index']
  #allocation1 [shape = 'u32[72,128]{1,0:T(1,128)}', space=vmem, size = 0x9000, scoped, tag = 'internal scratch']
  #allocation2 [shape = 'f32[2,128]{1,0:T(2,128)}', space=vmem, size = 0x400, scoped, tag = 'scratch operand']
  %s0 = inlined_call_operand.vmem [shape: bf16[32,512], index: 0, kind: input, shape index: {}]
  %s1 = inlined_call_operand.vmem [shape: bf16[512,128], index: 1, kind: input, shape index: {}]
  %s2 = inlined_call_operand.vmem [shape: f32[1,128], index: 2, kind: input, shape index: {}]
  %s3 = inlined_call_operand.vmem [shape: f32[1,128], index: 3, kind: input, shape index: {}]
  %s4 = inlined_call_operand.vmem [shape: f32[32,128], index: 4, kind: output, shape index: {}]
  %s5 = sld [smem:[#allocation0]]
  $region61: #{discriminator_forward.8} parent=0
    _
  %s7 = ssub.s32 1, %s5
  %s8 = scalar_select 0, %s7, %s5
  loop: start=0, step=1, limit=4
  $region2: #{discriminator_forward.8} parent=0 // loop_pre_header
    _
  $region3: #{discriminator_forward.8} parent=0 // loop_header
    %s10 = sphi 0, %s14
    %p11 = scmp.ge.s32.totalorder %s10, 4
    %s17 = sphi 0, %s29
    %s18 = sphi 0, %s25
    %s19 = sphi 0, %s17
    %s20 = sphi 0, %s18
    %s21 = sphi 0, %s19
    %s22 = sphi 0, %s20
    %s32 = sphi 0, %s34
    %s35 = sphi 0, %s32
    %s36 = sphi 0, %s35
    %s52 = sphi 0, %s36
    %s56 = sphi 0, %s56
    %s58 = sphi 0, %s56
    %s59 = sphi 0, %s58
    %s73 = sphi 0, %s59
    %s77 = sphi 0, %s77
    %s79 = sphi 0, %s77
    %s80 = sphi 0, %s79
    %s94 = sphi 0, %s80
    %s98 = sphi 0, %s98
    %s100 = sphi 0, %s98
    %s101 = sphi 0, %s100
    %s115 = sphi 0, %s101
    %s121 = sphi 0, %s123
    %s124 = sphi 0, %s121
    %s125 = sphi 0, %s124
    %s141 = sphi 0, %s125
  $region4: #{discriminator_forward.8} parent=0 // loop_header_branch
    %13 = sbr.rel (%p11) target = $region8
  $region5: #{discriminator_forward.8} parent=0 // loop_body
    %s15 = ssub.s32 %s10, 1
    %s16 = ssub.s32 %s10, 2
    %s23 = sadd.s32 1, %s18
    %p24 = scmp.ge.s32.totalorder %s23, 1
    %s25 = scalar_select %p24, 0, %s23
    %s26 = sadd.s32 1, %s17
    %s27 = scalar_select %p24, %s26, %s17
    %p28 = scmp.ge.s32.totalorder %s27, 2
    %s29 = scalar_select %p28, 0, %s27
    %s30 = ssub.s32 %s18, %s25
    %p31 = scmp.eq.s32.totalorder %s30, 0
    %s33 = sadd.s32 %s32, 1
    %s34 = scalar_select %p31, %s32, %s33
    %p37 = pneg %p31
    %p38 = scmp.eq.s32.totalorder %s10, 1
    %p39 = por %p37, %p38
    %p40 = scmp.ne.s32.totalorder %s32, %s35
    %p41 = scmp.eq.s32.totalorder %s10, 0
    %p42 = por %p40, %p41
    %p43 = scmp.ne.s32.totalorder %s32, %s35
    %p44 = scmp.eq.s32.totalorder %s15, 1
    %p45 = por %p43, %p44
    %p46 = scmp.ne.s32.totalorder %s35, %s36
    %p47 = scmp.eq.s32.totalorder %s15, 0
    %p48 = por %p46, %p47
    %p49 = scmp.ne.s32.totalorder %s35, %s36
    %p50 = scmp.eq.s32.totalorder %s16, 1
    %p51 = por %p49, %p50
    %p53 = scmp.ne.s32.totalorder %s36, %s52
    %p54 = scmp.eq.s32.totalorder %s16, 0
    %p55 = por %p53, %p54
    %s57 = sadd.s32 %s56, 1
    %p60 = scmp.eq.s32.totalorder %s10, 1
    %p61 = scmp.ne.s32.totalorder %s56, %s58
    %p62 = scmp.eq.s32.totalorder %s10, 0
    %p63 = por %p61, %p62
    %p64 = scmp.ne.s32.totalorder %s56, %s58
    %p65 = scmp.eq.s32.totalorder %s15, 1
    %p66 = por %p64, %p65
    %p67 = scmp.ne.s32.totalorder %s58, %s59
    %p68 = scmp.eq.s32.totalorder %s15, 0
    %p69 = por %p67, %p68
    %p70 = scmp.ne.s32.totalorder %s58, %s59
    %p71 = scmp.eq.s32.totalorder %s16, 1
    %p72 = por %p70, %p71
    %p74 = scmp.ne.s32.totalorder %s59, %s73
    %p75 = scmp.eq.s32.totalorder %s16, 0
    %p76 = por %p74, %p75
    %s78 = sadd.s32 %s77, 1
    %p81 = scmp.eq.s32.totalorder %s10, 1
    %p82 = scmp.ne.s32.totalorder %s77, %s79
    %p83 = scmp.eq.s32.totalorder %s10, 0
    %p84 = por %p82, %p83
    %p85 = scmp.ne.s32.totalorder %s77, %s79
    %p86 = scmp.eq.s32.totalorder %s15, 1
    %p87 = por %p85, %p86
    %p88 = scmp.ne.s32.totalorder %s79, %s80
    %p89 = scmp.eq.s32.totalorder %s15, 0
    %p90 = por %p88, %p89
    %p91 = scmp.ne.s32.totalorder %s79, %s80
    %p92 = scmp.eq.s32.totalorder %s16, 1
    %p93 = por %p91, %p92
    %p95 = scmp.ne.s32.totalorder %s80, %s94
    %p96 = scmp.eq.s32.totalorder %s16, 0
    %p97 = por %p95, %p96
    %s99 = sadd.s32 %s98, 1
    %p102 = scmp.eq.s32.totalorder %s10, 1
    %p103 = scmp.ne.s32.totalorder %s98, %s100
    %p104 = scmp.eq.s32.totalorder %s10, 0
    %p105 = por %p103, %p104
    %p106 = scmp.ne.s32.totalorder %s98, %s100
    %p107 = scmp.eq.s32.totalorder %s15, 1
    %p108 = por %p106, %p107
    %p109 = scmp.ne.s32.totalorder %s100, %s101
    %p110 = scmp.eq.s32.totalorder %s15, 0
    %p111 = por %p109, %p110
    %p112 = scmp.ne.s32.totalorder %s100, %s101
    %p113 = scmp.eq.s32.totalorder %s16, 1
    %p114 = por %p112, %p113
    %p116 = scmp.ne.s32.totalorder %s101, %s115
    %p117 = scmp.eq.s32.totalorder %s16, 0
    %p118 = por %p116, %p117
    %s119 = ssub.s32 %s18, %s25
    %p120 = scmp.eq.s32.totalorder %s119, 0
    %s122 = sadd.s32 %s121, 1
    %s123 = scalar_select %p120, %s121, %s122
    %p126 = pneg %p120
    %p127 = scmp.eq.s32.totalorder %s10, 1
    %p128 = por %p126, %p127
    %p129 = scmp.ne.s32.totalorder %s121, %s124
    %p130 = scmp.eq.s32.totalorder %s10, 0
    %p131 = por %p129, %p130
    %p132 = scmp.ne.s32.totalorder %s121, %s124
    %p133 = scmp.eq.s32.totalorder %s15, 1
    %p134 = por %p132, %p133
    %p135 = scmp.ne.s32.totalorder %s124, %s125
    %p136 = scmp.eq.s32.totalorder %s15, 0
    %p137 = por %p135, %p136
    %p138 = scmp.ne.s32.totalorder %s124, %s125
    %p139 = scmp.eq.s32.totalorder %s16, 1
    %p140 = por %p138, %p139
    %p142 = scmp.ne.s32.totalorder %s125, %s141
    %p143 = scmp.eq.s32.totalorder %s16, 0
    %p144 = por %p142, %p143
    %p145 = scmp.le.s32.totalorder 1, %s10
    %p146 = scmp.lt.s32.totalorder %s10, 3
    %p147 = pnand %p145, %p146
    %p148 = pneg %p147
    // Predicated region
    $region9: #{discriminator_forward.8} parent=5 // pred_check
      _
    $region10: #{discriminator_forward.8} parent=5 // pred_check_branch
      %150 = sbr.rel (%p147) target = $region12
    $region11: #{discriminator_forward.8} parent=5 // pred_region
      %s151 = ssub.s32 %s10, 1
      // Predicated region
      $region13: #{discriminator_forward.8} parent=11 // pred_check
        %p152 = pneg %p48
      $region14: #{discriminator_forward.8} parent=11 // pred_check_branch
        %154 = sbr.rel (%p152) target = $region16
      $region15: #{discriminator_forward.8} parent=11 // pred_region
        %s155 = smul.u32 4, %s20
        %p156 = scmp.lt.s32.totalorder %s155, 3
        %s157 = scalar_select %p156, %s155, 3
        %s158 = smul.addr %s157, 4
        %s159 = smul.addr %s158, 4
        %s160 = scalar_lea.vmem %s0, %s159
        %s161 = smul.u32 4, %s20
      $region16: #{discriminator_forward.8} parent=11 // pred_fallthru
        _
      // Predicated region
      $region17: #{discriminator_forward.8} parent=11 // pred_check
        %p162 = pneg %p69
      $region18: #{discriminator_forward.8} parent=11 // pred_check_branch
        %164 = sbr.rel (%p162) target = $region20
      $region19: #{discriminator_forward.8} parent=11 // pred_region
        _
      $region20: #{discriminator_forward.8} parent=11 // pred_fallthru
        _
      // Predicated region
      $region21: #{discriminator_forward.8} parent=11 // pred_check
        %p165 = pneg %p90
      $region22: #{discriminator_forward.8} parent=11 // pred_check_branch
        %167 = sbr.rel (%p165) target = $region24
      $region23: #{discriminator_forward.8} parent=11 // pred_region
        _
      $region24: #{discriminator_forward.8} parent=11 // pred_fallthru
        _
      // Predicated region
      $region25: #{discriminator_forward.8} parent=11 // pred_check
        %p168 = pneg %p111
      $region26: #{discriminator_forward.8} parent=11 // pred_check_branch
        %170 = sbr.rel (%p168) target = $region28
      $region27: #{discriminator_forward.8} parent=11 // pred_region
        _
      $region28: #{discriminator_forward.8} parent=11 // pred_fallthru
        _
    $region12: #{discriminator_forward.8} parent=5 // pred_fallthru
      _
    %p171 = scmp.lt.s32.totalorder %s10, 2
    // Predicated region
    $region29: #{discriminator_forward.8} parent=5 // pred_check
      %p172 = pneg %p171
    $region30: #{discriminator_forward.8} parent=5 // pred_check_branch
      %174 = sbr.rel (%p172) target = $region32
    $region31: #{discriminator_forward.8} parent=5 // pred_region
      _
    $region32: #{discriminator_forward.8} parent=5 // pred_fallthru
      _
    %p175 = scmp.le.s32.totalorder 1, %s10
    %p176 = scmp.lt.s32.totalorder %s10, 3
    %p177 = pnand %p175, %p176
    %p178 = pneg %p177
    // Predicated region
    $region33: #{discriminator_forward.8} parent=5 // pred_check
      _
    $region34: #{discriminator_forward.8} parent=5 // pred_check_branch
      %180 = sbr.rel (%p177) target = $region36
    $region35: #{discriminator_forward.8} parent=5 // pred_region
      %s181 = ssub.s32 %s10, 1
      %s182 = smul.u32 4, %s20
      %p183 = scmp.lt.s32.totalorder %s182, 3
      %s184 = scalar_select %p183, %s182, 3
      %s185 = smul.addr %s184, 4
      %s186 = smul.addr %s185, 4
      %s187 = scalar_lea.vmem %s0, %s186
      %p188 = pneg %p48
      %p189 = pneg %p45
      %p190 = pneg %p69
      %p191 = pneg %p66
      %p192 = pneg %p90
      %p193 = pneg %p87
      %p194 = pneg %p111
      %p195 = pneg %p108
      %p196 = pneg %p137
      %p197 = pneg %p134
      %s198 = smul.u32 4, %s20
      %p199 = scmp.lt.s32.totalorder %s198, 3
      %s200 = scalar_select %p199, %s198, 3
      %s201 = smul.addr %s200, 8
      %s202 = scalar_lea.vmem %s4, %s201
      %s203 = smul.u32 4, %s20
      %p204 = scmp.lt.s32.totalorder %s203, 3
      %s205 = scalar_select %p204, %s203, 3
      %s206 = smul.addr %s205, 4
      %s207 = smul.addr %s206, 4
      %s208 = scalar_lea.vmem %s0, %s207
      %s209 = smul.u32 4, %s20
      %s210 = smul.u32 4, %s20
      %p211 = scmp.lt.s32.totalorder %s210, 3
      %s212 = scalar_select %p211, %s210, 3
      %s213 = smul.addr %s212, 8
      %s214 = scalar_lea.vmem %s4, %s213
      %s215 = smul.u32 4, %s20
      %p216 = scmp.eq.s32.totalorder %s19, 0
      %p217 = scmp.eq.s32.totalorder %s20, 0
      %p218 = pnand %p216, %p217
      %p219 = pneg %p218
      // Predicated region
      $region37: #{discriminator_forward.8} parent=35 // pred_check
        _
      $region38: #{discriminator_forward.8} parent=35 // pred_check_branch
        %221 = sbr.rel (%p218) target = $region40
      $region39: #{discriminator_forward.8} parent=35 // pred_region
        %222 = vst [vmem:[#allocation2] sm:$0x3] 0.0
      $region40: #{discriminator_forward.8} parent=35 // pred_fallthru
        _
      %v223 = vld [vmem:[%s208] sm:$0xff]
      %v224 = vld [vmem:[%s208 + $0x8] sm:$0xff]
      %v225 = vld [vmem:[%s208 + $0x10] sm:$0xff]
      %v226 = vld [vmem:[%s208 + $0x18] sm:$0xff]
      %v227 = vld [vmem:[%s208 + $0x20] sm:$0xff]
      %v228 = vld [vmem:[%s208 + $0x28] sm:$0xff]
      %v229 = vld [vmem:[%s208 + $0x30] sm:$0xff]
      %v230 = vld [vmem:[%s208 + $0x38] sm:$0xff]
      %v231 = vld [vmem:[%s1] sm:$0xf]
      %v232 = vld [vmem:[%s1 + $0x4] sm:$0xf]
      %v233 = vld [vmem:[%s1 + $0x8] sm:$0xf]
      %v234 = vld [vmem:[%s1 + $0xc] sm:$0xf]
      %v235 = vld [vmem:[%s1 + $0x10] sm:$0xf]
      %v236 = vld [vmem:[%s1 + $0x14] sm:$0xf]
      %v237 = vld [vmem:[%s1 + $0x18] sm:$0xf]
      %v238 = vld [vmem:[%s1 + $0x1c] sm:$0xf]
      %v239 = vld [vmem:[%s1 + $0x20] sm:$0xf]
      %v240 = vld [vmem:[%s1 + $0x24] sm:$0xf]
      %v241 = vld [vmem:[%s1 + $0x28] sm:$0xf]
      %v242 = vld [vmem:[%s1 + $0x2c] sm:$0xf]
      %v243 = vld [vmem:[%s1 + $0x30] sm:$0xf]
      %v244 = vld [vmem:[%s1 + $0x34] sm:$0xf]
      %v245 = vld [vmem:[%s1 + $0x38] sm:$0xf]
      %v246 = vld [vmem:[%s1 + $0x3c] sm:$0xf]
      %v247 = vld [vmem:[%s1 + $0x40] sm:$0xf]
      %v248 = vld [vmem:[%s1 + $0x44] sm:$0xf]
      %v249 = vld [vmem:[%s1 + $0x48] sm:$0xf]
      %v250 = vld [vmem:[%s1 + $0x4c] sm:$0xf]
      %v251 = vld [vmem:[%s1 + $0x50] sm:$0xf]
      %v252 = vld [vmem:[%s1 + $0x54] sm:$0xf]
      %v253 = vld [vmem:[%s1 + $0x58] sm:$0xf]
      %v254 = vld [vmem:[%s1 + $0x5c] sm:$0xf]
      %v255 = vld [vmem:[%s1 + $0x60] sm:$0xf]
      %v256 = vld [vmem:[%s1 + $0x64] sm:$0xf]
      %v257 = vld [vmem:[%s1 + $0x68] sm:$0xf]
      %v258 = vld [vmem:[%s1 + $0x6c] sm:$0xf]
      %v259 = vld [vmem:[%s1 + $0x70] sm:$0xf]
      %v260 = vld [vmem:[%s1 + $0x74] sm:$0xf]
      %v261 = vld [vmem:[%s1 + $0x78] sm:$0xf]
      %v262 = vld [vmem:[%s1 + $0x7c] sm:$0xf]
      %v263 = vld [vmem:[%s1 + $0x80] sm:$0xf]
      %v264 = vld [vmem:[%s1 + $0x84] sm:$0xf]
      %v265 = vld [vmem:[%s1 + $0x88] sm:$0xf]
      %v266 = vld [vmem:[%s1 + $0x8c] sm:$0xf]
      %v267 = vld [vmem:[%s1 + $0x90] sm:$0xf]
      %v268 = vld [vmem:[%s1 + $0x94] sm:$0xf]
      %v269 = vld [vmem:[%s1 + $0x98] sm:$0xf]
      %v270 = vld [vmem:[%s1 + $0x9c] sm:$0xf]
      %v271 = vld [vmem:[%s1 + $0xa0] sm:$0xf]
      %v272 = vld [vmem:[%s1 + $0xa4] sm:$0xf]
      %v273 = vld [vmem:[%s1 + $0xa8] sm:$0xf]
      %v274 = vld [vmem:[%s1 + $0xac] sm:$0xf]
      %v275 = vld [vmem:[%s1 + $0xb0] sm:$0xf]
      %v276 = vld [vmem:[%s1 + $0xb4] sm:$0xf]
      %v277 = vld [vmem:[%s1 + $0xb8] sm:$0xf]
      %v278 = vld [vmem:[%s1 + $0xbc] sm:$0xf]
      %v279 = vld [vmem:[%s1 + $0xc0] sm:$0xf]
      %v280 = vld [vmem:[%s1 + $0xc4] sm:$0xf]
      %v281 = vld [vmem:[%s1 + $0xc8] sm:$0xf]
      %v282 = vld [vmem:[%s1 + $0xcc] sm:$0xf]
      %v283 = vld [vmem:[%s1 + $0xd0] sm:$0xf]
      %v284 = vld [vmem:[%s1 + $0xd4] sm:$0xf]
      %v285 = vld [vmem:[%s1 + $0xd8] sm:$0xf]
      %v286 = vld [vmem:[%s1 + $0xdc] sm:$0xf]
      %v287 = vld [vmem:[%s1 + $0xe0] sm:$0xf]
      %v288 = vld [vmem:[%s1 + $0xe4] sm:$0xf]
      %v289 = vld [vmem:[%s1 + $0xe8] sm:$0xf]
      %v290 = vld [vmem:[%s1 + $0xec] sm:$0xf]
      %v291 = vld [vmem:[%s1 + $0xf0] sm:$0xf]
      %v292 = vld [vmem:[%s1 + $0xf4] sm:$0xf]
      %v293 = vld [vmem:[%s1 + $0xf8] sm:$0xf]
      %v294 = vld [vmem:[%s1 + $0xfc] sm:$0xf]
      %v303 = vunpack.c.l.b16 %v223
      %v304 = vunpack.c.h.b16 %v223
      %v305 = vunpack.c.l.b16 %v224
      %v306 = vunpack.c.h.b16 %v224
      %v307 = vunpack.c.l.b16 %v225
      %v308 = vunpack.c.h.b16 %v225
      %v309 = vunpack.c.l.b16 %v226
      %v310 = vunpack.c.h.b16 %v226
      %v311 = vunpack.c.l.b16 %v227
      %v312 = vunpack.c.h.b16 %v227
      %v313 = vunpack.c.l.b16 %v228
      %v314 = vunpack.c.h.b16 %v228
      %v315 = vunpack.c.l.b16 %v229
      %v316 = vunpack.c.h.b16 %v229
      %v317 = vunpack.c.l.b16 %v230
      %v318 = vunpack.c.h.b16 %v230
      %v319 = vpack.c.b16 %v307, %v303
      %v320 = vpack.c.b16 %v308, %v304
      %v321 = vpack.c.b16 %v309, %v305
      %v322 = vpack.c.b16 %v310, %v306
      %v323 = vpack.c.b16 %v315, %v311
      %v324 = vpack.c.b16 %v316, %v312
      %v325 = vpack.c.b16 %v317, %v313
      %v326 = vpack.c.b16 %v318, %v314
      %v399 = vunpack.c.l.b16 %v231
      %v400 = vunpack.c.l.b16 %v232
      %v401 = vunpack.c.l.b16 %v233
      %v402 = vunpack.c.l.b16 %v234
      %v403 = vunpack.c.l.b16 %v235
      %v404 = vunpack.c.l.b16 %v236
      %v405 = vunpack.c.l.b16 %v237
      %v406 = vunpack.c.l.b16 %v238
      %v407 = vunpack.c.l.b16 %v239
      %v408 = vunpack.c.l.b16 %v240
      %v409 = vunpack.c.l.b16 %v241
      %v410 = vunpack.c.l.b16 %v242
      %v411 = vunpack.c.l.b16 %v243
      %v412 = vunpack.c.l.b16 %v244
      %v413 = vunpack.c.l.b16 %v245
      %v414 = vunpack.c.l.b16 %v246
      %v415 = vunpack.c.l.b16 %v247
      %v416 = vunpack.c.l.b16 %v248
      %v417 = vunpack.c.l.b16 %v249
      %v418 = vunpack.c.l.b16 %v250
      %v419 = vunpack.c.l.b16 %v251
      %v420 = vunpack.c.l.b16 %v252
      %v421 = vunpack.c.l.b16 %v253
      %v422 = vunpack.c.l.b16 %v254
      %v423 = vunpack.c.l.b16 %v255
      %v424 = vunpack.c.l.b16 %v256
      %v425 = vunpack.c.l.b16 %v257
      %v426 = vunpack.c.l.b16 %v258
      %v427 = vunpack.c.l.b16 %v259
      %v428 = vunpack.c.l.b16 %v260
      %v429 = vunpack.c.l.b16 %v261
      %v430 = vunpack.c.l.b16 %v262
      %v431 = vunpack.c.l.b16 %v263
      %v432 = vunpack.c.l.b16 %v264
      %v433 = vunpack.c.l.b16 %v265
      %v434 = vunpack.c.l.b16 %v266
      %v435 = vunpack.c.l.b16 %v267
      %v436 = vunpack.c.l.b16 %v268
      %v437 = vunpack.c.l.b16 %v269
      %v438 = vunpack.c.l.b16 %v270
      %v439 = vunpack.c.l.b16 %v271
      %v440 = vunpack.c.l.b16 %v272
      %v441 = vunpack.c.l.b16 %v273
      %v442 = vunpack.c.l.b16 %v274
      %v443 = vunpack.c.l.b16 %v275
      %v444 = vunpack.c.l.b16 %v276
      %v445 = vunpack.c.l.b16 %v277
      %v446 = vunpack.c.l.b16 %v278
      %v447 = vunpack.c.l.b16 %v279
      %v448 = vunpack.c.l.b16 %v280
      %v449 = vunpack.c.l.b16 %v281
      %v450 = vunpack.c.l.b16 %v282
      %v451 = vunpack.c.l.b16 %v283
      %v452 = vunpack.c.l.b16 %v284
      %v453 = vunpack.c.l.b16 %v285
      %v454 = vunpack.c.l.b16 %v286
      %v455 = vunpack.c.l.b16 %v287
      %v456 = vunpack.c.l.b16 %v288
      %v457 = vunpack.c.l.b16 %v289
      %v458 = vunpack.c.l.b16 %v290
      %v459 = vunpack.c.l.b16 %v291
      %v460 = vunpack.c.l.b16 %v292
      %v461 = vunpack.c.l.b16 %v293
      %v462 = vunpack.c.l.b16 %v294
      %v463 = vpack.c.b16 %v400, %v399
      %v464 = vpack.c.b16 %v402, %v401
      %v465 = vpack.c.b16 %v404, %v403
      %v466 = vpack.c.b16 %v406, %v405
      %v467 = vpack.c.b16 %v408, %v407
      %v468 = vpack.c.b16 %v410, %v409
      %v469 = vpack.c.b16 %v412, %v411
      %v470 = vpack.c.b16 %v414, %v413
      %v471 = vpack.c.b16 %v416, %v415
      %v472 = vpack.c.b16 %v418, %v417
      %v473 = vpack.c.b16 %v420, %v419
      %v474 = vpack.c.b16 %v422, %v421
      %v475 = vpack.c.b16 %v424, %v423
      %v476 = vpack.c.b16 %v426, %v425
      %v477 = vpack.c.b16 %v428, %v427
      %v478 = vpack.c.b16 %v430, %v429
      %v479 = vpack.c.b16 %v432, %v431
      %v480 = vpack.c.b16 %v434, %v433
      %v481 = vpack.c.b16 %v436, %v435
      %v482 = vpack.c.b16 %v438, %v437
      %v483 = vpack.c.b16 %v440, %v439
      %v484 = vpack.c.b16 %v442, %v441
      %v485 = vpack.c.b16 %v444, %v443
      %v486 = vpack.c.b16 %v446, %v445
      %v487 = vpack.c.b16 %v448, %v447
      %v488 = vpack.c.b16 %v450, %v449
      %v489 = vpack.c.b16 %v452, %v451
      %v490 = vpack.c.b16 %v454, %v453
      %v491 = vpack.c.b16 %v456, %v455
      %v492 = vpack.c.b16 %v458, %v457
      %v493 = vpack.c.b16 %v460, %v459
      %v494 = vpack.c.b16 %v462, %v461
      %527 = vmatpush.bf16.msra.mxu0 %v470
      %528 = vmatpush.bf16.msra.mxu0 %v469
      %529 = vmatpush.bf16.msra.mxu0 %v468
      %530 = vmatpush.bf16.msra.mxu0 %v467
      %531 = vmatpush.bf16.msra.mxu0 %v466
      %532 = vmatpush.bf16.msra.mxu0 %v465
      %533 = vmatpush.bf16.msra.mxu0 %v464
      %534 = vmatpush.bf16.msra.mxu0 %v463
      %535 = vmatmul.bf16.gmra.mxu0 %v319
      %v536 = vpop.f32.mrf.mxu0
      %v537 = vadd.f32 0.0, %v536
      %v538 = vpop.f32.mrf.mxu0
      %v539 = vadd.f32 0.0, %v538
      %540 = vmatmul.bf16.gmra.mxu0 %v323
      %v541 = vpop.f32.mrf.mxu0
      %v542 = vadd.f32 0.0, %v541
      %v543 = vpop.f32.mrf.mxu0
      %v544 = vadd.f32 0.0, %v543
      %545 = vdwg.mxu0
      %546 = vmatpush.bf16.msra.mxu0 %v478
      %547 = vmatpush.bf16.msra.mxu0 %v477
      %548 = vmatpush.bf16.msra.mxu0 %v476
      %549 = vmatpush.bf16.msra.mxu0 %v475
      %550 = vmatpush.bf16.msra.mxu0 %v474
      %551 = vmatpush.bf16.msra.mxu0 %v473
      %552 = vmatpush.bf16.msra.mxu0 %v472
      %553 = vmatpush.bf16.msra.mxu0 %v471
      %554 = vmatmul.bf16.gmra.mxu0 %v320
      %v555 = vpop.f32.mrf.mxu0
      %v556 = vadd.f32 %v537, %v555
      %v557 = vpop.f32.mrf.mxu0
      %v558 = vadd.f32 %v539, %v557
      %559 = vmatmul.bf16.gmra.mxu0 %v324
      %v560 = vpop.f32.mrf.mxu0
      %v561 = vadd.f32 %v542, %v560
      %v562 = vpop.f32.mrf.mxu0
      %v563 = vadd.f32 %v544, %v562
      %564 = vdwg.mxu0
      %565 = vmatpush.bf16.msra.mxu0 %v486
      %566 = vmatpush.bf16.msra.mxu0 %v485
      %567 = vmatpush.bf16.msra.mxu0 %v484
      %568 = vmatpush.bf16.msra.mxu0 %v483
      %569 = vmatpush.bf16.msra.mxu0 %v482
      %570 = vmatpush.bf16.msra.mxu0 %v481
      %571 = vmatpush.bf16.msra.mxu0 %v480
      %572 = vmatpush.bf16.msra.mxu0 %v479
      %573 = vmatmul.bf16.gmra.mxu0 %v321
      %v574 = vpop.f32.mrf.mxu0
      %v575 = vadd.f32 %v556, %v574
      %v576 = vpop.f32.mrf.mxu0
      %v577 = vadd.f32 %v558, %v576
      %578 = vmatmul.bf16.gmra.mxu0 %v325
      %v579 = vpop.f32.mrf.mxu0
      %v580 = vadd.f32 %v561, %v579
      %v581 = vpop.f32.mrf.mxu0
      %v582 = vadd.f32 %v563, %v581
      %583 = vdwg.mxu0
      %584 = vmatpush.bf16.msra.mxu0 %v494
      %585 = vmatpush.bf16.msra.mxu0 %v493
      %586 = vmatpush.bf16.msra.mxu0 %v492
      %587 = vmatpush.bf16.msra.mxu0 %v491
      %588 = vmatpush.bf16.msra.mxu0 %v490
      %589 = vmatpush.bf16.msra.mxu0 %v489
      %590 = vmatpush.bf16.msra.mxu0 %v488
      %591 = vmatpush.bf16.msra.mxu0 %v487
      %592 = vmatmul.bf16.gmra.mxu0 %v322
      %v593 = vpop.f32.mrf.mxu0
      %v594 = vadd.f32 %v575, %v593
      %v595 = vpop.f32.mrf.mxu0
      %v596 = vadd.f32 %v577, %v595
      %597 = vmatmul.bf16.gmra.mxu0 %v326
      %v598 = vpop.f32.mrf.mxu0
      %v599 = vadd.f32 %v580, %v598
      %v600 = vpop.f32.mrf.mxu0
      %v601 = vadd.f32 %v582, %v600
      %602 = vdwg.mxu0
      // Predicated region
      $region41: #{discriminator_forward.8} parent=35 // pred_check
        %p603 = pneg %p216
      $region42: #{discriminator_forward.8} parent=35 // pred_check_branch
        %605 = sbr.rel (%p603) target = $region44
      $region43: #{discriminator_forward.8} parent=35 // pred_region
        %v606 = vld [vmem:[#allocation2] sm:$0x1]
        %v607 = vadd.f32 %v594, %v596
        %v608 = vadd.f32 %v607, %v599
        %v609 = vadd.f32 %v608, %v601
        %v610 = vrot.slane %v609, 4
        %v611 = vadd.f32 %v609, %v610
        %v612 = vrot.slane %v611, 2
        %v613 = vadd.f32 %v611, %v612
        %v614 = vrot.slane %v613, 1
        %v615 = vadd.f32 %v613, %v614
        %v616 = vadd.f32 %v606, %v615
        %617 = vst [vmem:[#allocation2] sm:$0x1] %v616
        %v618 = vld [vmem:[#allocation2 + $0x1] sm:$0x1]
        %v619 = vmul.f32 %v594, %v594
        %v620 = vmul.f32 %v596, %v596
        %v621 = vmul.f32 %v599, %v599
        %v622 = vmul.f32 %v601, %v601
        %v623 = vadd.f32 %v619, %v620
        %v624 = vadd.f32 %v623, %v621
        %v625 = vadd.f32 %v624, %v622
        %v626 = vrot.slane %v625, 4
        %v627 = vadd.f32 %v625, %v626
        %v628 = vrot.slane %v627, 2
        %v629 = vadd.f32 %v627, %v628
        %v630 = vrot.slane %v629, 1
        %v631 = vadd.f32 %v629, %v630
        %v632 = vadd.f32 %v618, %v631
        %633 = vst [vmem:[#allocation2 + $0x1] sm:$0x1] %v632
      $region44: #{discriminator_forward.8} parent=35 // pred_fallthru
        _
      %p634 = scmp.eq.s32.totalorder %s19, 1
      // Predicated region
      $region45: #{discriminator_forward.8} parent=35 // pred_check
        %p635 = pneg %p634
      $region46: #{discriminator_forward.8} parent=35 // pred_check_branch
        %637 = sbr.rel (%p635) target = $region48
      $region47: #{discriminator_forward.8} parent=35 // pred_region
        %v638 = vld [vmem:[#allocation2] sm:$0x1]
        %v639 = vmul.f32 %v638, 0.03125
        %v640 = vld [vmem:[#allocation2 + $0x1] sm:$0x1]
        %v641 = vmul.f32 %v640, 0.03125
        %v642 = vmul.f32 %v639, %v639
        %v643 = vsub.f32 %v641, %v642
        %v644 = vmax.f32 %v643, 0.0
        %v645 = vperm.slane %v639, 0
        %v646 = vsub.f32 %v594, %v645
        %v647 = vsub.f32 %v596, %v645
        %v648 = vsub.f32 %v599, %v645
        %v649 = vsub.f32 %v601, %v645
        %v650 = vadd.f32 %v644, 1e-05
        %v651 = vrsqrt.pop %v650
        %v652 = vmul.f32 %v651, %v650
        %v653 = vmul.f32 %v652, %v651
        %v654 = vmul.f32 0.5, %v653
        %v655 = vsub.f32 1.5, %v654
        %v656 = vmul.f32 %v651, %v655
        %vm657 = vweird.f32 %v650
        %vm658 = vweird.f32 %v651
        %vm659 = vmor %vm657, %vm658
        %v660 = vsel %vm659, %v651, %v656
        %v661 = vperm.slane %v660, 0
        %v662 = vmul.f32 %v646, %v661
        %v663 = vmul.f32 %v647, %v661
        %v664 = vmul.f32 %v648, %v661
        %v665 = vmul.f32 %v649, %v661
        %v666 = vld [vmem:[%s2] sm:$0x1]
        %v668 = vperm.slane %v666, 0
        %v670 = vmul.f32 %v662, %v668
        %v671 = vmul.f32 %v663, %v668
        %v672 = vmul.f32 %v664, %v668
        %v673 = vmul.f32 %v665, %v668
        %v674 = vld [vmem:[%s3] sm:$0x1]
        %v676 = vperm.slane %v674, 0
        %v678 = vadd.f32 %v670, %v676
        %v679 = vadd.f32 %v671, %v676
        %v680 = vadd.f32 %v672, %v676
        %v681 = vadd.f32 %v673, %v676
        %vm682 = vcmp.ge.f32.partialorder %v678, 0.0
        %vm683 = vcmp.ge.f32.partialorder %v679, 0.0
        %vm684 = vcmp.ge.f32.partialorder %v680, 0.0
        %vm685 = vcmp.ge.f32.partialorder %v681, 0.0
        %v686 = vmul.f32 %v678, 0.2
        %v687 = vmul.f32 %v679, 0.2
        %v688 = vmul.f32 %v680, 0.2
        %v689 = vmul.f32 %v681, 0.2
        %v690 = vsel %vm682, %v678, %v686
        %v691 = vsel %vm683, %v679, %v687
        %v692 = vsel %vm684, %v680, %v688
        %v693 = vsel %vm685, %v681, %v689
        %694 = vst [vmem:[%s214] sm:$0xff] %v690
        %695 = vst [vmem:[%s214 + $0x8] sm:$0xff] %v691
        %696 = vst [vmem:[%s214 + $0x10] sm:$0xff] %v692
        %697 = vst [vmem:[%s214 + $0x18] sm:$0xff] %v693
      $region48: #{discriminator_forward.8} parent=35 // pred_fallthru
        _
      %s698 = smul.u32 4, %s20
      %p699 = scmp.lt.s32.totalorder %s698, 3
      %s700 = scalar_select %p699, %s698, 3
      %s701 = smul.addr %s700, 8
      %s702 = scalar_lea.vmem %s4, %s701
      // Predicated region
      $region49: #{discriminator_forward.8} parent=35 // pred_check
        %p703 = pneg %p134
      $region50: #{discriminator_forward.8} parent=35 // pred_check_branch
        %705 = sbr.rel (%p703) target = $region52
      $region51: #{discriminator_forward.8} parent=35 // pred_region
        %s706 = smul.u32 4, %s20
      $region52: #{discriminator_forward.8} parent=35 // pred_fallthru
        _
      // Predicated region
      $region53: #{discriminator_forward.8} parent=35 // pred_check
        %p707 = pneg %p134
      $region54: #{discriminator_forward.8} parent=35 // pred_check_branch
        %709 = sbr.rel (%p707) target = $region56
      $region55: #{discriminator_forward.8} parent=35 // pred_region
        %s710 = smul.u32 4, %s20
        %p711 = scmp.lt.s32.totalorder %s710, 3
        %s712 = scalar_select %p711, %s710, 3
        %s713 = smul.addr %s712, 8
        %s714 = scalar_lea.vmem %s4, %s713
      $region56: #{discriminator_forward.8} parent=35 // pred_fallthru
        _
    $region36: #{discriminator_forward.8} parent=5 // pred_fallthru
      _
    %p715 = scmp.le.s32.totalorder 2, %s10
    // Predicated region
    $region57: #{discriminator_forward.8} parent=5 // pred_check
      %p716 = pneg %p715
    $region58: #{discriminator_forward.8} parent=5 // pred_check_branch
      %718 = sbr.rel (%p716) target = $region60
    $region59: #{discriminator_forward.8} parent=5 // pred_region
      %s719 = ssub.s32 %s10, 2
    $region60: #{discriminator_forward.8} parent=5 // pred_fallthru
      _
  $region6: #{discriminator_forward.8} parent=0 // loop_footer
    %s14 = sadd.s32 1, %s10
  $region7: #{discriminator_forward.8} parent=0 // loop_footer_branch
    %9 = sbr.rel target = $region3
  $region8: #{discriminator_forward.8} parent=0 // loop_exit
    _

// kernel: discriminator_forward.9
$region0: #{discriminator_forward.9}
  #allocation0 [shape = 'u32[]', space=smem, size = 0x4, offset = 0x4, fixed_abs, tag = 'smem constant byte address 0x4 - core index']
  #allocation1 [shape = 'u32[72,128]{1,0:T(1,128)}', space=vmem, size = 0x9000, scoped, tag = 'internal scratch']
  %s0 = inlined_call_operand.vmem [shape: bf16[8,1024], index: 0, kind: input, shape index: {}]
  %s1 = inlined_call_operand.vmem [shape: bf16[1024,128], index: 1, kind: input, shape index: {}]
  %s2 = inlined_call_operand.vmem [shape: f32[1,128], index: 2, kind: input, shape index: {}]
  %s3 = inlined_call_operand.vmem [shape: f32[8,128], index: 3, kind: output, shape index: {}]
  %s4 = sld [smem:[#allocation0]]
  $region22: #{discriminator_forward.9} parent=0
    _
  %s6 = ssub.s32 1, %s4
  %s7 = scalar_select 0, %s6, %s4
  // Predicated region
  $region2: #{discriminator_forward.9} parent=0 // pred_check
    _
  $region3: #{discriminator_forward.9} parent=0 // pred_check_branch
    %9 = sbr.rel (0) target = $region5
  $region4: #{discriminator_forward.9} parent=0 // pred_region
    _
  $region5: #{discriminator_forward.9} parent=0 // pred_fallthru
    _
  // Predicated region
  $region6: #{discriminator_forward.9} parent=0 // pred_check
    _
  $region7: #{discriminator_forward.9} parent=0 // pred_check_branch
    %11 = sbr.rel (0) target = $region9
  $region8: #{discriminator_forward.9} parent=0 // pred_region
    _
  $region9: #{discriminator_forward.9} parent=0 // pred_fallthru
    _
  // Predicated region
  $region10: #{discriminator_forward.9} parent=0 // pred_check
    _
  $region11: #{discriminator_forward.9} parent=0 // pred_check_branch
    %13 = sbr.rel (0) target = $region13
  $region12: #{discriminator_forward.9} parent=0 // pred_region
    _
  $region13: #{discriminator_forward.9} parent=0 // pred_fallthru
    _
  %v14 = vld [vmem:[%s0] sm:$0xff]
  %v15 = vld [vmem:[%s0 + $0x8] sm:$0xff]
  %v16 = vld [vmem:[%s0 + $0x10] sm:$0xff]
  %v17 = vld [vmem:[%s0 + $0x18] sm:$0xff]
  %v18 = vld [vmem:[%s1] sm:$0xf]
  %v19 = vld [vmem:[%s1 + $0x4] sm:$0xf]
  %v20 = vld [vmem:[%s1 + $0x8] sm:$0xf]
  %v21 = vld [vmem:[%s1 + $0xc] sm:$0xf]
  %v22 = vld [vmem:[%s1 + $0x10] sm:$0xf]
  %v23 = vld [vmem:[%s1 + $0x14] sm:$0xf]
  %v24 = vld [vmem:[%s1 + $0x18] sm:$0xf]
  %v25 = vld [vmem:[%s1 + $0x1c] sm:$0xf]
  %v26 = vld [vmem:[%s1 + $0x20] sm:$0xf]
  %v27 = vld [vmem:[%s1 + $0x24] sm:$0xf]
  %v28 = vld [vmem:[%s1 + $0x28] sm:$0xf]
  %v29 = vld [vmem:[%s1 + $0x2c] sm:$0xf]
  %v30 = vld [vmem:[%s1 + $0x30] sm:$0xf]
  %v31 = vld [vmem:[%s1 + $0x34] sm:$0xf]
  %v32 = vld [vmem:[%s1 + $0x38] sm:$0xf]
  %v33 = vld [vmem:[%s1 + $0x3c] sm:$0xf]
  %v34 = vld [vmem:[%s1 + $0x40] sm:$0xf]
  %v35 = vld [vmem:[%s1 + $0x44] sm:$0xf]
  %v36 = vld [vmem:[%s1 + $0x48] sm:$0xf]
  %v37 = vld [vmem:[%s1 + $0x4c] sm:$0xf]
  %v38 = vld [vmem:[%s1 + $0x50] sm:$0xf]
  %v39 = vld [vmem:[%s1 + $0x54] sm:$0xf]
  %v40 = vld [vmem:[%s1 + $0x58] sm:$0xf]
  %v41 = vld [vmem:[%s1 + $0x5c] sm:$0xf]
  %v42 = vld [vmem:[%s1 + $0x60] sm:$0xf]
  %v43 = vld [vmem:[%s1 + $0x64] sm:$0xf]
  %v44 = vld [vmem:[%s1 + $0x68] sm:$0xf]
  %v45 = vld [vmem:[%s1 + $0x6c] sm:$0xf]
  %v46 = vld [vmem:[%s1 + $0x70] sm:$0xf]
  %v47 = vld [vmem:[%s1 + $0x74] sm:$0xf]
  %v48 = vld [vmem:[%s1 + $0x78] sm:$0xf]
  %v49 = vld [vmem:[%s1 + $0x7c] sm:$0xf]
  %v50 = vld [vmem:[%s1 + $0x80] sm:$0xf]
  %v51 = vld [vmem:[%s1 + $0x84] sm:$0xf]
  %v52 = vld [vmem:[%s1 + $0x88] sm:$0xf]
  %v53 = vld [vmem:[%s1 + $0x8c] sm:$0xf]
  %v54 = vld [vmem:[%s1 + $0x90] sm:$0xf]
  %v55 = vld [vmem:[%s1 + $0x94] sm:$0xf]
  %v56 = vld [vmem:[%s1 + $0x98] sm:$0xf]
  %v57 = vld [vmem:[%s1 + $0x9c] sm:$0xf]
  %v58 = vld [vmem:[%s1 + $0xa0] sm:$0xf]
  %v59 = vld [vmem:[%s1 + $0xa4] sm:$0xf]
  %v60 = vld [vmem:[%s1 + $0xa8] sm:$0xf]
  %v61 = vld [vmem:[%s1 + $0xac] sm:$0xf]
  %v62 = vld [vmem:[%s1 + $0xb0] sm:$0xf]
  %v63 = vld [vmem:[%s1 + $0xb4] sm:$0xf]
  %v64 = vld [vmem:[%s1 + $0xb8] sm:$0xf]
  %v65 = vld [vmem:[%s1 + $0xbc] sm:$0xf]
  %v66 = vld [vmem:[%s1 + $0xc0] sm:$0xf]
  %v67 = vld [vmem:[%s1 + $0xc4] sm:$0xf]
  %v68 = vld [vmem:[%s1 + $0xc8] sm:$0xf]
  %v69 = vld [vmem:[%s1 + $0xcc] sm:$0xf]
  %v70 = vld [vmem:[%s1 + $0xd0] sm:$0xf]
  %v71 = vld [vmem:[%s1 + $0xd4] sm:$0xf]
  %v72 = vld [vmem:[%s1 + $0xd8] sm:$0xf]
  %v73 = vld [vmem:[%s1 + $0xdc] sm:$0xf]
  %v74 = vld [vmem:[%s1 + $0xe0] sm:$0xf]
  %v75 = vld [vmem:[%s1 + $0xe4] sm:$0xf]
  %v76 = vld [vmem:[%s1 + $0xe8] sm:$0xf]
  %v77 = vld [vmem:[%s1 + $0xec] sm:$0xf]
  %v78 = vld [vmem:[%s1 + $0xf0] sm:$0xf]
  %v79 = vld [vmem:[%s1 + $0xf4] sm:$0xf]
  %v80 = vld [vmem:[%s1 + $0xf8] sm:$0xf]
  %v81 = vld [vmem:[%s1 + $0xfc] sm:$0xf]
  %v82 = vld [vmem:[%s1 + $0x100] sm:$0xf]
  %v83 = vld [vmem:[%s1 + $0x104] sm:$0xf]
  %v84 = vld [vmem:[%s1 + $0x108] sm:$0xf]
  %v85 = vld [vmem:[%s1 + $0x10c] sm:$0xf]
  %v86 = vld [vmem:[%s1 + $0x110] sm:$0xf]
  %v87 = vld [vmem:[%s1 + $0x114] sm:$0xf]
  %v88 = vld [vmem:[%s1 + $0x118] sm:$0xf]
  %v89 = vld [vmem:[%s1 + $0x11c] sm:$0xf]
  %v90 = vld [vmem:[%s1 + $0x120] sm:$0xf]
  %v91 = vld [vmem:[%s1 + $0x124] sm:$0xf]
  %v92 = vld [vmem:[%s1 + $0x128] sm:$0xf]
  %v93 = vld [vmem:[%s1 + $0x12c] sm:$0xf]
  %v94 = vld [vmem:[%s1 + $0x130] sm:$0xf]
  %v95 = vld [vmem:[%s1 + $0x134] sm:$0xf]
  %v96 = vld [vmem:[%s1 + $0x138] sm:$0xf]
  %v97 = vld [vmem:[%s1 + $0x13c] sm:$0xf]
  %v98 = vld [vmem:[%s1 + $0x140] sm:$0xf]
  %v99 = vld [vmem:[%s1 + $0x144] sm:$0xf]
  %v100 = vld [vmem:[%s1 + $0x148] sm:$0xf]
  %v101 = vld [vmem:[%s1 + $0x14c] sm:$0xf]
  %v102 = vld [vmem:[%s1 + $0x150] sm:$0xf]
  %v103 = vld [vmem:[%s1 + $0x154] sm:$0xf]
  %v104 = vld [vmem:[%s1 + $0x158] sm:$0xf]
  %v105 = vld [vmem:[%s1 + $0x15c] sm:$0xf]
  %v106 = vld [vmem:[%s1 + $0x160] sm:$0xf]
  %v107 = vld [vmem:[%s1 + $0x164] sm:$0xf]
  %v108 = vld [vmem:[%s1 + $0x168] sm:$0xf]
  %v109 = vld [vmem:[%s1 + $0x16c] sm:$0xf]
  %v110 = vld [vmem:[%s1 + $0x170] sm:$0xf]
  %v111 = vld [vmem:[%s1 + $0x174] sm:$0xf]
  %v112 = vld [vmem:[%s1 + $0x178] sm:$0xf]
  %v113 = vld [vmem:[%s1 + $0x17c] sm:$0xf]
  %v114 = vld [vmem:[%s1 + $0x180] sm:$0xf]
  %v115 = vld [vmem:[%s1 + $0x184] sm:$0xf]
  %v116 = vld [vmem:[%s1 + $0x188] sm:$0xf]
  %v117 = vld [vmem:[%s1 + $0x18c] sm:$0xf]
  %v118 = vld [vmem:[%s1 + $0x190] sm:$0xf]
  %v119 = vld [vmem:[%s1 + $0x194] sm:$0xf]
  %v120 = vld [vmem:[%s1 + $0x198] sm:$0xf]
  %v121 = vld [vmem:[%s1 + $0x19c] sm:$0xf]
  %v122 = vld [vmem:[%s1 + $0x1a0] sm:$0xf]
  %v123 = vld [vmem:[%s1 + $0x1a4] sm:$0xf]
  %v124 = vld [vmem:[%s1 + $0x1a8] sm:$0xf]
  %v125 = vld [vmem:[%s1 + $0x1ac] sm:$0xf]
  %v126 = vld [vmem:[%s1 + $0x1b0] sm:$0xf]
  %v127 = vld [vmem:[%s1 + $0x1b4] sm:$0xf]
  %v128 = vld [vmem:[%s1 + $0x1b8] sm:$0xf]
  %v129 = vld [vmem:[%s1 + $0x1bc] sm:$0xf]
  %v130 = vld [vmem:[%s1 + $0x1c0] sm:$0xf]
  %v131 = vld [vmem:[%s1 + $0x1c4] sm:$0xf]
  %v132 = vld [vmem:[%s1 + $0x1c8] sm:$0xf]
  %v133 = vld [vmem:[%s1 + $0x1cc] sm:$0xf]
  %v134 = vld [vmem:[%s1 + $0x1d0] sm:$0xf]
  %v135 = vld [vmem:[%s1 + $0x1d4] sm:$0xf]
  %v136 = vld [vmem:[%s1 + $0x1d8] sm:$0xf]
  %v137 = vld [vmem:[%s1 + $0x1dc] sm:$0xf]
  %v138 = vld [vmem:[%s1 + $0x1e0] sm:$0xf]
  %v139 = vld [vmem:[%s1 + $0x1e4] sm:$0xf]
  %v140 = vld [vmem:[%s1 + $0x1e8] sm:$0xf]
  %v141 = vld [vmem:[%s1 + $0x1ec] sm:$0xf]
  %v142 = vld [vmem:[%s1 + $0x1f0] sm:$0xf]
  %v143 = vld [vmem:[%s1 + $0x1f4] sm:$0xf]
  %v144 = vld [vmem:[%s1 + $0x1f8] sm:$0xf]
  %v145 = vld [vmem:[%s1 + $0x1fc] sm:$0xf]
  %v146 = vld [vmem:[%s2] sm:$0x1]
  %v148 = vperm.slane %v146, 0
  %v154 = vunpack.c.l.b16 %v14
  %v155 = vunpack.c.h.b16 %v14
  %v156 = vunpack.c.l.b16 %v15
  %v157 = vunpack.c.h.b16 %v15
  %v158 = vunpack.c.l.b16 %v16
  %v159 = vunpack.c.h.b16 %v16
  %v160 = vunpack.c.l.b16 %v17
  %v161 = vunpack.c.h.b16 %v17
  %v162 = vpack.c.b16 %v154, %v154
  %v163 = vpack.c.b16 %v155, %v155
  %v164 = vpack.c.b16 %v156, %v156
  %v165 = vpack.c.b16 %v157, %v157
  %v166 = vpack.c.b16 %v158, %v158
  %v167 = vpack.c.b16 %v159, %v159
  %v168 = vpack.c.b16 %v160, %v160
  %v169 = vpack.c.b16 %v161, %v161
  %v306 = vunpack.c.l.b16 %v18
  %v307 = vunpack.c.l.b16 %v19
  %v308 = vunpack.c.l.b16 %v20
  %v309 = vunpack.c.l.b16 %v21
  %v310 = vunpack.c.l.b16 %v22
  %v311 = vunpack.c.l.b16 %v23
  %v312 = vunpack.c.l.b16 %v24
  %v313 = vunpack.c.l.b16 %v25
  %v314 = vunpack.c.l.b16 %v26
  %v315 = vunpack.c.l.b16 %v27
  %v316 = vunpack.c.l.b16 %v28
  %v317 = vunpack.c.l.b16 %v29
  %v318 = vunpack.c.l.b16 %v30
  %v319 = vunpack.c.l.b16 %v31
  %v320 = vunpack.c.l.b16 %v32
  %v321 = vunpack.c.l.b16 %v33
  %v322 = vunpack.c.l.b16 %v34
  %v323 = vunpack.c.l.b16 %v35
  %v324 = vunpack.c.l.b16 %v36
  %v325 = vunpack.c.l.b16 %v37
  %v326 = vunpack.c.l.b16 %v38
  %v327 = vunpack.c.l.b16 %v39
  %v328 = vunpack.c.l.b16 %v40
  %v329 = vunpack.c.l.b16 %v41
  %v330 = vunpack.c.l.b16 %v42
  %v331 = vunpack.c.l.b16 %v43
  %v332 = vunpack.c.l.b16 %v44
  %v333 = vunpack.c.l.b16 %v45
  %v334 = vunpack.c.l.b16 %v46
  %v335 = vunpack.c.l.b16 %v47
  %v336 = vunpack.c.l.b16 %v48
  %v337 = vunpack.c.l.b16 %v49
  %v338 = vunpack.c.l.b16 %v50
  %v339 = vunpack.c.l.b16 %v51
  %v340 = vunpack.c.l.b16 %v52
  %v341 = vunpack.c.l.b16 %v53
  %v342 = vunpack.c.l.b16 %v54
  %v343 = vunpack.c.l.b16 %v55
  %v344 = vunpack.c.l.b16 %v56
  %v345 = vunpack.c.l.b16 %v57
  %v346 = vunpack.c.l.b16 %v58
  %v347 = vunpack.c.l.b16 %v59
  %v348 = vunpack.c.l.b16 %v60
  %v349 = vunpack.c.l.b16 %v61
  %v350 = vunpack.c.l.b16 %v62
  %v351 = vunpack.c.l.b16 %v63
  %v352 = vunpack.c.l.b16 %v64
  %v353 = vunpack.c.l.b16 %v65
  %v354 = vunpack.c.l.b16 %v66
  %v355 = vunpack.c.l.b16 %v67
  %v356 = vunpack.c.l.b16 %v68
  %v357 = vunpack.c.l.b16 %v69
  %v358 = vunpack.c.l.b16 %v70
  %v359 = vunpack.c.l.b16 %v71
  %v360 = vunpack.c.l.b16 %v72
  %v361 = vunpack.c.l.b16 %v73
  %v362 = vunpack.c.l.b16 %v74
  %v363 = vunpack.c.l.b16 %v75
  %v364 = vunpack.c.l.b16 %v76
  %v365 = vunpack.c.l.b16 %v77
  %v366 = vunpack.c.l.b16 %v78
  %v367 = vunpack.c.l.b16 %v79
  %v368 = vunpack.c.l.b16 %v80
  %v369 = vunpack.c.l.b16 %v81
  %v370 = vunpack.c.l.b16 %v82
  %v371 = vunpack.c.l.b16 %v83
  %v372 = vunpack.c.l.b16 %v84
  %v373 = vunpack.c.l.b16 %v85
  %v374 = vunpack.c.l.b16 %v86
  %v375 = vunpack.c.l.b16 %v87
  %v376 = vunpack.c.l.b16 %v88
  %v377 = vunpack.c.l.b16 %v89
  %v378 = vunpack.c.l.b16 %v90
  %v379 = vunpack.c.l.b16 %v91
  %v380 = vunpack.c.l.b16 %v92
  %v381 = vunpack.c.l.b16 %v93
  %v382 = vunpack.c.l.b16 %v94
  %v383 = vunpack.c.l.b16 %v95
  %v384 = vunpack.c.l.b16 %v96
  %v385 = vunpack.c.l.b16 %v97
  %v386 = vunpack.c.l.b16 %v98
  %v387 = vunpack.c.l.b16 %v99
  %v388 = vunpack.c.l.b16 %v100
  %v389 = vunpack.c.l.b16 %v101
  %v390 = vunpack.c.l.b16 %v102
  %v391 = vunpack.c.l.b16 %v103
  %v392 = vunpack.c.l.b16 %v104
  %v393 = vunpack.c.l.b16 %v105
  %v394 = vunpack.c.l.b16 %v106
  %v395 = vunpack.c.l.b16 %v107
  %v396 = vunpack.c.l.b16 %v108
  %v397 = vunpack.c.l.b16 %v109
  %v398 = vunpack.c.l.b16 %v110
  %v399 = vunpack.c.l.b16 %v111
  %v400 = vunpack.c.l.b16 %v112
  %v401 = vunpack.c.l.b16 %v113
  %v402 = vunpack.c.l.b16 %v114
  %v403 = vunpack.c.l.b16 %v115
  %v404 = vunpack.c.l.b16 %v116
  %v405 = vunpack.c.l.b16 %v117
  %v406 = vunpack.c.l.b16 %v118
  %v407 = vunpack.c.l.b16 %v119
  %v408 = vunpack.c.l.b16 %v120
  %v409 = vunpack.c.l.b16 %v121
  %v410 = vunpack.c.l.b16 %v122
  %v411 = vunpack.c.l.b16 %v123
  %v412 = vunpack.c.l.b16 %v124
  %v413 = vunpack.c.l.b16 %v125
  %v414 = vunpack.c.l.b16 %v126
  %v415 = vunpack.c.l.b16 %v127
  %v416 = vunpack.c.l.b16 %v128
  %v417 = vunpack.c.l.b16 %v129
  %v418 = vunpack.c.l.b16 %v130
  %v419 = vunpack.c.l.b16 %v131
  %v420 = vunpack.c.l.b16 %v132
  %v421 = vunpack.c.l.b16 %v133
  %v422 = vunpack.c.l.b16 %v134
  %v423 = vunpack.c.l.b16 %v135
  %v424 = vunpack.c.l.b16 %v136
  %v425 = vunpack.c.l.b16 %v137
  %v426 = vunpack.c.l.b16 %v138
  %v427 = vunpack.c.l.b16 %v139
  %v428 = vunpack.c.l.b16 %v140
  %v429 = vunpack.c.l.b16 %v141
  %v430 = vunpack.c.l.b16 %v142
  %v431 = vunpack.c.l.b16 %v143
  %v432 = vunpack.c.l.b16 %v144
  %v433 = vunpack.c.l.b16 %v145
  %v434 = vpack.c.b16 %v307, %v306
  %v435 = vpack.c.b16 %v309, %v308
  %v436 = vpack.c.b16 %v311, %v310
  %v437 = vpack.c.b16 %v313, %v312
  %v438 = vpack.c.b16 %v315, %v314
  %v439 = vpack.c.b16 %v317, %v316
  %v440 = vpack.c.b16 %v319, %v318
  %v441 = vpack.c.b16 %v321, %v320
  %v442 = vpack.c.b16 %v323, %v322
  %v443 = vpack.c.b16 %v325, %v324
  %v444 = vpack.c.b16 %v327, %v326
  %v445 = vpack.c.b16 %v329, %v328
  %v446 = vpack.c.b16 %v331, %v330
  %v447 = vpack.c.b16 %v333, %v332
  %v448 = vpack.c.b16 %v335, %v334
  %v449 = vpack.c.b16 %v337, %v336
  %v450 = vpack.c.b16 %v339, %v338
  %v451 = vpack.c.b16 %v341, %v340
  %v452 = vpack.c.b16 %v343, %v342
  %v453 = vpack.c.b16 %v345, %v344
  %v454 = vpack.c.b16 %v347, %v346
  %v455 = vpack.c.b16 %v349, %v348
  %v456 = vpack.c.b16 %v351, %v350
  %v457 = vpack.c.b16 %v353, %v352
  %v458 = vpack.c.b16 %v355, %v354
  %v459 = vpack.c.b16 %v357, %v356
  %v460 = vpack.c.b16 %v359, %v358
  %v461 = vpack.c.b16 %v361, %v360
  %v462 = vpack.c.b16 %v363, %v362
  %v463 = vpack.c.b16 %v365, %v364
  %v464 = vpack.c.b16 %v367, %v366
  %v465 = vpack.c.b16 %v369, %v368
  %v466 = vpack.c.b16 %v371, %v370
  %v467 = vpack.c.b16 %v373, %v372
  %v468 = vpack.c.b16 %v375, %v374
  %v469 = vpack.c.b16 %v377, %v376
  %v470 = vpack.c.b16 %v379, %v378
  %v471 = vpack.c.b16 %v381, %v380
  %v472 = vpack.c.b16 %v383, %v382
  %v473 = vpack.c.b16 %v385, %v384
  %v474 = vpack.c.b16 %v387, %v386
  %v475 = vpack.c.b16 %v389, %v388
  %v476 = vpack.c.b16 %v391, %v390
  %v477 = vpack.c.b16 %v393, %v392
  %v478 = vpack.c.b16 %v395, %v394
  %v479 = vpack.c.b16 %v397, %v396
  %v480 = vpack.c.b16 %v399, %v398
  %v481 = vpack.c.b16 %v401, %v400
  %v482 = vpack.c.b16 %v403, %v402
  %v483 = vpack.c.b16 %v405, %v404
  %v484 = vpack.c.b16 %v407, %v406
  %v485 = vpack.c.b16 %v409, %v408
  %v486 = vpack.c.b16 %v411, %v410
  %v487 = vpack.c.b16 %v413, %v412
  %v488 = vpack.c.b16 %v415, %v414
  %v489 = vpack.c.b16 %v417, %v416
  %v490 = vpack.c.b16 %v419, %v418
  %v491 = vpack.c.b16 %v421, %v420
  %v492 = vpack.c.b16 %v423, %v422
  %v493 = vpack.c.b16 %v425, %v424
  %v494 = vpack.c.b16 %v427, %v426
  %v495 = vpack.c.b16 %v429, %v428
  %v496 = vpack.c.b16 %v431, %v430
  %v497 = vpack.c.b16 %v433, %v432
  %562 = vmatpush.bf16.msra.mxu0 %v441
  %563 = vmatpush.bf16.msra.mxu0 %v440
  %564 = vmatpush.bf16.msra.mxu0 %v439
  %565 = vmatpush.bf16.msra.mxu0 %v438
  %566 = vmatpush.bf16.msra.mxu0 %v437
  %567 = vmatpush.bf16.msra.mxu0 %v436
  %568 = vmatpush.bf16.msra.mxu0 %v435
  %569 = vmatpush.bf16.msra.mxu0 %v434
  %570 = vmatmul.bf16.gmra.mxu0 %v162
  %v571 = vpop.f32.mrf.mxu0
  %v572 = vadd.f32 %v148, %v571
  %v573 = vpop.f32.mrf.mxu0
  %574 = vdwg.mxu0
  %575 = vmatpush.bf16.msra.mxu0 %v449
  %576 = vmatpush.bf16.msra.mxu0 %v448
  %577 = vmatpush.bf16.msra.mxu0 %v447
  %578 = vmatpush.bf16.msra.mxu0 %v446
  %579 = vmatpush.bf16.msra.mxu0 %v445
  %580 = vmatpush.bf16.msra.mxu0 %v444
  %581 = vmatpush.bf16.msra.mxu0 %v443
  %582 = vmatpush.bf16.msra.mxu0 %v442
  %583 = vmatmul.bf16.gmra.mxu0 %v163
  %v584 = vpop.f32.mrf.mxu0
  %v585 = vadd.f32 %v572, %v584
  %v586 = vpop.f32.mrf.mxu0
  %587 = vdwg.mxu0
  %588 = vmatpush.bf16.msra.mxu0 %v457
  %589 = vmatpush.bf16.msra.mxu0 %v456
  %590 = vmatpush.bf16.msra.mxu0 %v455
  %591 = vmatpush.bf16.msra.mxu0 %v454
  %592 = vmatpush.bf16.msra.mxu0 %v453
  %593 = vmatpush.bf16.msra.mxu0 %v452
  %594 = vmatpush.bf16.msra.mxu0 %v451
  %595 = vmatpush.bf16.msra.mxu0 %v450
  %596 = vmatmul.bf16.gmra.mxu0 %v164
  %v597 = vpop.f32.mrf.mxu0
  %v598 = vadd.f32 %v585, %v597
  %v599 = vpop.f32.mrf.mxu0
  %600 = vdwg.mxu0
  %601 = vmatpush.bf16.msra.mxu0 %v465
  %602 = vmatpush.bf16.msra.mxu0 %v464
  %603 = vmatpush.bf16.msra.mxu0 %v463
  %604 = vmatpush.bf16.msra.mxu0 %v462
  %605 = vmatpush.bf16.msra.mxu0 %v461
  %606 = vmatpush.bf16.msra.mxu0 %v460
  %607 = vmatpush.bf16.msra.mxu0 %v459
  %608 = vmatpush.bf16.msra.mxu0 %v458
  %609 = vmatmul.bf16.gmra.mxu0 %v165
  %v610 = vpop.f32.mrf.mxu0
  %v611 = vadd.f32 %v598, %v610
  %v612 = vpop.f32.mrf.mxu0
  %613 = vdwg.mxu0
  %614 = vmatpush.bf16.msra.mxu0 %v473
  %615 = vmatpush.bf16.msra.mxu0 %v472
  %616 = vmatpush.bf16.msra.mxu0 %v471
  %617 = vmatpush.bf16.msra.mxu0 %v470
  %618 = vmatpush.bf16.msra.mxu0 %v469
  %619 = vmatpush.bf16.msra.mxu0 %v468
  %620 = vmatpush.bf16.msra.mxu0 %v467
  %621 = vmatpush.bf16.msra.mxu0 %v466
  %622 = vmatmul.bf16.gmra.mxu0 %v166
  %v623 = vpop.f32.mrf.mxu0
  %v624 = vadd.f32 %v611, %v623
  %v625 = vpop.f32.mrf.mxu0
  %626 = vdwg.mxu0
  %627 = vmatpush.bf16.msra.mxu0 %v481
  %628 = vmatpush.bf16.msra.mxu0 %v480
  %629 = vmatpush.bf16.msra.mxu0 %v479
  %630 = vmatpush.bf16.msra.mxu0 %v478
  %631 = vmatpush.bf16.msra.mxu0 %v477
  %632 = vmatpush.bf16.msra.mxu0 %v476
  %633 = vmatpush.bf16.msra.mxu0 %v475
  %634 = vmatpush.bf16.msra.mxu0 %v474
  %635 = vmatmul.bf16.gmra.mxu0 %v167
  %v636 = vpop.f32.mrf.mxu0
  %v637 = vadd.f32 %v624, %v636
  %v638 = vpop.f32.mrf.mxu0
  %639 = vdwg.mxu0
  %640 = vmatpush.bf16.msra.mxu0 %v489
  %641 = vmatpush.bf16.msra.mxu0 %v488
  %642 = vmatpush.bf16.msra.mxu0 %v487
  %643 = vmatpush.bf16.msra.mxu0 %v486
  %644 = vmatpush.bf16.msra.mxu0 %v485
  %645 = vmatpush.bf16.msra.mxu0 %v484
  %646 = vmatpush.bf16.msra.mxu0 %v483
  %647 = vmatpush.bf16.msra.mxu0 %v482
  %648 = vmatmul.bf16.gmra.mxu0 %v168
  %v649 = vpop.f32.mrf.mxu0
  %v650 = vadd.f32 %v637, %v649
  %v651 = vpop.f32.mrf.mxu0
  %652 = vdwg.mxu0
  %653 = vmatpush.bf16.msra.mxu0 %v497
  %654 = vmatpush.bf16.msra.mxu0 %v496
  %655 = vmatpush.bf16.msra.mxu0 %v495
  %656 = vmatpush.bf16.msra.mxu0 %v494
  %657 = vmatpush.bf16.msra.mxu0 %v493
  %658 = vmatpush.bf16.msra.mxu0 %v492
  %659 = vmatpush.bf16.msra.mxu0 %v491
  %660 = vmatpush.bf16.msra.mxu0 %v490
  %661 = vmatmul.bf16.gmra.mxu0 %v169
  %v662 = vpop.f32.mrf.mxu0
  %v663 = vadd.f32 %v650, %v662
  %v664 = vpop.f32.mrf.mxu0
  %665 = vdwg.mxu0
  %v666 = vsub.f32 0.0, %v663
  %v667 = vmul.f32 %v666, 1.442695
  %v668 = vpow.pop %v667
  %v669 = vadd.f32 %v668, 1.0
  %v670 = vrcp.pop %v669
  %v671 = vmax.f32 %v670, 0.0
  %v672 = vmin.f32 %v671, 1.0
  %673 = vst [vmem:[%s3] sm:$0xff] %v672
  // Predicated region
  $region14: #{discriminator_forward.9} parent=0 // pred_check
    _
  $region15: #{discriminator_forward.9} parent=0 // pred_check_branch
    %675 = sbr.rel (0) target = $region17
  $region16: #{discriminator_forward.9} parent=0 // pred_region
    _
  $region17: #{discriminator_forward.9} parent=0 // pred_fallthru
    _
  // Predicated region
  $region18: #{discriminator_forward.9} parent=0 // pred_check
    _
  $region19: #{discriminator_forward.9} parent=0 // pred_check_branch
    %677 = sbr.rel (0) target = $region21
  $region20: #{discriminator_forward.9} parent=0 // pred_region
    _
  $region21: #{discriminator_forward.9} parent=0 // pred_fallthru
    _

</llo_original>
